<compile_context>
chip_gen: v6e
topology: v6e:2x2x1
jax: 0.10.0
libtpu: 0.0.40
codegen_flags: <defaults>
</compile_context>

<pallas_src>
import math
import numpy as np
import jax
import jax.numpy as jnp
from jax.experimental import pallas as pl
from jax.experimental.pallas import tpu as pltpu

# -----------------------------------------------------------------------------
# db6 filter bank (pywt convention: dec_lo, dec_hi, rec_lo, rec_hi)
# -----------------------------------------------------------------------------
_DB6_DEC_LO = np.array([
    -0.00107730108499558, 0.004777257511010651, 0.0005538422009938016,
    -0.031582039318031156, 0.02752286553001629, 0.09750160558707936,
    -0.12976686756709563, -0.22626469396516913, 0.3152503517092432,
    0.7511339080215775, 0.4946238903983854, 0.11154074335008017,
], dtype=np.float64)


def _filter_bank():
    dec_lo = _DB6_DEC_LO
    rec_lo = dec_lo[::-1].copy()
    rec_hi = dec_lo * ((-1.0) ** np.arange(dec_lo.shape[0]))   # pywt qmf relation
    dec_hi = rec_hi[::-1].copy()
    return dec_lo, dec_hi, rec_lo, rec_hi


def _reflect_idx(x, minx, maxx):
    """pytorch_wavelets `reflect` (pywt 'symmetric' half-sample extension)."""
    rng = maxx - minx
    rng2 = 2.0 * rng
    mod = np.fmod(x - minx, rng2)
    mod = np.where(mod < 0, mod + rng2, mod)
    out = np.where(mod >= rng, rng2 - mod, mod) + minx
    return np.rint(out).astype(np.int64)


def _round_up(n, m):
    return ((n + m - 1) // m) * m


_MAX_ROW_TILE = 256   # rows per grid step (sublane dim); multiple of 8


# -----------------------------------------------------------------------------
# Constant band matrices (built once on the host, kept VMEM-resident)
# -----------------------------------------------------------------------------
def _folded_analysis_matrix(n, L, h0f, h1f):
    """(n, 2*outsize) matrix with symmetric extension + stride-2 decimation
    folded in:  [lo | hi] = x @ A   for a signal x of length n."""
    outsize = (n + L - 1) // 2                      # pywt.dwt_coeff_len (symmetric)
    p = 2 * (outsize - 1) - n + L
    pad_l, pad_r = p // 2, (p + 1) // 2
    idx = _reflect_idx(np.arange(-pad_l, n + pad_r, dtype=np.float64), -0.5, n - 0.5)
    A = np.zeros((n, 2 * outsize), dtype=np.float32)
    for m in range(outsize):
        for t in range(L):
            j = int(idx[2 * m + t])
            A[j, m] += h0f[t]
            A[j, outsize + m] += h1f[t]
    return A, outsize


def _synthesis_matrices(Nin, L, g0, g1):
    """Stride-2 transposed-conv + crop + interleave as two (Nin, Nout) matrices:
    y = lo @ S_lo + hi @ S_hi."""
    Nout = 2 * Nin - L + 2
    Slo = np.zeros((Nin, Nout), dtype=np.float32)
    Shi = np.zeros((Nin, Nout), dtype=np.float32)
    for k in range(Nin):
        for m in range(Nout):
            t = m + (L - 2) - 2 * k
            if 0 <= t < L:
                Slo[k, m] += g0[t]
                Shi[k, m] += g1[t]
    return Slo, Shi, Nout


# -----------------------------------------------------------------------------
# Fused Pallas kernel: DWT cascade -> channel mix -> IDWT cascade
# -----------------------------------------------------------------------------
def _make_fused_kernel(num_levels):
    J = num_levels

    def kernel(*refs):
        pos = 0
        x_ref = refs[pos]; pos += 1
        alo_refs = refs[pos:pos + J]; pos += J
        ahi_refs = refs[pos:pos + J]; pos += J
        bd1_ref = refs[pos]; pos += 1
        bd2_ref = refs[pos]; pos += 1
        slo_refs = refs[pos:pos + J]; pos += J
        shi_refs = refs[pos:pos + J]; pos += J
        out_ref = refs[pos]

        f32 = jnp.float32
        cur = x_ref[...]                                  # (row_tile, N)

        # ---- analysis cascade: one MXU band-matmul per level, all on-chip ----
        highs = []
        for l in range(J):
            highs.append(jnp.dot(cur, ahi_refs[l][...], preferred_element_type=f32))
            cur = jnp.dot(cur, alo_refs[l][...], preferred_element_type=f32)

        # ---- learned channel mixing  (einsum 'bix,iox->box') -----------------
        # cur / highs[-1] are (row_tile, modes1); rows come in groups of C
        # (channels of one batch sample).  Per mode m the mix is a block-diag
        # (row_tile x row_tile) matmul applied to column m only.
        rt, modes = cur.shape
        col = jax.lax.broadcasted_iota(jnp.int32, (rt, modes), 1)

        def mix(v, bd_ref):
            acc = None
            for m in range(modes):                        # static unroll (modes1 small)
                vm = jnp.where(col == m, v, 0.0)
                term = jnp.dot(bd_ref[m], vm, preferred_element_type=f32)
                acc = term if acc is None else acc + term
            return acc

        lo = mix(cur, bd1_ref)
        hi_last = mix(highs[J - 1], bd2_ref)

        # ---- synthesis cascade (crop + interleave folded into S matrices) ----
        for l in range(J - 1, -1, -1):
            hi = hi_last if l == J - 1 else highs[l]
            lo = (jnp.dot(lo, slo_refs[l][...], preferred_element_type=f32)
                  + jnp.dot(hi, shi_refs[l][...], preferred_element_type=f32))

        out_ref[...] = lo                                 # single lane-dense store

    return kernel


# -----------------------------------------------------------------------------
# Pure-JAX reference path (gather + band-matrix formulation) for validation
# -----------------------------------------------------------------------------
def _analysis_setup_ref(N, L, h0f, h1f):
    outsize = (N + L - 1) // 2
    p = 2 * (outsize - 1) - N + L
    pad_l, pad_r = p // 2, (p + 1) // 2
    idx = _reflect_idx(np.arange(-pad_l, N + pad_r, dtype=np.float64), -0.5, N - 0.5)
    npad = idx.shape[0]
    A = np.zeros((npad, 2 * outsize), dtype=np.float32)
    for n in range(outsize):
        for t in range(L):
            A[2 * n + t, n] += h0f[t]
            A[2 * n + t, outsize + n] += h1f[t]
    return idx.astype(np.int32), A, outsize


def _dwt1d_ref(x, J, filters, matmul_fn):
    dec_lo, dec_hi, _, _ = filters
    L = len(dec_lo)
    h0f, h1f = dec_lo[::-1], dec_hi[::-1]
    B, C, _ = x.shape
    lo, highs = x, []
    for _ in range(J):
        N = lo.shape[-1]
        idx, A, outsize = _analysis_setup_ref(N, L, h0f, h1f)
        xpad = lo[:, :, jnp.asarray(idx)]
        out = matmul_fn(xpad.reshape(B * C, -1), jnp.asarray(A))
        out = out.reshape(B, C, 2 * outsize)
        lo = out[:, :, :outsize]
        highs.append(out[:, :, outsize:])
    return lo, highs


def _synthesis_matrix_ref(Nin, L, g0, g1):
    Nout = 2 * Nin - L + 2
    S = np.zeros((2 * Nin, Nout), dtype=np.float32)
    for k in range(Nin):
        for m in range(Nout):
            t = m + (L - 2) - 2 * k
            if 0 <= t < L:
                S[k, m] += g0[t]
                S[Nin + k, m] += g1[t]
    return S, Nout


def _idwt1d_ref(lo, highs, filters, matmul_fn):
    _, _, rec_lo, rec_hi = filters
    L = len(rec_lo)
    B, C, _ = lo.shape
    for hi in highs[::-1]:
        Nh = hi.shape[-1]
        if lo.shape[-1] > Nh:
            lo = lo[:, :, :Nh]
        S, Nout = _synthesis_matrix_ref(Nh, L, rec_lo, rec_hi)
        combined = jnp.concatenate([lo, hi], axis=-1).reshape(B * C, 2 * Nh)
        lo = matmul_fn(combined, jnp.asarray(S)).reshape(B, C, Nout)
    return lo


# -----------------------------------------------------------------------------
# WaveConv1d
# -----------------------------------------------------------------------------
class WaveConv1dPallas:
    def __init__(self, in_channels, out_channels, level, dummy_len, key):
        # IDWT recombines mixed and un-mixed detail coefficients, so channel
        # counts must match (as in the WNO Burgers model).
        assert in_channels == out_channels
        self.in_channels = in_channels
        self.out_channels = out_channels
        self.level = level
        self.dummy_len = dummy_len

        self.filters = _filter_bank()
        dec_lo, dec_hi, rec_lo, rec_hi = self.filters
        L = len(dec_lo)
        assert L % 2 == 0
        self.L = L
        h0f, h1f = dec_lo[::-1], dec_hi[::-1]          # prep_filt_afb1d reverses

        # --- analysis band matrices (reflection + filter + decimation folded) -
        A_lo, A_hi, K_list = [], [], []
        n = dummy_len
        for _ in range(level):
            A, K = _folded_analysis_matrix(n, L, h0f, h1f)
            A_lo.append(jnp.asarray(A[:, :K]))
            A_hi.append(jnp.asarray(A[:, K:]))
            K_list.append(K)
            n = K
        self.modes1 = n                                # == DWT1D(dummy)[0].shape[-1]
        self.K_list = K_list
        self._A_lo = A_lo
        self._A_hi = A_hi

        # --- synthesis matrices (upsample + filter + crop + interleave folded)
        Slo_list = [None] * level
        Shi_list = [None] * level
        lo_len = self.modes1
        for l in range(level - 1, -1, -1):
            Kl = K_list[l]
            assert lo_len in (Kl, Kl + 1)
            Slo, Shi, Nout = _synthesis_matrices(Kl, L, rec_lo, rec_hi)
            if lo_len > Kl:                            # pytorch_wavelets drops 1 sample
                Slo = np.concatenate(
                    [Slo, np.zeros((lo_len - Kl, Slo.shape[1]), np.float32)], axis=0)
            Slo_list[l] = jnp.asarray(Slo)
            Shi_list[l] = jnp.asarray(Shi)
            lo_len = Nout
        self.out_len = lo_len
        self._Slo = Slo_list
        self._Shi = Shi_list

        scale = 1.0 / (in_channels * out_channels)
        k1, k2 = jax.random.split(key)
        self.weights1 = scale * jax.random.uniform(
            k1, (in_channels, out_channels, self.modes1), jnp.float32)
        self.weights2 = scale * jax.random.uniform(
            k2, (in_channels, out_channels, self.modes1), jnp.float32)

    # ------------------------------------------------------------------ pallas
    def _forward_pallas(self, x):
        B, C, N = x.shape
        assert C == self.in_channels and N == self.dummy_len
        rows = B * C

        # Row tile: multiple of lcm(C, 8) so channel groups never straddle a
        # tile and sublanes stay aligned; aim for >=2 grid steps (v7x megacore),
        # capped at 256 rows to bound VMEM.
        unit = math.lcm(C, 8)
        max_rt = max(unit, (_MAX_ROW_TILE // unit) * unit)
        rt = min(max_rt, _round_up((rows + 1) // 2, unit))
        rt = max(rt, unit)
        rp = _round_up(rows, rt)

        xr = x.astype(jnp.float32).reshape(rows, N)
        if rp != rows:
            # zero padding: garbage rows form whole channel groups of zeros and
            # stay isolated through the block-diagonal mix.
            xr = jnp.pad(xr, ((0, rp - rows), (0, 0)))

        # Block-diagonal per-mode mixing matrices: BD_m = kron(I_{rt//C}, W[:,:,m]^T)
        nb = rt // C
        eye = jnp.eye(nb, dtype=jnp.float32)
        modes = self.modes1

        def expand(w):                                 # (Ci, Co, modes) -> (modes, rt, rt)
            wt = jnp.transpose(w, (2, 1, 0))           # [m, o, i] = w[i, o, m]
            return jnp.einsum('gh,moi->mgohi', eye, wt).reshape(modes, rt, rt)

        bd1 = expand(self.weights1)
        bd2 = expand(self.weights2)

        J = self.level
        const_arrays = (list(self._A_lo) + list(self._A_hi) + [bd1, bd2]
                        + list(self._Slo) + list(self._Shi))

        in_specs = [pl.BlockSpec((rt, N), lambda r: (r, 0))]
        for a in const_arrays:
            if a.ndim == 2:
                in_specs.append(pl.BlockSpec(a.shape, lambda r: (0, 0)))
            else:
                in_specs.append(pl.BlockSpec(a.shape, lambda r: (0, 0, 0)))

        # Raise the scoped-VMEM limit only when the constants + tiles need it
        # (large N / level / row tiles); never triggers at demo sizes.
        cp_kwargs = {"dimension_semantics": ("parallel",)}
        const_bytes = sum(int(np.prod(a.shape)) * a.dtype.itemsize for a in const_arrays)
        tile_bytes = 4 * rt * (N + self.out_len)
        vmem_est = 2 * const_bytes + 2 * tile_bytes
        if vmem_est > 24 * 1024 * 1024:
            cp_kwargs["vmem_limit_bytes"] = int(min(vmem_est * 1.25, 120 * 1024 * 1024))

        out = pl.pallas_call(
            _make_fused_kernel(J),
            grid=(rp // rt,),
            in_specs=in_specs,
            out_specs=pl.BlockSpec((rt, self.out_len), lambda r: (r, 0)),
            out_shape=jax.ShapeDtypeStruct((rp, self.out_len), jnp.float32),
            compiler_params=pltpu.CompilerParams(**cp_kwargs),
        )(xr, *const_arrays)

        return out[:rows].reshape(B, self.out_channels, self.out_len)

    # --------------------------------------------------------------- reference
    def _forward_reference(self, x):
        mm = lambda a, b: jnp.dot(a, b, precision=jax.lax.Precision.HIGHEST)
        mul = lambda a, w: jnp.einsum('bix,iox->box', a, w,
                                      precision=jax.lax.Precision.HIGHEST)
        x_ft, x_coeff = _dwt1d_ref(x, self.level, self.filters, mm)
        out_ft = mul(x_ft, self.weights1)
        x_coeff = list(x_coeff)
        x_coeff[-1] = mul(x_coeff[-1], self.weights2)
        return _idwt1d_ref(out_ft, x_coeff, self.filters, mm)

    def __call__(self, x, use_pallas=True):
        if use_pallas:
            return self._forward_pallas(x)
        return self._forward_reference(x)


if __name__ == "__main__":
    # Original script uses level=8 on a 1024-point grid; at the small demo
    # length (64) we use level=3 so every wavelet scale remains valid.
    B, C, N, LEVEL = 2, 8, 64, 3
    key = jax.random.PRNGKey(0)
    kx, kw = jax.random.split(key)
    x = jax.random.normal(kx, (B, C, N), dtype=jnp.float32)

    layer = WaveConv1dPallas(in_channels=C, out_channels=C, level=LEVEL,
                             dummy_len=N, key=kw)

    fwd = jax.jit(lambda a: layer(a, use_pallas=True))
    y = jax.block_until_ready(fwd(x))
    y_ref = jax.block_until_ready(layer(x, use_pallas=False))

    assert y.shape == (B, C, N), y.shape
    np.testing.assert_allclose(np.asarray(y), np.asarray(y_ref),
                               rtol=5e-4, atol=5e-4)
    print("KERNEL_OK")
</pallas_src>

<mosaic_0001>
module attributes {stable_mosaic.version = 11 : i64} {
  func.func @kernel(%arg0: i32, %arg1: memref<8x64xf32, #tpu.memory_space<vmem>>, %arg2: memref<64x37xf32, #tpu.memory_space<vmem>>, %arg3: memref<37x24xf32, #tpu.memory_space<vmem>>, %arg4: memref<24x17xf32, #tpu.memory_space<vmem>>, %arg5: memref<64x37xf32, #tpu.memory_space<vmem>>, %arg6: memref<37x24xf32, #tpu.memory_space<vmem>>, %arg7: memref<24x17xf32, #tpu.memory_space<vmem>>, %arg8: memref<17x8x8xf32, #tpu.memory_space<vmem>>, %arg9: memref<17x8x8xf32, #tpu.memory_space<vmem>>, %arg10: memref<38x64xf32, #tpu.memory_space<vmem>>, %arg11: memref<24x38xf32, #tpu.memory_space<vmem>>, %arg12: memref<17x24xf32, #tpu.memory_space<vmem>>, %arg13: memref<37x64xf32, #tpu.memory_space<vmem>>, %arg14: memref<24x38xf32, #tpu.memory_space<vmem>>, %arg15: memref<17x24xf32, #tpu.memory_space<vmem>>, %arg16: memref<8x64xf32, #tpu.memory_space<vmem>>) attributes {dimension_semantics = [#tpu.dimension_semantics<parallel>], iteration_bounds = array<i64: 2>, scalar_prefetch = 0 : i64, scratch_operands = 0 : i64, tpu.core_type = #tpu.core_type<tc>, window_params = [{transform_indices = @transform_0, window_bounds = array<i64: 8, 64>}, {pipeline_mode = #tpu.pipeline_mode<synchronous>, transform_indices = @transform_1, window_bounds = array<i64: 64, 37>}, {pipeline_mode = #tpu.pipeline_mode<synchronous>, transform_indices = @transform_2, window_bounds = array<i64: 37, 24>}, {pipeline_mode = #tpu.pipeline_mode<synchronous>, transform_indices = @transform_3, window_bounds = array<i64: 24, 17>}, {pipeline_mode = #tpu.pipeline_mode<synchronous>, transform_indices = @transform_4, window_bounds = array<i64: 64, 37>}, {pipeline_mode = #tpu.pipeline_mode<synchronous>, transform_indices = @transform_5, window_bounds = array<i64: 37, 24>}, {pipeline_mode = #tpu.pipeline_mode<synchronous>, transform_indices = @transform_6, window_bounds = array<i64: 24, 17>}, {pipeline_mode = #tpu.pipeline_mode<synchronous>, transform_indices = @transform_7, window_bounds = array<i64: 17, 8, 8>}, {pipeline_mode = #tpu.pipeline_mode<synchronous>, transform_indices = @transform_8, window_bounds = array<i64: 17, 8, 8>}, {pipeline_mode = #tpu.pipeline_mode<synchronous>, transform_indices = @transform_9, window_bounds = array<i64: 38, 64>}, {pipeline_mode = #tpu.pipeline_mode<synchronous>, transform_indices = @transform_10, window_bounds = array<i64: 24, 38>}, {pipeline_mode = #tpu.pipeline_mode<synchronous>, transform_indices = @transform_11, window_bounds = array<i64: 17, 24>}, {pipeline_mode = #tpu.pipeline_mode<synchronous>, transform_indices = @transform_12, window_bounds = array<i64: 37, 64>}, {pipeline_mode = #tpu.pipeline_mode<synchronous>, transform_indices = @transform_13, window_bounds = array<i64: 24, 38>}, {pipeline_mode = #tpu.pipeline_mode<synchronous>, transform_indices = @transform_14, window_bounds = array<i64: 17, 24>}, {transform_indices = @transform_15, window_bounds = array<i64: 8, 64>}]} {
    %c0 = arith.constant 0 : index
    %c0_0 = arith.constant 0 : index
    %0 = vector.load %arg1[%c0, %c0_0] : memref<8x64xf32, #tpu.memory_space<vmem>>, vector<8x64xf32>
    %c0_1 = arith.constant 0 : index
    %c0_2 = arith.constant 0 : index
    %1 = vector.load %arg5[%c0_1, %c0_2] : memref<64x37xf32, #tpu.memory_space<vmem>>, vector<64x37xf32>
    %cst = arith.constant dense<0.000000e+00> : vector<8x37xf32>
    %2 = tpu.matmul %0, %1, %cst {dimension_numbers = #tpu.dot_dimension_numbers<[1], [0], [0], [1], [0, 0, 1, 1], [], []>} : vector<8x64xf32>, vector<64x37xf32>, vector<8x37xf32> -> vector<8x37xf32>
    %c0_3 = arith.constant 0 : index
    %c0_4 = arith.constant 0 : index
    %3 = vector.load %arg2[%c0_3, %c0_4] : memref<64x37xf32, #tpu.memory_space<vmem>>, vector<64x37xf32>
    %cst_5 = arith.constant dense<0.000000e+00> : vector<8x37xf32>
    %4 = tpu.matmul %0, %3, %cst_5 {dimension_numbers = #tpu.dot_dimension_numbers<[1], [0], [0], [1], [0, 0, 1, 1], [], []>} : vector<8x64xf32>, vector<64x37xf32>, vector<8x37xf32> -> vector<8x37xf32>
    %c0_6 = arith.constant 0 : index
    %c0_7 = arith.constant 0 : index
    %5 = vector.load %arg6[%c0_6, %c0_7] : memref<37x24xf32, #tpu.memory_space<vmem>>, vector<37x24xf32>
    %cst_8 = arith.constant dense<0.000000e+00> : vector<8x24xf32>
    %6 = tpu.matmul %4, %5, %cst_8 {dimension_numbers = #tpu.dot_dimension_numbers<[1], [0], [0], [1], [0, 0, 1, 1], [], []>} : vector<8x37xf32>, vector<37x24xf32>, vector<8x24xf32> -> vector<8x24xf32>
    %c0_9 = arith.constant 0 : index
    %c0_10 = arith.constant 0 : index
    %7 = vector.load %arg3[%c0_9, %c0_10] : memref<37x24xf32, #tpu.memory_space<vmem>>, vector<37x24xf32>
    %cst_11 = arith.constant dense<0.000000e+00> : vector<8x24xf32>
    %8 = tpu.matmul %4, %7, %cst_11 {dimension_numbers = #tpu.dot_dimension_numbers<[1], [0], [0], [1], [0, 0, 1, 1], [], []>} : vector<8x37xf32>, vector<37x24xf32>, vector<8x24xf32> -> vector<8x24xf32>
    %c0_12 = arith.constant 0 : index
    %c0_13 = arith.constant 0 : index
    %9 = vector.load %arg7[%c0_12, %c0_13] : memref<24x17xf32, #tpu.memory_space<vmem>>, vector<24x17xf32>
    %cst_14 = arith.constant dense<0.000000e+00> : vector<8x17xf32>
    %10 = tpu.matmul %8, %9, %cst_14 {dimension_numbers = #tpu.dot_dimension_numbers<[1], [0], [0], [1], [0, 0, 1, 1], [], []>} : vector<8x24xf32>, vector<24x17xf32>, vector<8x17xf32> -> vector<8x17xf32>
    %c0_15 = arith.constant 0 : index
    %c0_16 = arith.constant 0 : index
    %11 = vector.load %arg4[%c0_15, %c0_16] : memref<24x17xf32, #tpu.memory_space<vmem>>, vector<24x17xf32>
    %cst_17 = arith.constant dense<0.000000e+00> : vector<8x17xf32>
    %12 = tpu.matmul %8, %11, %cst_17 {dimension_numbers = #tpu.dot_dimension_numbers<[1], [0], [0], [1], [0, 0, 1, 1], [], []>} : vector<8x24xf32>, vector<24x17xf32>, vector<8x17xf32> -> vector<8x17xf32>
    %13 = tpu.iota {dimensions = array<i32: 1>} : vector<8x17xi32>
    %c0_i32 = arith.constant 0 : i32
    %14 = vector.broadcast %c0_i32 : i32 to vector<8x17xi32>
    %15 = arith.cmpi eq, %13, %14 : vector<8x17xi32>
    %cst_18 = arith.constant 0.000000e+00 : f32
    %16 = vector.broadcast %cst_18 : f32 to vector<8x17xf32>
    %17 = arith.select %15, %12, %16 : vector<8x17xi1>, vector<8x17xf32>
    %c0_19 = arith.constant 0 : index
    %c0_20 = arith.constant 0 : index
    %c0_21 = arith.constant 0 : index
    %18 = vector.load %arg8[%c0_19, %c0_20, %c0_21] : memref<17x8x8xf32, #tpu.memory_space<vmem>>, vector<1x8x8xf32>
    %19 = vector.shape_cast %18 : vector<1x8x8xf32> to vector<8x8xf32>
    %cst_22 = arith.constant dense<0.000000e+00> : vector<8x17xf32>
    %20 = tpu.matmul %19, %17, %cst_22 {dimension_numbers = #tpu.dot_dimension_numbers<[1], [0], [0], [1], [0, 0, 1, 1], [], []>} : vector<8x8xf32>, vector<8x17xf32>, vector<8x17xf32> -> vector<8x17xf32>
    %c1_i32 = arith.constant 1 : i32
    %21 = vector.broadcast %c1_i32 : i32 to vector<8x17xi32>
    %22 = arith.cmpi eq, %13, %21 : vector<8x17xi32>
    %cst_23 = arith.constant 0.000000e+00 : f32
    %23 = vector.broadcast %cst_23 : f32 to vector<8x17xf32>
    %24 = arith.select %22, %12, %23 : vector<8x17xi1>, vector<8x17xf32>
    %c1 = arith.constant 1 : index
    %c0_24 = arith.constant 0 : index
    %c0_25 = arith.constant 0 : index
    %25 = vector.load %arg8[%c1, %c0_24, %c0_25] : memref<17x8x8xf32, #tpu.memory_space<vmem>>, vector<1x8x8xf32>
    %26 = vector.shape_cast %25 : vector<1x8x8xf32> to vector<8x8xf32>
    %cst_26 = arith.constant dense<0.000000e+00> : vector<8x17xf32>
    %27 = tpu.matmul %26, %24, %cst_26 {dimension_numbers = #tpu.dot_dimension_numbers<[1], [0], [0], [1], [0, 0, 1, 1], [], []>} : vector<8x8xf32>, vector<8x17xf32>, vector<8x17xf32> -> vector<8x17xf32>
    %28 = arith.addf %20, %27 : vector<8x17xf32>
    %c2_i32 = arith.constant 2 : i32
    %29 = vector.broadcast %c2_i32 : i32 to vector<8x17xi32>
    %30 = arith.cmpi eq, %13, %29 : vector<8x17xi32>
    %cst_27 = arith.constant 0.000000e+00 : f32
    %31 = vector.broadcast %cst_27 : f32 to vector<8x17xf32>
    %32 = arith.select %30, %12, %31 : vector<8x17xi1>, vector<8x17xf32>
    %c2 = arith.constant 2 : index
    %c0_28 = arith.constant 0 : index
    %c0_29 = arith.constant 0 : index
    %33 = vector.load %arg8[%c2, %c0_28, %c0_29] : memref<17x8x8xf32, #tpu.memory_space<vmem>>, vector<1x8x8xf32>
    %34 = vector.shape_cast %33 : vector<1x8x8xf32> to vector<8x8xf32>
    %cst_30 = arith.constant dense<0.000000e+00> : vector<8x17xf32>
    %35 = tpu.matmul %34, %32, %cst_30 {dimension_numbers = #tpu.dot_dimension_numbers<[1], [0], [0], [1], [0, 0, 1, 1], [], []>} : vector<8x8xf32>, vector<8x17xf32>, vector<8x17xf32> -> vector<8x17xf32>
    %36 = arith.addf %28, %35 : vector<8x17xf32>
    %c3_i32 = arith.constant 3 : i32
    %37 = vector.broadcast %c3_i32 : i32 to vector<8x17xi32>
    %38 = arith.cmpi eq, %13, %37 : vector<8x17xi32>
    %cst_31 = arith.constant 0.000000e+00 : f32
    %39 = vector.broadcast %cst_31 : f32 to vector<8x17xf32>
    %40 = arith.select %38, %12, %39 : vector<8x17xi1>, vector<8x17xf32>
    %c3 = arith.constant 3 : index
    %c0_32 = arith.constant 0 : index
    %c0_33 = arith.constant 0 : index
    %41 = vector.load %arg8[%c3, %c0_32, %c0_33] : memref<17x8x8xf32, #tpu.memory_space<vmem>>, vector<1x8x8xf32>
    %42 = vector.shape_cast %41 : vector<1x8x8xf32> to vector<8x8xf32>
    %cst_34 = arith.constant dense<0.000000e+00> : vector<8x17xf32>
    %43 = tpu.matmul %42, %40, %cst_34 {dimension_numbers = #tpu.dot_dimension_numbers<[1], [0], [0], [1], [0, 0, 1, 1], [], []>} : vector<8x8xf32>, vector<8x17xf32>, vector<8x17xf32> -> vector<8x17xf32>
    %44 = arith.addf %36, %43 : vector<8x17xf32>
    %c4_i32 = arith.constant 4 : i32
    %45 = vector.broadcast %c4_i32 : i32 to vector<8x17xi32>
    %46 = arith.cmpi eq, %13, %45 : vector<8x17xi32>
    %cst_35 = arith.constant 0.000000e+00 : f32
    %47 = vector.broadcast %cst_35 : f32 to vector<8x17xf32>
    %48 = arith.select %46, %12, %47 : vector<8x17xi1>, vector<8x17xf32>
    %c4 = arith.constant 4 : index
    %c0_36 = arith.constant 0 : index
    %c0_37 = arith.constant 0 : index
    %49 = vector.load %arg8[%c4, %c0_36, %c0_37] : memref<17x8x8xf32, #tpu.memory_space<vmem>>, vector<1x8x8xf32>
    %50 = vector.shape_cast %49 : vector<1x8x8xf32> to vector<8x8xf32>
    %cst_38 = arith.constant dense<0.000000e+00> : vector<8x17xf32>
    %51 = tpu.matmul %50, %48, %cst_38 {dimension_numbers = #tpu.dot_dimension_numbers<[1], [0], [0], [1], [0, 0, 1, 1], [], []>} : vector<8x8xf32>, vector<8x17xf32>, vector<8x17xf32> -> vector<8x17xf32>
    %52 = arith.addf %44, %51 : vector<8x17xf32>
    %c5_i32 = arith.constant 5 : i32
    %53 = vector.broadcast %c5_i32 : i32 to vector<8x17xi32>
    %54 = arith.cmpi eq, %13, %53 : vector<8x17xi32>
    %cst_39 = arith.constant 0.000000e+00 : f32
    %55 = vector.broadcast %cst_39 : f32 to vector<8x17xf32>
    %56 = arith.select %54, %12, %55 : vector<8x17xi1>, vector<8x17xf32>
    %c5 = arith.constant 5 : index
    %c0_40 = arith.constant 0 : index
    %c0_41 = arith.constant 0 : index
    %57 = vector.load %arg8[%c5, %c0_40, %c0_41] : memref<17x8x8xf32, #tpu.memory_space<vmem>>, vector<1x8x8xf32>
    %58 = vector.shape_cast %57 : vector<1x8x8xf32> to vector<8x8xf32>
    %cst_42 = arith.constant dense<0.000000e+00> : vector<8x17xf32>
    %59 = tpu.matmul %58, %56, %cst_42 {dimension_numbers = #tpu.dot_dimension_numbers<[1], [0], [0], [1], [0, 0, 1, 1], [], []>} : vector<8x8xf32>, vector<8x17xf32>, vector<8x17xf32> -> vector<8x17xf32>
    %60 = arith.addf %52, %59 : vector<8x17xf32>
    %c6_i32 = arith.constant 6 : i32
    %61 = vector.broadcast %c6_i32 : i32 to vector<8x17xi32>
    %62 = arith.cmpi eq, %13, %61 : vector<8x17xi32>
    %cst_43 = arith.constant 0.000000e+00 : f32
    %63 = vector.broadcast %cst_43 : f32 to vector<8x17xf32>
    %64 = arith.select %62, %12, %63 : vector<8x17xi1>, vector<8x17xf32>
    %c6 = arith.constant 6 : index
    %c0_44 = arith.constant 0 : index
    %c0_45 = arith.constant 0 : index
    %65 = vector.load %arg8[%c6, %c0_44, %c0_45] : memref<17x8x8xf32, #tpu.memory_space<vmem>>, vector<1x8x8xf32>
    %66 = vector.shape_cast %65 : vector<1x8x8xf32> to vector<8x8xf32>
    %cst_46 = arith.constant dense<0.000000e+00> : vector<8x17xf32>
    %67 = tpu.matmul %66, %64, %cst_46 {dimension_numbers = #tpu.dot_dimension_numbers<[1], [0], [0], [1], [0, 0, 1, 1], [], []>} : vector<8x8xf32>, vector<8x17xf32>, vector<8x17xf32> -> vector<8x17xf32>
    %68 = arith.addf %60, %67 : vector<8x17xf32>
    %c7_i32 = arith.constant 7 : i32
    %69 = vector.broadcast %c7_i32 : i32 to vector<8x17xi32>
    %70 = arith.cmpi eq, %13, %69 : vector<8x17xi32>
    %cst_47 = arith.constant 0.000000e+00 : f32
    %71 = vector.broadcast %cst_47 : f32 to vector<8x17xf32>
    %72 = arith.select %70, %12, %71 : vector<8x17xi1>, vector<8x17xf32>
    %c7 = arith.constant 7 : index
    %c0_48 = arith.constant 0 : index
    %c0_49 = arith.constant 0 : index
    %73 = vector.load %arg8[%c7, %c0_48, %c0_49] : memref<17x8x8xf32, #tpu.memory_space<vmem>>, vector<1x8x8xf32>
    %74 = vector.shape_cast %73 : vector<1x8x8xf32> to vector<8x8xf32>
    %cst_50 = arith.constant dense<0.000000e+00> : vector<8x17xf32>
    %75 = tpu.matmul %74, %72, %cst_50 {dimension_numbers = #tpu.dot_dimension_numbers<[1], [0], [0], [1], [0, 0, 1, 1], [], []>} : vector<8x8xf32>, vector<8x17xf32>, vector<8x17xf32> -> vector<8x17xf32>
    %76 = arith.addf %68, %75 : vector<8x17xf32>
    %c8_i32 = arith.constant 8 : i32
    %77 = vector.broadcast %c8_i32 : i32 to vector<8x17xi32>
    %78 = arith.cmpi eq, %13, %77 : vector<8x17xi32>
    %cst_51 = arith.constant 0.000000e+00 : f32
    %79 = vector.broadcast %cst_51 : f32 to vector<8x17xf32>
    %80 = arith.select %78, %12, %79 : vector<8x17xi1>, vector<8x17xf32>
    %c8 = arith.constant 8 : index
    %c0_52 = arith.constant 0 : index
    %c0_53 = arith.constant 0 : index
    %81 = vector.load %arg8[%c8, %c0_52, %c0_53] : memref<17x8x8xf32, #tpu.memory_space<vmem>>, vector<1x8x8xf32>
    %82 = vector.shape_cast %81 : vector<1x8x8xf32> to vector<8x8xf32>
    %cst_54 = arith.constant dense<0.000000e+00> : vector<8x17xf32>
    %83 = tpu.matmul %82, %80, %cst_54 {dimension_numbers = #tpu.dot_dimension_numbers<[1], [0], [0], [1], [0, 0, 1, 1], [], []>} : vector<8x8xf32>, vector<8x17xf32>, vector<8x17xf32> -> vector<8x17xf32>
    %84 = arith.addf %76, %83 : vector<8x17xf32>
    %c9_i32 = arith.constant 9 : i32
    %85 = vector.broadcast %c9_i32 : i32 to vector<8x17xi32>
    %86 = arith.cmpi eq, %13, %85 : vector<8x17xi32>
    %cst_55 = arith.constant 0.000000e+00 : f32
    %87 = vector.broadcast %cst_55 : f32 to vector<8x17xf32>
    %88 = arith.select %86, %12, %87 : vector<8x17xi1>, vector<8x17xf32>
    %c9 = arith.constant 9 : index
    %c0_56 = arith.constant 0 : index
    %c0_57 = arith.constant 0 : index
    %89 = vector.load %arg8[%c9, %c0_56, %c0_57] : memref<17x8x8xf32, #tpu.memory_space<vmem>>, vector<1x8x8xf32>
    %90 = vector.shape_cast %89 : vector<1x8x8xf32> to vector<8x8xf32>
    %cst_58 = arith.constant dense<0.000000e+00> : vector<8x17xf32>
    %91 = tpu.matmul %90, %88, %cst_58 {dimension_numbers = #tpu.dot_dimension_numbers<[1], [0], [0], [1], [0, 0, 1, 1], [], []>} : vector<8x8xf32>, vector<8x17xf32>, vector<8x17xf32> -> vector<8x17xf32>
    %92 = arith.addf %84, %91 : vector<8x17xf32>
    %c10_i32 = arith.constant 10 : i32
    %93 = vector.broadcast %c10_i32 : i32 to vector<8x17xi32>
    %94 = arith.cmpi eq, %13, %93 : vector<8x17xi32>
    %cst_59 = arith.constant 0.000000e+00 : f32
    %95 = vector.broadcast %cst_59 : f32 to vector<8x17xf32>
    %96 = arith.select %94, %12, %95 : vector<8x17xi1>, vector<8x17xf32>
    %c10 = arith.constant 10 : index
    %c0_60 = arith.constant 0 : index
    %c0_61 = arith.constant 0 : index
    %97 = vector.load %arg8[%c10, %c0_60, %c0_61] : memref<17x8x8xf32, #tpu.memory_space<vmem>>, vector<1x8x8xf32>
    %98 = vector.shape_cast %97 : vector<1x8x8xf32> to vector<8x8xf32>
    %cst_62 = arith.constant dense<0.000000e+00> : vector<8x17xf32>
    %99 = tpu.matmul %98, %96, %cst_62 {dimension_numbers = #tpu.dot_dimension_numbers<[1], [0], [0], [1], [0, 0, 1, 1], [], []>} : vector<8x8xf32>, vector<8x17xf32>, vector<8x17xf32> -> vector<8x17xf32>
    %100 = arith.addf %92, %99 : vector<8x17xf32>
    %c11_i32 = arith.constant 11 : i32
    %101 = vector.broadcast %c11_i32 : i32 to vector<8x17xi32>
    %102 = arith.cmpi eq, %13, %101 : vector<8x17xi32>
    %cst_63 = arith.constant 0.000000e+00 : f32
    %103 = vector.broadcast %cst_63 : f32 to vector<8x17xf32>
    %104 = arith.select %102, %12, %103 : vector<8x17xi1>, vector<8x17xf32>
    %c11 = arith.constant 11 : index
    %c0_64 = arith.constant 0 : index
    %c0_65 = arith.constant 0 : index
    %105 = vector.load %arg8[%c11, %c0_64, %c0_65] : memref<17x8x8xf32, #tpu.memory_space<vmem>>, vector<1x8x8xf32>
    %106 = vector.shape_cast %105 : vector<1x8x8xf32> to vector<8x8xf32>
    %cst_66 = arith.constant dense<0.000000e+00> : vector<8x17xf32>
    %107 = tpu.matmul %106, %104, %cst_66 {dimension_numbers = #tpu.dot_dimension_numbers<[1], [0], [0], [1], [0, 0, 1, 1], [], []>} : vector<8x8xf32>, vector<8x17xf32>, vector<8x17xf32> -> vector<8x17xf32>
    %108 = arith.addf %100, %107 : vector<8x17xf32>
    %c12_i32 = arith.constant 12 : i32
    %109 = vector.broadcast %c12_i32 : i32 to vector<8x17xi32>
    %110 = arith.cmpi eq, %13, %109 : vector<8x17xi32>
    %cst_67 = arith.constant 0.000000e+00 : f32
    %111 = vector.broadcast %cst_67 : f32 to vector<8x17xf32>
    %112 = arith.select %110, %12, %111 : vector<8x17xi1>, vector<8x17xf32>
    %c12 = arith.constant 12 : index
    %c0_68 = arith.constant 0 : index
    %c0_69 = arith.constant 0 : index
    %113 = vector.load %arg8[%c12, %c0_68, %c0_69] : memref<17x8x8xf32, #tpu.memory_space<vmem>>, vector<1x8x8xf32>
    %114 = vector.shape_cast %113 : vector<1x8x8xf32> to vector<8x8xf32>
    %cst_70 = arith.constant dense<0.000000e+00> : vector<8x17xf32>
    %115 = tpu.matmul %114, %112, %cst_70 {dimension_numbers = #tpu.dot_dimension_numbers<[1], [0], [0], [1], [0, 0, 1, 1], [], []>} : vector<8x8xf32>, vector<8x17xf32>, vector<8x17xf32> -> vector<8x17xf32>
    %116 = arith.addf %108, %115 : vector<8x17xf32>
    %c13_i32 = arith.constant 13 : i32
    %117 = vector.broadcast %c13_i32 : i32 to vector<8x17xi32>
    %118 = arith.cmpi eq, %13, %117 : vector<8x17xi32>
    %cst_71 = arith.constant 0.000000e+00 : f32
    %119 = vector.broadcast %cst_71 : f32 to vector<8x17xf32>
    %120 = arith.select %118, %12, %119 : vector<8x17xi1>, vector<8x17xf32>
    %c13 = arith.constant 13 : index
    %c0_72 = arith.constant 0 : index
    %c0_73 = arith.constant 0 : index
    %121 = vector.load %arg8[%c13, %c0_72, %c0_73] : memref<17x8x8xf32, #tpu.memory_space<vmem>>, vector<1x8x8xf32>
    %122 = vector.shape_cast %121 : vector<1x8x8xf32> to vector<8x8xf32>
    %cst_74 = arith.constant dense<0.000000e+00> : vector<8x17xf32>
    %123 = tpu.matmul %122, %120, %cst_74 {dimension_numbers = #tpu.dot_dimension_numbers<[1], [0], [0], [1], [0, 0, 1, 1], [], []>} : vector<8x8xf32>, vector<8x17xf32>, vector<8x17xf32> -> vector<8x17xf32>
    %124 = arith.addf %116, %123 : vector<8x17xf32>
    %c14_i32 = arith.constant 14 : i32
    %125 = vector.broadcast %c14_i32 : i32 to vector<8x17xi32>
    %126 = arith.cmpi eq, %13, %125 : vector<8x17xi32>
    %cst_75 = arith.constant 0.000000e+00 : f32
    %127 = vector.broadcast %cst_75 : f32 to vector<8x17xf32>
    %128 = arith.select %126, %12, %127 : vector<8x17xi1>, vector<8x17xf32>
    %c14 = arith.constant 14 : index
    %c0_76 = arith.constant 0 : index
    %c0_77 = arith.constant 0 : index
    %129 = vector.load %arg8[%c14, %c0_76, %c0_77] : memref<17x8x8xf32, #tpu.memory_space<vmem>>, vector<1x8x8xf32>
    %130 = vector.shape_cast %129 : vector<1x8x8xf32> to vector<8x8xf32>
    %cst_78 = arith.constant dense<0.000000e+00> : vector<8x17xf32>
    %131 = tpu.matmul %130, %128, %cst_78 {dimension_numbers = #tpu.dot_dimension_numbers<[1], [0], [0], [1], [0, 0, 1, 1], [], []>} : vector<8x8xf32>, vector<8x17xf32>, vector<8x17xf32> -> vector<8x17xf32>
    %132 = arith.addf %124, %131 : vector<8x17xf32>
    %c15_i32 = arith.constant 15 : i32
    %133 = vector.broadcast %c15_i32 : i32 to vector<8x17xi32>
    %134 = arith.cmpi eq, %13, %133 : vector<8x17xi32>
    %cst_79 = arith.constant 0.000000e+00 : f32
    %135 = vector.broadcast %cst_79 : f32 to vector<8x17xf32>
    %136 = arith.select %134, %12, %135 : vector<8x17xi1>, vector<8x17xf32>
    %c15 = arith.constant 15 : index
    %c0_80 = arith.constant 0 : index
    %c0_81 = arith.constant 0 : index
    %137 = vector.load %arg8[%c15, %c0_80, %c0_81] : memref<17x8x8xf32, #tpu.memory_space<vmem>>, vector<1x8x8xf32>
    %138 = vector.shape_cast %137 : vector<1x8x8xf32> to vector<8x8xf32>
    %cst_82 = arith.constant dense<0.000000e+00> : vector<8x17xf32>
    %139 = tpu.matmul %138, %136, %cst_82 {dimension_numbers = #tpu.dot_dimension_numbers<[1], [0], [0], [1], [0, 0, 1, 1], [], []>} : vector<8x8xf32>, vector<8x17xf32>, vector<8x17xf32> -> vector<8x17xf32>
    %140 = arith.addf %132, %139 : vector<8x17xf32>
    %c16_i32 = arith.constant 16 : i32
    %141 = vector.broadcast %c16_i32 : i32 to vector<8x17xi32>
    %142 = arith.cmpi eq, %13, %141 : vector<8x17xi32>
    %cst_83 = arith.constant 0.000000e+00 : f32
    %143 = vector.broadcast %cst_83 : f32 to vector<8x17xf32>
    %144 = arith.select %142, %12, %143 : vector<8x17xi1>, vector<8x17xf32>
    %c16 = arith.constant 16 : index
    %c0_84 = arith.constant 0 : index
    %c0_85 = arith.constant 0 : index
    %145 = vector.load %arg8[%c16, %c0_84, %c0_85] : memref<17x8x8xf32, #tpu.memory_space<vmem>>, vector<1x8x8xf32>
    %146 = vector.shape_cast %145 : vector<1x8x8xf32> to vector<8x8xf32>
    %cst_86 = arith.constant dense<0.000000e+00> : vector<8x17xf32>
    %147 = tpu.matmul %146, %144, %cst_86 {dimension_numbers = #tpu.dot_dimension_numbers<[1], [0], [0], [1], [0, 0, 1, 1], [], []>} : vector<8x8xf32>, vector<8x17xf32>, vector<8x17xf32> -> vector<8x17xf32>
    %148 = arith.addf %140, %147 : vector<8x17xf32>
    %c0_i32_87 = arith.constant 0 : i32
    %149 = vector.broadcast %c0_i32_87 : i32 to vector<8x17xi32>
    %150 = arith.cmpi eq, %13, %149 : vector<8x17xi32>
    %cst_88 = arith.constant 0.000000e+00 : f32
    %151 = vector.broadcast %cst_88 : f32 to vector<8x17xf32>
    %152 = arith.select %150, %10, %151 : vector<8x17xi1>, vector<8x17xf32>
    %c0_89 = arith.constant 0 : index
    %c0_90 = arith.constant 0 : index
    %c0_91 = arith.constant 0 : index
    %153 = vector.load %arg9[%c0_89, %c0_90, %c0_91] : memref<17x8x8xf32, #tpu.memory_space<vmem>>, vector<1x8x8xf32>
    %154 = vector.shape_cast %153 : vector<1x8x8xf32> to vector<8x8xf32>
    %cst_92 = arith.constant dense<0.000000e+00> : vector<8x17xf32>
    %155 = tpu.matmul %154, %152, %cst_92 {dimension_numbers = #tpu.dot_dimension_numbers<[1], [0], [0], [1], [0, 0, 1, 1], [], []>} : vector<8x8xf32>, vector<8x17xf32>, vector<8x17xf32> -> vector<8x17xf32>
    %c1_i32_93 = arith.constant 1 : i32
    %156 = vector.broadcast %c1_i32_93 : i32 to vector<8x17xi32>
    %157 = arith.cmpi eq, %13, %156 : vector<8x17xi32>
    %cst_94 = arith.constant 0.000000e+00 : f32
    %158 = vector.broadcast %cst_94 : f32 to vector<8x17xf32>
    %159 = arith.select %157, %10, %158 : vector<8x17xi1>, vector<8x17xf32>
    %c1_95 = arith.constant 1 : index
    %c0_96 = arith.constant 0 : index
    %c0_97 = arith.constant 0 : index
    %160 = vector.load %arg9[%c1_95, %c0_96, %c0_97] : memref<17x8x8xf32, #tpu.memory_space<vmem>>, vector<1x8x8xf32>
    %161 = vector.shape_cast %160 : vector<1x8x8xf32> to vector<8x8xf32>
    %cst_98 = arith.constant dense<0.000000e+00> : vector<8x17xf32>
    %162 = tpu.matmul %161, %159, %cst_98 {dimension_numbers = #tpu.dot_dimension_numbers<[1], [0], [0], [1], [0, 0, 1, 1], [], []>} : vector<8x8xf32>, vector<8x17xf32>, vector<8x17xf32> -> vector<8x17xf32>
    %163 = arith.addf %155, %162 : vector<8x17xf32>
    %c2_i32_99 = arith.constant 2 : i32
    %164 = vector.broadcast %c2_i32_99 : i32 to vector<8x17xi32>
    %165 = arith.cmpi eq, %13, %164 : vector<8x17xi32>
    %cst_100 = arith.constant 0.000000e+00 : f32
    %166 = vector.broadcast %cst_100 : f32 to vector<8x17xf32>
    %167 = arith.select %165, %10, %166 : vector<8x17xi1>, vector<8x17xf32>
    %c2_101 = arith.constant 2 : index
    %c0_102 = arith.constant 0 : index
    %c0_103 = arith.constant 0 : index
    %168 = vector.load %arg9[%c2_101, %c0_102, %c0_103] : memref<17x8x8xf32, #tpu.memory_space<vmem>>, vector<1x8x8xf32>
    %169 = vector.shape_cast %168 : vector<1x8x8xf32> to vector<8x8xf32>
    %cst_104 = arith.constant dense<0.000000e+00> : vector<8x17xf32>
    %170 = tpu.matmul %169, %167, %cst_104 {dimension_numbers = #tpu.dot_dimension_numbers<[1], [0], [0], [1], [0, 0, 1, 1], [], []>} : vector<8x8xf32>, vector<8x17xf32>, vector<8x17xf32> -> vector<8x17xf32>
    %171 = arith.addf %163, %170 : vector<8x17xf32>
    %c3_i32_105 = arith.constant 3 : i32
    %172 = vector.broadcast %c3_i32_105 : i32 to vector<8x17xi32>
    %173 = arith.cmpi eq, %13, %172 : vector<8x17xi32>
    %cst_106 = arith.constant 0.000000e+00 : f32
    %174 = vector.broadcast %cst_106 : f32 to vector<8x17xf32>
    %175 = arith.select %173, %10, %174 : vector<8x17xi1>, vector<8x17xf32>
    %c3_107 = arith.constant 3 : index
    %c0_108 = arith.constant 0 : index
    %c0_109 = arith.constant 0 : index
    %176 = vector.load %arg9[%c3_107, %c0_108, %c0_109] : memref<17x8x8xf32, #tpu.memory_space<vmem>>, vector<1x8x8xf32>
    %177 = vector.shape_cast %176 : vector<1x8x8xf32> to vector<8x8xf32>
    %cst_110 = arith.constant dense<0.000000e+00> : vector<8x17xf32>
    %178 = tpu.matmul %177, %175, %cst_110 {dimension_numbers = #tpu.dot_dimension_numbers<[1], [0], [0], [1], [0, 0, 1, 1], [], []>} : vector<8x8xf32>, vector<8x17xf32>, vector<8x17xf32> -> vector<8x17xf32>
    %179 = arith.addf %171, %178 : vector<8x17xf32>
    %c4_i32_111 = arith.constant 4 : i32
    %180 = vector.broadcast %c4_i32_111 : i32 to vector<8x17xi32>
    %181 = arith.cmpi eq, %13, %180 : vector<8x17xi32>
    %cst_112 = arith.constant 0.000000e+00 : f32
    %182 = vector.broadcast %cst_112 : f32 to vector<8x17xf32>
    %183 = arith.select %181, %10, %182 : vector<8x17xi1>, vector<8x17xf32>
    %c4_113 = arith.constant 4 : index
    %c0_114 = arith.constant 0 : index
    %c0_115 = arith.constant 0 : index
    %184 = vector.load %arg9[%c4_113, %c0_114, %c0_115] : memref<17x8x8xf32, #tpu.memory_space<vmem>>, vector<1x8x8xf32>
    %185 = vector.shape_cast %184 : vector<1x8x8xf32> to vector<8x8xf32>
    %cst_116 = arith.constant dense<0.000000e+00> : vector<8x17xf32>
    %186 = tpu.matmul %185, %183, %cst_116 {dimension_numbers = #tpu.dot_dimension_numbers<[1], [0], [0], [1], [0, 0, 1, 1], [], []>} : vector<8x8xf32>, vector<8x17xf32>, vector<8x17xf32> -> vector<8x17xf32>
    %187 = arith.addf %179, %186 : vector<8x17xf32>
    %c5_i32_117 = arith.constant 5 : i32
    %188 = vector.broadcast %c5_i32_117 : i32 to vector<8x17xi32>
    %189 = arith.cmpi eq, %13, %188 : vector<8x17xi32>
    %cst_118 = arith.constant 0.000000e+00 : f32
    %190 = vector.broadcast %cst_118 : f32 to vector<8x17xf32>
    %191 = arith.select %189, %10, %190 : vector<8x17xi1>, vector<8x17xf32>
    %c5_119 = arith.constant 5 : index
    %c0_120 = arith.constant 0 : index
    %c0_121 = arith.constant 0 : index
    %192 = vector.load %arg9[%c5_119, %c0_120, %c0_121] : memref<17x8x8xf32, #tpu.memory_space<vmem>>, vector<1x8x8xf32>
    %193 = vector.shape_cast %192 : vector<1x8x8xf32> to vector<8x8xf32>
    %cst_122 = arith.constant dense<0.000000e+00> : vector<8x17xf32>
    %194 = tpu.matmul %193, %191, %cst_122 {dimension_numbers = #tpu.dot_dimension_numbers<[1], [0], [0], [1], [0, 0, 1, 1], [], []>} : vector<8x8xf32>, vector<8x17xf32>, vector<8x17xf32> -> vector<8x17xf32>
    %195 = arith.addf %187, %194 : vector<8x17xf32>
    %c6_i32_123 = arith.constant 6 : i32
    %196 = vector.broadcast %c6_i32_123 : i32 to vector<8x17xi32>
    %197 = arith.cmpi eq, %13, %196 : vector<8x17xi32>
    %cst_124 = arith.constant 0.000000e+00 : f32
    %198 = vector.broadcast %cst_124 : f32 to vector<8x17xf32>
    %199 = arith.select %197, %10, %198 : vector<8x17xi1>, vector<8x17xf32>
    %c6_125 = arith.constant 6 : index
    %c0_126 = arith.constant 0 : index
    %c0_127 = arith.constant 0 : index
    %200 = vector.load %arg9[%c6_125, %c0_126, %c0_127] : memref<17x8x8xf32, #tpu.memory_space<vmem>>, vector<1x8x8xf32>
    %201 = vector.shape_cast %200 : vector<1x8x8xf32> to vector<8x8xf32>
    %cst_128 = arith.constant dense<0.000000e+00> : vector<8x17xf32>
    %202 = tpu.matmul %201, %199, %cst_128 {dimension_numbers = #tpu.dot_dimension_numbers<[1], [0], [0], [1], [0, 0, 1, 1], [], []>} : vector<8x8xf32>, vector<8x17xf32>, vector<8x17xf32> -> vector<8x17xf32>
    %203 = arith.addf %195, %202 : vector<8x17xf32>
    %c7_i32_129 = arith.constant 7 : i32
    %204 = vector.broadcast %c7_i32_129 : i32 to vector<8x17xi32>
    %205 = arith.cmpi eq, %13, %204 : vector<8x17xi32>
    %cst_130 = arith.constant 0.000000e+00 : f32
    %206 = vector.broadcast %cst_130 : f32 to vector<8x17xf32>
    %207 = arith.select %205, %10, %206 : vector<8x17xi1>, vector<8x17xf32>
    %c7_131 = arith.constant 7 : index
    %c0_132 = arith.constant 0 : index
    %c0_133 = arith.constant 0 : index
    %208 = vector.load %arg9[%c7_131, %c0_132, %c0_133] : memref<17x8x8xf32, #tpu.memory_space<vmem>>, vector<1x8x8xf32>
    %209 = vector.shape_cast %208 : vector<1x8x8xf32> to vector<8x8xf32>
    %cst_134 = arith.constant dense<0.000000e+00> : vector<8x17xf32>
    %210 = tpu.matmul %209, %207, %cst_134 {dimension_numbers = #tpu.dot_dimension_numbers<[1], [0], [0], [1], [0, 0, 1, 1], [], []>} : vector<8x8xf32>, vector<8x17xf32>, vector<8x17xf32> -> vector<8x17xf32>
    %211 = arith.addf %203, %210 : vector<8x17xf32>
    %c8_i32_135 = arith.constant 8 : i32
    %212 = vector.broadcast %c8_i32_135 : i32 to vector<8x17xi32>
    %213 = arith.cmpi eq, %13, %212 : vector<8x17xi32>
    %cst_136 = arith.constant 0.000000e+00 : f32
    %214 = vector.broadcast %cst_136 : f32 to vector<8x17xf32>
    %215 = arith.select %213, %10, %214 : vector<8x17xi1>, vector<8x17xf32>
    %c8_137 = arith.constant 8 : index
    %c0_138 = arith.constant 0 : index
    %c0_139 = arith.constant 0 : index
    %216 = vector.load %arg9[%c8_137, %c0_138, %c0_139] : memref<17x8x8xf32, #tpu.memory_space<vmem>>, vector<1x8x8xf32>
    %217 = vector.shape_cast %216 : vector<1x8x8xf32> to vector<8x8xf32>
    %cst_140 = arith.constant dense<0.000000e+00> : vector<8x17xf32>
    %218 = tpu.matmul %217, %215, %cst_140 {dimension_numbers = #tpu.dot_dimension_numbers<[1], [0], [0], [1], [0, 0, 1, 1], [], []>} : vector<8x8xf32>, vector<8x17xf32>, vector<8x17xf32> -> vector<8x17xf32>
    %219 = arith.addf %211, %218 : vector<8x17xf32>
    %c9_i32_141 = arith.constant 9 : i32
    %220 = vector.broadcast %c9_i32_141 : i32 to vector<8x17xi32>
    %221 = arith.cmpi eq, %13, %220 : vector<8x17xi32>
    %cst_142 = arith.constant 0.000000e+00 : f32
    %222 = vector.broadcast %cst_142 : f32 to vector<8x17xf32>
    %223 = arith.select %221, %10, %222 : vector<8x17xi1>, vector<8x17xf32>
    %c9_143 = arith.constant 9 : index
    %c0_144 = arith.constant 0 : index
    %c0_145 = arith.constant 0 : index
    %224 = vector.load %arg9[%c9_143, %c0_144, %c0_145] : memref<17x8x8xf32, #tpu.memory_space<vmem>>, vector<1x8x8xf32>
    %225 = vector.shape_cast %224 : vector<1x8x8xf32> to vector<8x8xf32>
    %cst_146 = arith.constant dense<0.000000e+00> : vector<8x17xf32>
    %226 = tpu.matmul %225, %223, %cst_146 {dimension_numbers = #tpu.dot_dimension_numbers<[1], [0], [0], [1], [0, 0, 1, 1], [], []>} : vector<8x8xf32>, vector<8x17xf32>, vector<8x17xf32> -> vector<8x17xf32>
    %227 = arith.addf %219, %226 : vector<8x17xf32>
    %c10_i32_147 = arith.constant 10 : i32
    %228 = vector.broadcast %c10_i32_147 : i32 to vector<8x17xi32>
    %229 = arith.cmpi eq, %13, %228 : vector<8x17xi32>
    %cst_148 = arith.constant 0.000000e+00 : f32
    %230 = vector.broadcast %cst_148 : f32 to vector<8x17xf32>
    %231 = arith.select %229, %10, %230 : vector<8x17xi1>, vector<8x17xf32>
    %c10_149 = arith.constant 10 : index
    %c0_150 = arith.constant 0 : index
    %c0_151 = arith.constant 0 : index
    %232 = vector.load %arg9[%c10_149, %c0_150, %c0_151] : memref<17x8x8xf32, #tpu.memory_space<vmem>>, vector<1x8x8xf32>
    %233 = vector.shape_cast %232 : vector<1x8x8xf32> to vector<8x8xf32>
    %cst_152 = arith.constant dense<0.000000e+00> : vector<8x17xf32>
    %234 = tpu.matmul %233, %231, %cst_152 {dimension_numbers = #tpu.dot_dimension_numbers<[1], [0], [0], [1], [0, 0, 1, 1], [], []>} : vector<8x8xf32>, vector<8x17xf32>, vector<8x17xf32> -> vector<8x17xf32>
    %235 = arith.addf %227, %234 : vector<8x17xf32>
    %c11_i32_153 = arith.constant 11 : i32
    %236 = vector.broadcast %c11_i32_153 : i32 to vector<8x17xi32>
    %237 = arith.cmpi eq, %13, %236 : vector<8x17xi32>
    %cst_154 = arith.constant 0.000000e+00 : f32
    %238 = vector.broadcast %cst_154 : f32 to vector<8x17xf32>
    %239 = arith.select %237, %10, %238 : vector<8x17xi1>, vector<8x17xf32>
    %c11_155 = arith.constant 11 : index
    %c0_156 = arith.constant 0 : index
    %c0_157 = arith.constant 0 : index
    %240 = vector.load %arg9[%c11_155, %c0_156, %c0_157] : memref<17x8x8xf32, #tpu.memory_space<vmem>>, vector<1x8x8xf32>
    %241 = vector.shape_cast %240 : vector<1x8x8xf32> to vector<8x8xf32>
    %cst_158 = arith.constant dense<0.000000e+00> : vector<8x17xf32>
    %242 = tpu.matmul %241, %239, %cst_158 {dimension_numbers = #tpu.dot_dimension_numbers<[1], [0], [0], [1], [0, 0, 1, 1], [], []>} : vector<8x8xf32>, vector<8x17xf32>, vector<8x17xf32> -> vector<8x17xf32>
    %243 = arith.addf %235, %242 : vector<8x17xf32>
    %c12_i32_159 = arith.constant 12 : i32
    %244 = vector.broadcast %c12_i32_159 : i32 to vector<8x17xi32>
    %245 = arith.cmpi eq, %13, %244 : vector<8x17xi32>
    %cst_160 = arith.constant 0.000000e+00 : f32
    %246 = vector.broadcast %cst_160 : f32 to vector<8x17xf32>
    %247 = arith.select %245, %10, %246 : vector<8x17xi1>, vector<8x17xf32>
    %c12_161 = arith.constant 12 : index
    %c0_162 = arith.constant 0 : index
    %c0_163 = arith.constant 0 : index
    %248 = vector.load %arg9[%c12_161, %c0_162, %c0_163] : memref<17x8x8xf32, #tpu.memory_space<vmem>>, vector<1x8x8xf32>
    %249 = vector.shape_cast %248 : vector<1x8x8xf32> to vector<8x8xf32>
    %cst_164 = arith.constant dense<0.000000e+00> : vector<8x17xf32>
    %250 = tpu.matmul %249, %247, %cst_164 {dimension_numbers = #tpu.dot_dimension_numbers<[1], [0], [0], [1], [0, 0, 1, 1], [], []>} : vector<8x8xf32>, vector<8x17xf32>, vector<8x17xf32> -> vector<8x17xf32>
    %251 = arith.addf %243, %250 : vector<8x17xf32>
    %c13_i32_165 = arith.constant 13 : i32
    %252 = vector.broadcast %c13_i32_165 : i32 to vector<8x17xi32>
    %253 = arith.cmpi eq, %13, %252 : vector<8x17xi32>
    %cst_166 = arith.constant 0.000000e+00 : f32
    %254 = vector.broadcast %cst_166 : f32 to vector<8x17xf32>
    %255 = arith.select %253, %10, %254 : vector<8x17xi1>, vector<8x17xf32>
    %c13_167 = arith.constant 13 : index
    %c0_168 = arith.constant 0 : index
    %c0_169 = arith.constant 0 : index
    %256 = vector.load %arg9[%c13_167, %c0_168, %c0_169] : memref<17x8x8xf32, #tpu.memory_space<vmem>>, vector<1x8x8xf32>
    %257 = vector.shape_cast %256 : vector<1x8x8xf32> to vector<8x8xf32>
    %cst_170 = arith.constant dense<0.000000e+00> : vector<8x17xf32>
    %258 = tpu.matmul %257, %255, %cst_170 {dimension_numbers = #tpu.dot_dimension_numbers<[1], [0], [0], [1], [0, 0, 1, 1], [], []>} : vector<8x8xf32>, vector<8x17xf32>, vector<8x17xf32> -> vector<8x17xf32>
    %259 = arith.addf %251, %258 : vector<8x17xf32>
    %c14_i32_171 = arith.constant 14 : i32
    %260 = vector.broadcast %c14_i32_171 : i32 to vector<8x17xi32>
    %261 = arith.cmpi eq, %13, %260 : vector<8x17xi32>
    %cst_172 = arith.constant 0.000000e+00 : f32
    %262 = vector.broadcast %cst_172 : f32 to vector<8x17xf32>
    %263 = arith.select %261, %10, %262 : vector<8x17xi1>, vector<8x17xf32>
    %c14_173 = arith.constant 14 : index
    %c0_174 = arith.constant 0 : index
    %c0_175 = arith.constant 0 : index
    %264 = vector.load %arg9[%c14_173, %c0_174, %c0_175] : memref<17x8x8xf32, #tpu.memory_space<vmem>>, vector<1x8x8xf32>
    %265 = vector.shape_cast %264 : vector<1x8x8xf32> to vector<8x8xf32>
    %cst_176 = arith.constant dense<0.000000e+00> : vector<8x17xf32>
    %266 = tpu.matmul %265, %263, %cst_176 {dimension_numbers = #tpu.dot_dimension_numbers<[1], [0], [0], [1], [0, 0, 1, 1], [], []>} : vector<8x8xf32>, vector<8x17xf32>, vector<8x17xf32> -> vector<8x17xf32>
    %267 = arith.addf %259, %266 : vector<8x17xf32>
    %c15_i32_177 = arith.constant 15 : i32
    %268 = vector.broadcast %c15_i32_177 : i32 to vector<8x17xi32>
    %269 = arith.cmpi eq, %13, %268 : vector<8x17xi32>
    %cst_178 = arith.constant 0.000000e+00 : f32
    %270 = vector.broadcast %cst_178 : f32 to vector<8x17xf32>
    %271 = arith.select %269, %10, %270 : vector<8x17xi1>, vector<8x17xf32>
    %c15_179 = arith.constant 15 : index
    %c0_180 = arith.constant 0 : index
    %c0_181 = arith.constant 0 : index
    %272 = vector.load %arg9[%c15_179, %c0_180, %c0_181] : memref<17x8x8xf32, #tpu.memory_space<vmem>>, vector<1x8x8xf32>
    %273 = vector.shape_cast %272 : vector<1x8x8xf32> to vector<8x8xf32>
    %cst_182 = arith.constant dense<0.000000e+00> : vector<8x17xf32>
    %274 = tpu.matmul %273, %271, %cst_182 {dimension_numbers = #tpu.dot_dimension_numbers<[1], [0], [0], [1], [0, 0, 1, 1], [], []>} : vector<8x8xf32>, vector<8x17xf32>, vector<8x17xf32> -> vector<8x17xf32>
    %275 = arith.addf %267, %274 : vector<8x17xf32>
    %c16_i32_183 = arith.constant 16 : i32
    %276 = vector.broadcast %c16_i32_183 : i32 to vector<8x17xi32>
    %277 = arith.cmpi eq, %13, %276 : vector<8x17xi32>
    %cst_184 = arith.constant 0.000000e+00 : f32
    %278 = vector.broadcast %cst_184 : f32 to vector<8x17xf32>
    %279 = arith.select %277, %10, %278 : vector<8x17xi1>, vector<8x17xf32>
    %c16_185 = arith.constant 16 : index
    %c0_186 = arith.constant 0 : index
    %c0_187 = arith.constant 0 : index
    %280 = vector.load %arg9[%c16_185, %c0_186, %c0_187] : memref<17x8x8xf32, #tpu.memory_space<vmem>>, vector<1x8x8xf32>
    %281 = vector.shape_cast %280 : vector<1x8x8xf32> to vector<8x8xf32>
    %cst_188 = arith.constant dense<0.000000e+00> : vector<8x17xf32>
    %282 = tpu.matmul %281, %279, %cst_188 {dimension_numbers = #tpu.dot_dimension_numbers<[1], [0], [0], [1], [0, 0, 1, 1], [], []>} : vector<8x8xf32>, vector<8x17xf32>, vector<8x17xf32> -> vector<8x17xf32>
    %283 = arith.addf %275, %282 : vector<8x17xf32>
    %c0_189 = arith.constant 0 : index
    %c0_190 = arith.constant 0 : index
    %284 = vector.load %arg12[%c0_189, %c0_190] : memref<17x24xf32, #tpu.memory_space<vmem>>, vector<17x24xf32>
    %cst_191 = arith.constant dense<0.000000e+00> : vector<8x24xf32>
    %285 = tpu.matmul %148, %284, %cst_191 {dimension_numbers = #tpu.dot_dimension_numbers<[1], [0], [0], [1], [0, 0, 1, 1], [], []>} : vector<8x17xf32>, vector<17x24xf32>, vector<8x24xf32> -> vector<8x24xf32>
    %c0_192 = arith.constant 0 : index
    %c0_193 = arith.constant 0 : index
    %286 = vector.load %arg15[%c0_192, %c0_193] : memref<17x24xf32, #tpu.memory_space<vmem>>, vector<17x24xf32>
    %cst_194 = arith.constant dense<0.000000e+00> : vector<8x24xf32>
    %287 = tpu.matmul %283, %286, %cst_194 {dimension_numbers = #tpu.dot_dimension_numbers<[1], [0], [0], [1], [0, 0, 1, 1], [], []>} : vector<8x17xf32>, vector<17x24xf32>, vector<8x24xf32> -> vector<8x24xf32>
    %288 = arith.addf %285, %287 : vector<8x24xf32>
    %c0_195 = arith.constant 0 : index
    %c0_196 = arith.constant 0 : index
    %289 = vector.load %arg11[%c0_195, %c0_196] : memref<24x38xf32, #tpu.memory_space<vmem>>, vector<24x38xf32>
    %cst_197 = arith.constant dense<0.000000e+00> : vector<8x38xf32>
    %290 = tpu.matmul %288, %289, %cst_197 {dimension_numbers = #tpu.dot_dimension_numbers<[1], [0], [0], [1], [0, 0, 1, 1], [], []>} : vector<8x24xf32>, vector<24x38xf32>, vector<8x38xf32> -> vector<8x38xf32>
    %c0_198 = arith.constant 0 : index
    %c0_199 = arith.constant 0 : index
    %291 = vector.load %arg14[%c0_198, %c0_199] : memref<24x38xf32, #tpu.memory_space<vmem>>, vector<24x38xf32>
    %cst_200 = arith.constant dense<0.000000e+00> : vector<8x38xf32>
    %292 = tpu.matmul %6, %291, %cst_200 {dimension_numbers = #tpu.dot_dimension_numbers<[1], [0], [0], [1], [0, 0, 1, 1], [], []>} : vector<8x24xf32>, vector<24x38xf32>, vector<8x38xf32> -> vector<8x38xf32>
    %293 = arith.addf %290, %292 : vector<8x38xf32>
    %c0_201 = arith.constant 0 : index
    %c0_202 = arith.constant 0 : index
    %294 = vector.load %arg10[%c0_201, %c0_202] : memref<38x64xf32, #tpu.memory_space<vmem>>, vector<38x64xf32>
    %cst_203 = arith.constant dense<0.000000e+00> : vector<8x64xf32>
    %295 = tpu.matmul %293, %294, %cst_203 {dimension_numbers = #tpu.dot_dimension_numbers<[1], [0], [0], [1], [0, 0, 1, 1], [], []>} : vector<8x38xf32>, vector<38x64xf32>, vector<8x64xf32> -> vector<8x64xf32>
    %c0_204 = arith.constant 0 : index
    %c0_205 = arith.constant 0 : index
    %296 = vector.load %arg13[%c0_204, %c0_205] : memref<37x64xf32, #tpu.memory_space<vmem>>, vector<37x64xf32>
    %cst_206 = arith.constant dense<0.000000e+00> : vector<8x64xf32>
    %297 = tpu.matmul %2, %296, %cst_206 {dimension_numbers = #tpu.dot_dimension_numbers<[1], [0], [0], [1], [0, 0, 1, 1], [], []>} : vector<8x37xf32>, vector<37x64xf32>, vector<8x64xf32> -> vector<8x64xf32>
    %298 = arith.addf %295, %297 : vector<8x64xf32>
    %c0_207 = arith.constant 0 : index
    %c0_208 = arith.constant 0 : index
    %299 = vector.load %arg16[%c0_207, %c0_208] : memref<8x64xf32, #tpu.memory_space<vmem>>, vector<8x64xf32>
    tpu.vector_store %arg16[%c0_207, %c0_208], %298 {strides = array<i32>} : memref<8x64xf32, #tpu.memory_space<vmem>>, vector<8x64xf32>,
    return
  }
  func.func @transform_0(%arg0: i32) -> (i32, i32) {
    %c0_i32 = arith.constant 0 : i32
    %c0_i32_0 = arith.constant 0 : i32
    return %arg0, %c0_i32 : i32, i32
  }
  func.func @transform_1(%arg0: i32) -> (i32, i32) {
    %c0_i32 = arith.constant 0 : i32
    %c0_i32_0 = arith.constant 0 : i32
    %c0_i32_1 = arith.constant 0 : i32
    return %c0_i32, %c0_i32_0 : i32, i32
  }
  func.func @transform_2(%arg0: i32) -> (i32, i32) {
    %c0_i32 = arith.constant 0 : i32
    %c0_i32_0 = arith.constant 0 : i32
    %c0_i32_1 = arith.constant 0 : i32
    return %c0_i32, %c0_i32_0 : i32, i32
  }
  func.func @transform_3(%arg0: i32) -> (i32, i32) {
    %c0_i32 = arith.constant 0 : i32
    %c0_i32_0 = arith.constant 0 : i32
    %c0_i32_1 = arith.constant 0 : i32
    return %c0_i32, %c0_i32_0 : i32, i32
  }
  func.func @transform_4(%arg0: i32) -> (i32, i32) {
    %c0_i32 = arith.constant 0 : i32
    %c0_i32_0 = arith.constant 0 : i32
    %c0_i32_1 = arith.constant 0 : i32
    return %c0_i32, %c0_i32_0 : i32, i32
  }
  func.func @transform_5(%arg0: i32) -> (i32, i32) {
    %c0_i32 = arith.constant 0 : i32
    %c0_i32_0 = arith.constant 0 : i32
    %c0_i32_1 = arith.constant 0 : i32
    return %c0_i32, %c0_i32_0 : i32, i32
  }
  func.func @transform_6(%arg0: i32) -> (i32, i32) {
    %c0_i32 = arith.constant 0 : i32
    %c0_i32_0 = arith.constant 0 : i32
    %c0_i32_1 = arith.constant 0 : i32
    return %c0_i32, %c0_i32_0 : i32, i32
  }
  func.func @transform_7(%arg0: i32) -> (i32, i32, i32) {
    %c0_i32 = arith.constant 0 : i32
    %c0_i32_0 = arith.constant 0 : i32
    %c0_i32_1 = arith.constant 0 : i32
    %c0_i32_2 = arith.constant 0 : i32
    return %c0_i32, %c0_i32_0, %c0_i32_1 : i32, i32, i32
  }
  func.func @transform_8(%arg0: i32) -> (i32, i32, i32) {
    %c0_i32 = arith.constant 0 : i32
    %c0_i32_0 = arith.constant 0 : i32
    %c0_i32_1 = arith.constant 0 : i32
    %c0_i32_2 = arith.constant 0 : i32
    return %c0_i32, %c0_i32_0, %c0_i32_1 : i32, i32, i32
  }
  func.func @transform_9(%arg0: i32) -> (i32, i32) {
    %c0_i32 = arith.constant 0 : i32
    %c0_i32_0 = arith.constant 0 : i32
    %c0_i32_1 = arith.constant 0 : i32
    return %c0_i32, %c0_i32_0 : i32, i32
  }
  func.func @transform_10(%arg0: i32) -> (i32, i32) {
    %c0_i32 = arith.constant 0 : i32
    %c0_i32_0 = arith.constant 0 : i32
    %c0_i32_1 = arith.constant 0 : i32
    return %c0_i32, %c0_i32_0 : i32, i32
  }
  func.func @transform_11(%arg0: i32) -> (i32, i32) {
    %c0_i32 = arith.constant 0 : i32
    %c0_i32_0 = arith.constant 0 : i32
    %c0_i32_1 = arith.constant 0 : i32
    return %c0_i32, %c0_i32_0 : i32, i32
  }
  func.func @transform_12(%arg0: i32) -> (i32, i32) {
    %c0_i32 = arith.constant 0 : i32
    %c0_i32_0 = arith.constant 0 : i32
    %c0_i32_1 = arith.constant 0 : i32
    return %c0_i32, %c0_i32_0 : i32, i32
  }
  func.func @transform_13(%arg0: i32) -> (i32, i32) {
    %c0_i32 = arith.constant 0 : i32
    %c0_i32_0 = arith.constant 0 : i32
    %c0_i32_1 = arith.constant 0 : i32
    return %c0_i32, %c0_i32_0 : i32, i32
  }
  func.func @transform_14(%arg0: i32) -> (i32, i32) {
    %c0_i32 = arith.constant 0 : i32
    %c0_i32_0 = arith.constant 0 : i32
    %c0_i32_1 = arith.constant 0 : i32
    return %c0_i32, %c0_i32_0 : i32, i32
  }
  func.func @transform_15(%arg0: i32) -> (i32, i32) {
    %c0_i32 = arith.constant 0 : i32
    %c0_i32_0 = arith.constant 0 : i32
    return %arg0, %c0_i32 : i32, i32
  }
}

</mosaic_0001>

<llo_original>
// kernel: _lambda_.1
$region0: #{_lambda_.1}
  #allocation0 [shape = 'u32[]', space=smem, size = 0x4, offset = 0x4, fixed_abs, tag = 'smem constant byte address 0x4 - core index']
  #allocation1 [shape = 'u32[144,128]{1,0:T(1,128)}', space=vmem, size = 0x12000, scoped, tag = 'internal scratch']
  %s0 = inlined_call_operand.hbm [shape: f32[16,64], index: 0, kind: input, shape index: {}]
  %s1 = inlined_call_operand.hbm [shape: f32[64,37], index: 1, kind: input, shape index: {}]
  %s2 = inlined_call_operand.hbm [shape: f32[37,24], index: 2, kind: input, shape index: {}]
  %s3 = inlined_call_operand.hbm [shape: f32[24,17], index: 3, kind: input, shape index: {}]
  %s4 = inlined_call_operand.hbm [shape: f32[64,37], index: 4, kind: input, shape index: {}]
  %s5 = inlined_call_operand.hbm [shape: f32[37,24], index: 5, kind: input, shape index: {}]
  %s6 = inlined_call_operand.hbm [shape: f32[24,17], index: 6, kind: input, shape index: {}]
  %s7 = inlined_call_operand.hbm [shape: f32[17,8,8], index: 7, kind: input, shape index: {}]
  %s8 = inlined_call_operand.hbm [shape: f32[17,8,8], index: 8, kind: input, shape index: {}]
  %s9 = inlined_call_operand.hbm [shape: f32[38,64], index: 9, kind: input, shape index: {}]
  %s10 = inlined_call_operand.hbm [shape: f32[24,38], index: 10, kind: input, shape index: {}]
  %s11 = inlined_call_operand.hbm [shape: f32[17,24], index: 11, kind: input, shape index: {}]
  %s12 = inlined_call_operand.hbm [shape: f32[37,64], index: 12, kind: input, shape index: {}]
  %s13 = inlined_call_operand.hbm [shape: f32[24,38], index: 13, kind: input, shape index: {}]
  %s14 = inlined_call_operand.hbm [shape: f32[17,24], index: 14, kind: input, shape index: {}]
  %s15 = inlined_call_operand.hbm [shape: f32[16,64], index: 15, kind: output, shape index: {}]
  %s16 = sld [smem:[#allocation0]]
  $region153: #{_lambda_.1} parent=0
    _
  %s18 = ssub.s32 1, %s16
  %s19 = scalar_select 0, %s18, %s16
  $region1: #{_lambda_.1} parent=0
    #allocation2 [shape = 'u8[8192]{0}', space=vmem, size = 0x2000, scoped, tag = 'input window, operand 0']
    #allocation3 [shape = 's32[2]{0}', space=sflag, size = 0x8, scoped, tag = 'scoped memory for _lambda_.1']
    #allocation4 [shape = 's32[2]{0}', space=sflag, size = 0x8, scoped, tag = 'scoped memory for _lambda_.1']
    #allocation5 [shape = 'u8[32768]{0}', space=vmem, size = 0x8000, scoped, tag = 'input window, operand 1, single buffered']
    #allocation6 [shape = 's32[1]{0}', space=sflag, size = 0x4, scoped, tag = 'scoped memory for _lambda_.1']
    #allocation7 [shape = 'u8[20480]{0}', space=vmem, size = 0x5000, scoped, tag = 'input window, operand 2, single buffered']
    #allocation8 [shape = 'u8[12288]{0}', space=vmem, size = 0x3000, scoped, tag = 'input window, operand 3, single buffered']
    #allocation9 [shape = 's32[1]{0}', space=sflag, size = 0x4, scoped, tag = 'scoped memory for _lambda_.1']
    #allocation10 [shape = 'u8[32768]{0}', space=vmem, size = 0x8000, scoped, tag = 'input window, operand 4, single buffered']
    #allocation11 [shape = 'u8[20480]{0}', space=vmem, size = 0x5000, scoped, tag = 'input window, operand 5, single buffered']
    #allocation12 [shape = 's32[1]{0}', space=sflag, size = 0x4, scoped, tag = 'scoped memory for _lambda_.1']
    #allocation13 [shape = 'u8[12288]{0}', space=vmem, size = 0x3000, scoped, tag = 'input window, operand 6, single buffered']
    #allocation14 [shape = 'u8[69632]{0}', space=vmem, size = 0x11000, scoped, tag = 'input window, operand 7, single buffered']
    #allocation15 [shape = 's32[1]{0}', space=sflag, size = 0x4, scoped, tag = 'scoped memory for _lambda_.1']
    #allocation16 [shape = 'u8[69632]{0}', space=vmem, size = 0x11000, scoped, tag = 'input window, operand 8, single buffered']
    #allocation17 [shape = 'u8[20480]{0}', space=vmem, size = 0x5000, scoped, tag = 'input window, operand 9, single buffered']
    #allocation18 [shape = 's32[1]{0}', space=sflag, size = 0x4, scoped, tag = 'scoped memory for _lambda_.1']
    #allocation19 [shape = 'u8[12288]{0}', space=vmem, size = 0x3000, scoped, tag = 'input window, operand 10, single buffered']
    #allocation20 [shape = 'u8[12288]{0}', space=vmem, size = 0x3000, scoped, tag = 'input window, operand 11, single buffered']
    #allocation21 [shape = 's32[1]{0}', space=sflag, size = 0x4, scoped, tag = 'scoped memory for _lambda_.1']
    #allocation22 [shape = 'u8[20480]{0}', space=vmem, size = 0x5000, scoped, tag = 'input window, operand 12, single buffered']
    #allocation23 [shape = 'u8[12288]{0}', space=vmem, size = 0x3000, scoped, tag = 'input window, operand 13, single buffered']
    #allocation24 [shape = 's32[1]{0}', space=sflag, size = 0x4, scoped, tag = 'scoped memory for _lambda_.1']
    #allocation25 [shape = 'u8[12288]{0}', space=vmem, size = 0x3000, scoped, tag = 'input window, operand 14, single buffered']
    #allocation26 [shape = 'u8[8192]{0}', space=vmem, size = 0x2000, scoped, tag = 'output window, operand 0']
    %20 = vsyncpa [#allocation3], 0
    %s21 = scalar_lea.sflag [#allocation3], 1
    %22 = vsyncpa %s21, 0
    %23 = vsyncpa [#allocation6], 0
    %24 = vsyncpa [#allocation9], 0
    %25 = vsyncpa [#allocation12], 0
    %26 = vsyncpa [#allocation15], 0
    %27 = vsyncpa [#allocation18], 0
    %28 = vsyncpa [#allocation21], 0
    %29 = vsyncpa [#allocation24], 0
    %30 = vsyncpa [#allocation4], 0
    %s31 = scalar_lea.sflag [#allocation4], 1
    %32 = vsyncpa %s31, 0
    loop: start=0, step=1, limit=4
    $region2: #{_lambda_.1} parent=1 // loop_pre_header
      _
    $region3: #{_lambda_.1} parent=1 // loop_header
      %s34 = sphi 0, %s38
      %p35 = scmp.ge.s32.totalorder %s34, 4
      %s44 = sphi 0, %s46
      %s47 = sphi 0, %s44
      %s48 = sphi 0, %s47
      %s64 = sphi 0, %s48
      %s68 = sphi 0, %s68
      %s70 = sphi 0, %s68
      %s71 = sphi 0, %s70
      %s85 = sphi 0, %s71
      %s89 = sphi 0, %s89
      %s91 = sphi 0, %s89
      %s92 = sphi 0, %s91
      %s106 = sphi 0, %s92
      %s110 = sphi 0, %s110
      %s112 = sphi 0, %s110
      %s113 = sphi 0, %s112
      %s127 = sphi 0, %s113
      %s131 = sphi 0, %s131
      %s133 = sphi 0, %s131
      %s134 = sphi 0, %s133
      %s148 = sphi 0, %s134
      %s152 = sphi 0, %s152
      %s154 = sphi 0, %s152
      %s155 = sphi 0, %s154
      %s169 = sphi 0, %s155
      %s173 = sphi 0, %s173
      %s175 = sphi 0, %s173
      %s176 = sphi 0, %s175
      %s190 = sphi 0, %s176
      %s194 = sphi 0, %s194
      %s196 = sphi 0, %s194
      %s197 = sphi 0, %s196
      %s211 = sphi 0, %s197
      %s215 = sphi 0, %s215
      %s217 = sphi 0, %s215
      %s218 = sphi 0, %s217
      %s232 = sphi 0, %s218
      %s236 = sphi 0, %s236
      %s238 = sphi 0, %s236
      %s239 = sphi 0, %s238
      %s253 = sphi 0, %s239
      %s257 = sphi 0, %s257
      %s259 = sphi 0, %s257
      %s260 = sphi 0, %s259
      %s274 = sphi 0, %s260
      %s278 = sphi 0, %s278
      %s280 = sphi 0, %s278
      %s281 = sphi 0, %s280
      %s295 = sphi 0, %s281
      %s299 = sphi 0, %s299
      %s301 = sphi 0, %s299
      %s302 = sphi 0, %s301
      %s316 = sphi 0, %s302
      %s320 = sphi 0, %s320
      %s322 = sphi 0, %s320
      %s323 = sphi 0, %s322
      %s337 = sphi 0, %s323
      %s341 = sphi 0, %s341
      %s343 = sphi 0, %s341
      %s344 = sphi 0, %s343
      %s358 = sphi 0, %s344
      %s364 = sphi 0, %s366
      %s367 = sphi 0, %s364
      %s368 = sphi 0, %s367
      %s384 = sphi 0, %s368
    $region4: #{_lambda_.1} parent=1 // loop_header_branch
      %37 = sbr.rel (%p35) target = $region8
    $region5: #{_lambda_.1} parent=1 // loop_body
      %s39 = ssub.s32 %s34, 1
      %s40 = ssub.s32 %s34, 2
      %s41 = sadd.s32 %s34, 1
      %s42 = ssub.s32 %s34, %s41
      %p43 = scmp.eq.s32.totalorder %s42, 0
      %s45 = sadd.s32 %s44, 1
      %s46 = scalar_select %p43, %s44, %s45
      %p49 = pneg %p43
      %p50 = scmp.eq.s32.totalorder %s34, 1
      %p51 = por %p49, %p50
      %p52 = scmp.ne.s32.totalorder %s44, %s47
      %p53 = scmp.eq.s32.totalorder %s34, 0
      %p54 = por %p52, %p53
      %p55 = scmp.ne.s32.totalorder %s44, %s47
      %p56 = scmp.eq.s32.totalorder %s39, 1
      %p57 = por %p55, %p56
      %p58 = scmp.ne.s32.totalorder %s47, %s48
      %p59 = scmp.eq.s32.totalorder %s39, 0
      %p60 = por %p58, %p59
      %p61 = scmp.ne.s32.totalorder %s47, %s48
      %p62 = scmp.eq.s32.totalorder %s40, 1
      %p63 = por %p61, %p62
      %p65 = scmp.ne.s32.totalorder %s48, %s64
      %p66 = scmp.eq.s32.totalorder %s40, 0
      %p67 = por %p65, %p66
      %s69 = sadd.s32 %s68, 1
      %p72 = scmp.eq.s32.totalorder %s34, 1
      %p73 = scmp.ne.s32.totalorder %s68, %s70
      %p74 = scmp.eq.s32.totalorder %s34, 0
      %p75 = por %p73, %p74
      %p76 = scmp.ne.s32.totalorder %s68, %s70
      %p77 = scmp.eq.s32.totalorder %s39, 1
      %p78 = por %p76, %p77
      %p79 = scmp.ne.s32.totalorder %s70, %s71
      %p80 = scmp.eq.s32.totalorder %s39, 0
      %p81 = por %p79, %p80
      %p82 = scmp.ne.s32.totalorder %s70, %s71
      %p83 = scmp.eq.s32.totalorder %s40, 1
      %p84 = por %p82, %p83
      %p86 = scmp.ne.s32.totalorder %s71, %s85
      %p87 = scmp.eq.s32.totalorder %s40, 0
      %p88 = por %p86, %p87
      %s90 = sadd.s32 %s89, 1
      %p93 = scmp.eq.s32.totalorder %s34, 1
      %p94 = scmp.ne.s32.totalorder %s89, %s91
      %p95 = scmp.eq.s32.totalorder %s34, 0
      %p96 = por %p94, %p95
      %p97 = scmp.ne.s32.totalorder %s89, %s91
      %p98 = scmp.eq.s32.totalorder %s39, 1
      %p99 = por %p97, %p98
      %p100 = scmp.ne.s32.totalorder %s91, %s92
      %p101 = scmp.eq.s32.totalorder %s39, 0
      %p102 = por %p100, %p101
      %p103 = scmp.ne.s32.totalorder %s91, %s92
      %p104 = scmp.eq.s32.totalorder %s40, 1
      %p105 = por %p103, %p104
      %p107 = scmp.ne.s32.totalorder %s92, %s106
      %p108 = scmp.eq.s32.totalorder %s40, 0
      %p109 = por %p107, %p108
      %s111 = sadd.s32 %s110, 1
      %p114 = scmp.eq.s32.totalorder %s34, 1
      %p115 = scmp.ne.s32.totalorder %s110, %s112
      %p116 = scmp.eq.s32.totalorder %s34, 0
      %p117 = por %p115, %p116
      %p118 = scmp.ne.s32.totalorder %s110, %s112
      %p119 = scmp.eq.s32.totalorder %s39, 1
      %p120 = por %p118, %p119
      %p121 = scmp.ne.s32.totalorder %s112, %s113
      %p122 = scmp.eq.s32.totalorder %s39, 0
      %p123 = por %p121, %p122
      %p124 = scmp.ne.s32.totalorder %s112, %s113
      %p125 = scmp.eq.s32.totalorder %s40, 1
      %p126 = por %p124, %p125
      %p128 = scmp.ne.s32.totalorder %s113, %s127
      %p129 = scmp.eq.s32.totalorder %s40, 0
      %p130 = por %p128, %p129
      %s132 = sadd.s32 %s131, 1
      %p135 = scmp.eq.s32.totalorder %s34, 1
      %p136 = scmp.ne.s32.totalorder %s131, %s133
      %p137 = scmp.eq.s32.totalorder %s34, 0
      %p138 = por %p136, %p137
      %p139 = scmp.ne.s32.totalorder %s131, %s133
      %p140 = scmp.eq.s32.totalorder %s39, 1
      %p141 = por %p139, %p140
      %p142 = scmp.ne.s32.totalorder %s133, %s134
      %p143 = scmp.eq.s32.totalorder %s39, 0
      %p144 = por %p142, %p143
      %p145 = scmp.ne.s32.totalorder %s133, %s134
      %p146 = scmp.eq.s32.totalorder %s40, 1
      %p147 = por %p145, %p146
      %p149 = scmp.ne.s32.totalorder %s134, %s148
      %p150 = scmp.eq.s32.totalorder %s40, 0
      %p151 = por %p149, %p150
      %s153 = sadd.s32 %s152, 1
      %p156 = scmp.eq.s32.totalorder %s34, 1
      %p157 = scmp.ne.s32.totalorder %s152, %s154
      %p158 = scmp.eq.s32.totalorder %s34, 0
      %p159 = por %p157, %p158
      %p160 = scmp.ne.s32.totalorder %s152, %s154
      %p161 = scmp.eq.s32.totalorder %s39, 1
      %p162 = por %p160, %p161
      %p163 = scmp.ne.s32.totalorder %s154, %s155
      %p164 = scmp.eq.s32.totalorder %s39, 0
      %p165 = por %p163, %p164
      %p166 = scmp.ne.s32.totalorder %s154, %s155
      %p167 = scmp.eq.s32.totalorder %s40, 1
      %p168 = por %p166, %p167
      %p170 = scmp.ne.s32.totalorder %s155, %s169
      %p171 = scmp.eq.s32.totalorder %s40, 0
      %p172 = por %p170, %p171
      %s174 = sadd.s32 %s173, 1
      %p177 = scmp.eq.s32.totalorder %s34, 1
      %p178 = scmp.ne.s32.totalorder %s173, %s175
      %p179 = scmp.eq.s32.totalorder %s34, 0
      %p180 = por %p178, %p179
      %p181 = scmp.ne.s32.totalorder %s173, %s175
      %p182 = scmp.eq.s32.totalorder %s39, 1
      %p183 = por %p181, %p182
      %p184 = scmp.ne.s32.totalorder %s175, %s176
      %p185 = scmp.eq.s32.totalorder %s39, 0
      %p186 = por %p184, %p185
      %p187 = scmp.ne.s32.totalorder %s175, %s176
      %p188 = scmp.eq.s32.totalorder %s40, 1
      %p189 = por %p187, %p188
      %p191 = scmp.ne.s32.totalorder %s176, %s190
      %p192 = scmp.eq.s32.totalorder %s40, 0
      %p193 = por %p191, %p192
      %s195 = sadd.s32 %s194, 1
      %p198 = scmp.eq.s32.totalorder %s34, 1
      %p199 = scmp.ne.s32.totalorder %s194, %s196
      %p200 = scmp.eq.s32.totalorder %s34, 0
      %p201 = por %p199, %p200
      %p202 = scmp.ne.s32.totalorder %s194, %s196
      %p203 = scmp.eq.s32.totalorder %s39, 1
      %p204 = por %p202, %p203
      %p205 = scmp.ne.s32.totalorder %s196, %s197
      %p206 = scmp.eq.s32.totalorder %s39, 0
      %p207 = por %p205, %p206
      %p208 = scmp.ne.s32.totalorder %s196, %s197
      %p209 = scmp.eq.s32.totalorder %s40, 1
      %p210 = por %p208, %p209
      %p212 = scmp.ne.s32.totalorder %s197, %s211
      %p213 = scmp.eq.s32.totalorder %s40, 0
      %p214 = por %p212, %p213
      %s216 = sadd.s32 %s215, 1
      %p219 = scmp.eq.s32.totalorder %s34, 1
      %p220 = scmp.ne.s32.totalorder %s215, %s217
      %p221 = scmp.eq.s32.totalorder %s34, 0
      %p222 = por %p220, %p221
      %p223 = scmp.ne.s32.totalorder %s215, %s217
      %p224 = scmp.eq.s32.totalorder %s39, 1
      %p225 = por %p223, %p224
      %p226 = scmp.ne.s32.totalorder %s217, %s218
      %p227 = scmp.eq.s32.totalorder %s39, 0
      %p228 = por %p226, %p227
      %p229 = scmp.ne.s32.totalorder %s217, %s218
      %p230 = scmp.eq.s32.totalorder %s40, 1
      %p231 = por %p229, %p230
      %p233 = scmp.ne.s32.totalorder %s218, %s232
      %p234 = scmp.eq.s32.totalorder %s40, 0
      %p235 = por %p233, %p234
      %s237 = sadd.s32 %s236, 1
      %p240 = scmp.eq.s32.totalorder %s34, 1
      %p241 = scmp.ne.s32.totalorder %s236, %s238
      %p242 = scmp.eq.s32.totalorder %s34, 0
      %p243 = por %p241, %p242
      %p244 = scmp.ne.s32.totalorder %s236, %s238
      %p245 = scmp.eq.s32.totalorder %s39, 1
      %p246 = por %p244, %p245
      %p247 = scmp.ne.s32.totalorder %s238, %s239
      %p248 = scmp.eq.s32.totalorder %s39, 0
      %p249 = por %p247, %p248
      %p250 = scmp.ne.s32.totalorder %s238, %s239
      %p251 = scmp.eq.s32.totalorder %s40, 1
      %p252 = por %p250, %p251
      %p254 = scmp.ne.s32.totalorder %s239, %s253
      %p255 = scmp.eq.s32.totalorder %s40, 0
      %p256 = por %p254, %p255
      %s258 = sadd.s32 %s257, 1
      %p261 = scmp.eq.s32.totalorder %s34, 1
      %p262 = scmp.ne.s32.totalorder %s257, %s259
      %p263 = scmp.eq.s32.totalorder %s34, 0
      %p264 = por %p262, %p263
      %p265 = scmp.ne.s32.totalorder %s257, %s259
      %p266 = scmp.eq.s32.totalorder %s39, 1
      %p267 = por %p265, %p266
      %p268 = scmp.ne.s32.totalorder %s259, %s260
      %p269 = scmp.eq.s32.totalorder %s39, 0
      %p270 = por %p268, %p269
      %p271 = scmp.ne.s32.totalorder %s259, %s260
      %p272 = scmp.eq.s32.totalorder %s40, 1
      %p273 = por %p271, %p272
      %p275 = scmp.ne.s32.totalorder %s260, %s274
      %p276 = scmp.eq.s32.totalorder %s40, 0
      %p277 = por %p275, %p276
      %s279 = sadd.s32 %s278, 1
      %p282 = scmp.eq.s32.totalorder %s34, 1
      %p283 = scmp.ne.s32.totalorder %s278, %s280
      %p284 = scmp.eq.s32.totalorder %s34, 0
      %p285 = por %p283, %p284
      %p286 = scmp.ne.s32.totalorder %s278, %s280
      %p287 = scmp.eq.s32.totalorder %s39, 1
      %p288 = por %p286, %p287
      %p289 = scmp.ne.s32.totalorder %s280, %s281
      %p290 = scmp.eq.s32.totalorder %s39, 0
      %p291 = por %p289, %p290
      %p292 = scmp.ne.s32.totalorder %s280, %s281
      %p293 = scmp.eq.s32.totalorder %s40, 1
      %p294 = por %p292, %p293
      %p296 = scmp.ne.s32.totalorder %s281, %s295
      %p297 = scmp.eq.s32.totalorder %s40, 0
      %p298 = por %p296, %p297
      %s300 = sadd.s32 %s299, 1
      %p303 = scmp.eq.s32.totalorder %s34, 1
      %p304 = scmp.ne.s32.totalorder %s299, %s301
      %p305 = scmp.eq.s32.totalorder %s34, 0
      %p306 = por %p304, %p305
      %p307 = scmp.ne.s32.totalorder %s299, %s301
      %p308 = scmp.eq.s32.totalorder %s39, 1
      %p309 = por %p307, %p308
      %p310 = scmp.ne.s32.totalorder %s301, %s302
      %p311 = scmp.eq.s32.totalorder %s39, 0
      %p312 = por %p310, %p311
      %p313 = scmp.ne.s32.totalorder %s301, %s302
      %p314 = scmp.eq.s32.totalorder %s40, 1
      %p315 = por %p313, %p314
      %p317 = scmp.ne.s32.totalorder %s302, %s316
      %p318 = scmp.eq.s32.totalorder %s40, 0
      %p319 = por %p317, %p318
      %s321 = sadd.s32 %s320, 1
      %p324 = scmp.eq.s32.totalorder %s34, 1
      %p325 = scmp.ne.s32.totalorder %s320, %s322
      %p326 = scmp.eq.s32.totalorder %s34, 0
      %p327 = por %p325, %p326
      %p328 = scmp.ne.s32.totalorder %s320, %s322
      %p329 = scmp.eq.s32.totalorder %s39, 1
      %p330 = por %p328, %p329
      %p331 = scmp.ne.s32.totalorder %s322, %s323
      %p332 = scmp.eq.s32.totalorder %s39, 0
      %p333 = por %p331, %p332
      %p334 = scmp.ne.s32.totalorder %s322, %s323
      %p335 = scmp.eq.s32.totalorder %s40, 1
      %p336 = por %p334, %p335
      %p338 = scmp.ne.s32.totalorder %s323, %s337
      %p339 = scmp.eq.s32.totalorder %s40, 0
      %p340 = por %p338, %p339
      %s342 = sadd.s32 %s341, 1
      %p345 = scmp.eq.s32.totalorder %s34, 1
      %p346 = scmp.ne.s32.totalorder %s341, %s343
      %p347 = scmp.eq.s32.totalorder %s34, 0
      %p348 = por %p346, %p347
      %p349 = scmp.ne.s32.totalorder %s341, %s343
      %p350 = scmp.eq.s32.totalorder %s39, 1
      %p351 = por %p349, %p350
      %p352 = scmp.ne.s32.totalorder %s343, %s344
      %p353 = scmp.eq.s32.totalorder %s39, 0
      %p354 = por %p352, %p353
      %p355 = scmp.ne.s32.totalorder %s343, %s344
      %p356 = scmp.eq.s32.totalorder %s40, 1
      %p357 = por %p355, %p356
      %p359 = scmp.ne.s32.totalorder %s344, %s358
      %p360 = scmp.eq.s32.totalorder %s40, 0
      %p361 = por %p359, %p360
      %s362 = ssub.s32 %s34, %s41
      %p363 = scmp.eq.s32.totalorder %s362, 0
      %s365 = sadd.s32 %s364, 1
      %s366 = scalar_select %p363, %s364, %s365
      %p369 = pneg %p363
      %p370 = scmp.eq.s32.totalorder %s34, 1
      %p371 = por %p369, %p370
      %p372 = scmp.ne.s32.totalorder %s364, %s367
      %p373 = scmp.eq.s32.totalorder %s34, 0
      %p374 = por %p372, %p373
      %p375 = scmp.ne.s32.totalorder %s364, %s367
      %p376 = scmp.eq.s32.totalorder %s39, 1
      %p377 = por %p375, %p376
      %p378 = scmp.ne.s32.totalorder %s367, %s368
      %p379 = scmp.eq.s32.totalorder %s39, 0
      %p380 = por %p378, %p379
      %p381 = scmp.ne.s32.totalorder %s367, %s368
      %p382 = scmp.eq.s32.totalorder %s40, 1
      %p383 = por %p381, %p382
      %p385 = scmp.ne.s32.totalorder %s368, %s384
      %p386 = scmp.eq.s32.totalorder %s40, 0
      %p387 = por %p385, %p386
      %p388 = scmp.le.s32.totalorder 1, %s34
      %p389 = scmp.lt.s32.totalorder %s34, 3
      %p390 = pnand %p388, %p389
      %p391 = pneg %p390
      // Predicated region
      $region9: #{_lambda_.1} parent=5 // pred_check
        _
      $region10: #{_lambda_.1} parent=5 // pred_check_branch
        %393 = sbr.rel (%p390) target = $region12
      $region11: #{_lambda_.1} parent=5 // pred_region
        %s394 = ssub.s32 %s34, 1
        // Predicated region
        $region13: #{_lambda_.1} parent=11 // pred_check
          %p395 = pneg %p81
        $region14: #{_lambda_.1} parent=11 // pred_check_branch
          %397 = sbr.rel (%p395) target = $region16
        $region15: #{_lambda_.1} parent=11 // pred_region
          %s399 = ssub.s32 1024, 1024
          %400 = vsyncadd [#allocation6], %s399
          %s401 = sshll.u32 [#allocation5], 4
          %s402 = int_to_ptr.vmem [resolvable:$true] %s401
          %407 = dma.hbm_to_vmem [thread:$0]  %s1, 1024, %s402, [#allocation6], 128, 128, 8
        $region16: #{_lambda_.1} parent=11 // pred_fallthru
          _
        // Predicated region
        $region17: #{_lambda_.1} parent=11 // pred_check
          %p408 = pneg %p102
        $region18: #{_lambda_.1} parent=11 // pred_check_branch
          %410 = sbr.rel (%p408) target = $region20
        $region19: #{_lambda_.1} parent=11 // pred_region
          %s412 = ssub.s32 640, 640
          %413 = vsyncadd [#allocation6], %s412
          %s414 = sshll.u32 [#allocation7], 4
          %s415 = int_to_ptr.vmem [resolvable:$true] %s414
          %420 = dma.hbm_to_vmem [thread:$0]  %s2, 640, %s415, [#allocation6], 128, 128, 8
        $region20: #{_lambda_.1} parent=11 // pred_fallthru
          _
        // Predicated region
        $region21: #{_lambda_.1} parent=11 // pred_check
          %p421 = pneg %p123
        $region22: #{_lambda_.1} parent=11 // pred_check_branch
          %423 = sbr.rel (%p421) target = $region24
        $region23: #{_lambda_.1} parent=11 // pred_region
          %s425 = ssub.s32 384, 384
          %426 = vsyncadd [#allocation9], %s425
          %s427 = sshll.u32 [#allocation8], 4
          %s428 = int_to_ptr.vmem [resolvable:$true] %s427
          %433 = dma.hbm_to_vmem [thread:$0]  %s3, 384, %s428, [#allocation9], 128, 128, 8
        $region24: #{_lambda_.1} parent=11 // pred_fallthru
          _
        // Predicated region
        $region25: #{_lambda_.1} parent=11 // pred_check
          %p434 = pneg %p144
        $region26: #{_lambda_.1} parent=11 // pred_check_branch
          %436 = sbr.rel (%p434) target = $region28
        $region27: #{_lambda_.1} parent=11 // pred_region
          %s438 = ssub.s32 1024, 1024
          %439 = vsyncadd [#allocation9], %s438
          %s440 = sshll.u32 [#allocation10], 4
          %s441 = int_to_ptr.vmem [resolvable:$true] %s440
          %446 = dma.hbm_to_vmem [thread:$0]  %s4, 1024, %s441, [#allocation9], 128, 128, 8
        $region28: #{_lambda_.1} parent=11 // pred_fallthru
          _
        // Predicated region
        $region29: #{_lambda_.1} parent=11 // pred_check
          %p447 = pneg %p165
        $region30: #{_lambda_.1} parent=11 // pred_check_branch
          %449 = sbr.rel (%p447) target = $region32
        $region31: #{_lambda_.1} parent=11 // pred_region
          %s451 = ssub.s32 640, 640
          %452 = vsyncadd [#allocation12], %s451
          %s453 = sshll.u32 [#allocation11], 4
          %s454 = int_to_ptr.vmem [resolvable:$true] %s453
          %459 = dma.hbm_to_vmem [thread:$0]  %s5, 640, %s454, [#allocation12], 128, 128, 8
        $region32: #{_lambda_.1} parent=11 // pred_fallthru
          _
        // Predicated region
        $region33: #{_lambda_.1} parent=11 // pred_check
          %p460 = pneg %p186
        $region34: #{_lambda_.1} parent=11 // pred_check_branch
          %462 = sbr.rel (%p460) target = $region36
        $region35: #{_lambda_.1} parent=11 // pred_region
          %s464 = ssub.s32 384, 384
          %465 = vsyncadd [#allocation12], %s464
          %s466 = sshll.u32 [#allocation13], 4
          %s467 = int_to_ptr.vmem [resolvable:$true] %s466
          %472 = dma.hbm_to_vmem [thread:$0]  %s6, 384, %s467, [#allocation12], 128, 128, 8
        $region36: #{_lambda_.1} parent=11 // pred_fallthru
          _
        // Predicated region
        $region37: #{_lambda_.1} parent=11 // pred_check
          %p473 = pneg %p207
        $region38: #{_lambda_.1} parent=11 // pred_check_branch
          %475 = sbr.rel (%p473) target = $region40
        $region39: #{_lambda_.1} parent=11 // pred_region
          %s477 = ssub.s32 2176, 2176
          %478 = vsyncadd [#allocation15], %s477
          %s479 = sshll.u32 [#allocation14], 4
          %s480 = int_to_ptr.vmem [resolvable:$true] %s479
          %485 = dma.hbm_to_vmem [thread:$0]  %s7, 2176, %s480, [#allocation15], 128, 128, 8
        $region40: #{_lambda_.1} parent=11 // pred_fallthru
          _
        // Predicated region
        $region41: #{_lambda_.1} parent=11 // pred_check
          %p486 = pneg %p228
        $region42: #{_lambda_.1} parent=11 // pred_check_branch
          %488 = sbr.rel (%p486) target = $region44
        $region43: #{_lambda_.1} parent=11 // pred_region
          %s490 = ssub.s32 2176, 2176
          %491 = vsyncadd [#allocation15], %s490
          %s492 = sshll.u32 [#allocation16], 4
          %s493 = int_to_ptr.vmem [resolvable:$true] %s492
          %498 = dma.hbm_to_vmem [thread:$0]  %s8, 2176, %s493, [#allocation15], 128, 128, 8
        $region44: #{_lambda_.1} parent=11 // pred_fallthru
          _
        // Predicated region
        $region45: #{_lambda_.1} parent=11 // pred_check
          %p499 = pneg %p249
        $region46: #{_lambda_.1} parent=11 // pred_check_branch
          %501 = sbr.rel (%p499) target = $region48
        $region47: #{_lambda_.1} parent=11 // pred_region
          %s503 = ssub.s32 640, 640
          %504 = vsyncadd [#allocation18], %s503
          %s505 = sshll.u32 [#allocation17], 4
          %s506 = int_to_ptr.vmem [resolvable:$true] %s505
          %511 = dma.hbm_to_vmem [thread:$0]  %s9, 640, %s506, [#allocation18], 128, 128, 8
        $region48: #{_lambda_.1} parent=11 // pred_fallthru
          _
        // Predicated region
        $region49: #{_lambda_.1} parent=11 // pred_check
          %p512 = pneg %p270
        $region50: #{_lambda_.1} parent=11 // pred_check_branch
          %514 = sbr.rel (%p512) target = $region52
        $region51: #{_lambda_.1} parent=11 // pred_region
          %s516 = ssub.s32 384, 384
          %517 = vsyncadd [#allocation18], %s516
          %s518 = sshll.u32 [#allocation19], 4
          %s519 = int_to_ptr.vmem [resolvable:$true] %s518
          %524 = dma.hbm_to_vmem [thread:$0]  %s10, 384, %s519, [#allocation18], 128, 128, 8
        $region52: #{_lambda_.1} parent=11 // pred_fallthru
          _
        // Predicated region
        $region53: #{_lambda_.1} parent=11 // pred_check
          %p525 = pneg %p291
        $region54: #{_lambda_.1} parent=11 // pred_check_branch
          %527 = sbr.rel (%p525) target = $region56
        $region55: #{_lambda_.1} parent=11 // pred_region
          %s529 = ssub.s32 384, 384
          %530 = vsyncadd [#allocation21], %s529
          %s531 = sshll.u32 [#allocation20], 4
          %s532 = int_to_ptr.vmem [resolvable:$true] %s531
          %537 = dma.hbm_to_vmem [thread:$0]  %s11, 384, %s532, [#allocation21], 128, 128, 8
        $region56: #{_lambda_.1} parent=11 // pred_fallthru
          _
        // Predicated region
        $region57: #{_lambda_.1} parent=11 // pred_check
          %p538 = pneg %p312
        $region58: #{_lambda_.1} parent=11 // pred_check_branch
          %540 = sbr.rel (%p538) target = $region60
        $region59: #{_lambda_.1} parent=11 // pred_region
          %s542 = ssub.s32 640, 640
          %543 = vsyncadd [#allocation21], %s542
          %s544 = sshll.u32 [#allocation22], 4
          %s545 = int_to_ptr.vmem [resolvable:$true] %s544
          %550 = dma.hbm_to_vmem [thread:$0]  %s12, 640, %s545, [#allocation21], 128, 128, 8
        $region60: #{_lambda_.1} parent=11 // pred_fallthru
          _
        // Predicated region
        $region61: #{_lambda_.1} parent=11 // pred_check
          %p551 = pneg %p333
        $region62: #{_lambda_.1} parent=11 // pred_check_branch
          %553 = sbr.rel (%p551) target = $region64
        $region63: #{_lambda_.1} parent=11 // pred_region
          %s555 = ssub.s32 384, 384
          %556 = vsyncadd [#allocation24], %s555
          %s557 = sshll.u32 [#allocation23], 4
          %s558 = int_to_ptr.vmem [resolvable:$true] %s557
          %563 = dma.hbm_to_vmem [thread:$0]  %s13, 384, %s558, [#allocation24], 128, 128, 8
        $region64: #{_lambda_.1} parent=11 // pred_fallthru
          _
        // Predicated region
        $region65: #{_lambda_.1} parent=11 // pred_check
          %p564 = pneg %p354
        $region66: #{_lambda_.1} parent=11 // pred_check_branch
          %566 = sbr.rel (%p564) target = $region68
        $region67: #{_lambda_.1} parent=11 // pred_region
          %s568 = ssub.s32 384, 384
          %569 = vsyncadd [#allocation24], %s568
          %s570 = sshll.u32 [#allocation25], 4
          %s571 = int_to_ptr.vmem [resolvable:$true] %s570
          %576 = dma.hbm_to_vmem [thread:$0]  %s14, 384, %s571, [#allocation24], 128, 128, 8
        $region68: #{_lambda_.1} parent=11 // pred_fallthru
          _
      $region12: #{_lambda_.1} parent=5 // pred_fallthru
        _
      %p577 = scmp.lt.s32.totalorder %s34, 2
      // Predicated region
      $region69: #{_lambda_.1} parent=5 // pred_check
        %p578 = pneg %p577
      $region70: #{_lambda_.1} parent=5 // pred_check_branch
        %580 = sbr.rel (%p578) target = $region72
      $region71: #{_lambda_.1} parent=5 // pred_region
        // Predicated region
        $region73: #{_lambda_.1} parent=71 // pred_check
          %p581 = pneg %p54
        $region74: #{_lambda_.1} parent=71 // pred_check_branch
          %583 = sbr.rel (%p581) target = $region76
        $region75: #{_lambda_.1} parent=71 // pred_region
          %s584 = sand.u32 %s44, 1
          %s585 = scalar_lea.sflag [#allocation3], %s584
          %s586 = sand.u32 %s44, 1
          %s587 = smul.addr %s586, 8
          %s588 = scalar_lea.vmem [#allocation2], %s587
          %s590 = ssub.s32 128, 128
          %591 = vsyncadd %s585, %s590
          %s592 = smul.addr %s34, 128
          %s593 = scalar_lea.hbm %s0, %s592
          %s595 = sshll.u32 %s588, 4
          %s596 = int_to_ptr.vmem [resolvable:$true] %s595
          %598 = dma.hbm_to_vmem [thread:$0]  %s593, 128, %s596, %s585
        $region76: #{_lambda_.1} parent=71 // pred_fallthru
          _
      $region72: #{_lambda_.1} parent=5 // pred_fallthru
        _
      %p599 = scmp.le.s32.totalorder 1, %s34
      %p600 = scmp.lt.s32.totalorder %s34, 3
      %p601 = pnand %p599, %p600
      %p602 = pneg %p601
      // Predicated region
      $region77: #{_lambda_.1} parent=5 // pred_check
        _
      $region78: #{_lambda_.1} parent=5 // pred_check_branch
        %604 = sbr.rel (%p601) target = $region80
      $region79: #{_lambda_.1} parent=5 // pred_region
        %s605 = ssub.s32 %s34, 1
        %s606 = sand.u32 %s47, 1
        %s607 = scalar_lea.sflag [#allocation3], %s606
        %s608 = sand.u32 %s47, 1
        %s609 = smul.addr %s608, 8
        %s610 = scalar_lea.vmem [#allocation2], %s609
        // Predicated region
        $region81: #{_lambda_.1} parent=79 // pred_check
          %p611 = pneg %p60
        $region82: #{_lambda_.1} parent=79 // pred_check_branch
          %613 = sbr.rel (%p611) target = $region84
        $region83: #{_lambda_.1} parent=79 // pred_region
          %614 = dma.done %s607, 128
        $region84: #{_lambda_.1} parent=79 // pred_fallthru
          _
        // Predicated region
        $region85: #{_lambda_.1} parent=79 // pred_check
          %p615 = pneg %p81
        $region86: #{_lambda_.1} parent=79 // pred_check_branch
          %617 = sbr.rel (%p615) target = $region88
        $region87: #{_lambda_.1} parent=79 // pred_region
          %618 = dma.done [#allocation6], 1024
        $region88: #{_lambda_.1} parent=79 // pred_fallthru
          _
        // Predicated region
        $region89: #{_lambda_.1} parent=79 // pred_check
          %p619 = pneg %p102
        $region90: #{_lambda_.1} parent=79 // pred_check_branch
          %621 = sbr.rel (%p619) target = $region92
        $region91: #{_lambda_.1} parent=79 // pred_region
          %622 = dma.done [#allocation6], 640
        $region92: #{_lambda_.1} parent=79 // pred_fallthru
          _
        // Predicated region
        $region93: #{_lambda_.1} parent=79 // pred_check
          %p623 = pneg %p123
        $region94: #{_lambda_.1} parent=79 // pred_check_branch
          %625 = sbr.rel (%p623) target = $region96
        $region95: #{_lambda_.1} parent=79 // pred_region
          %626 = dma.done [#allocation9], 384
        $region96: #{_lambda_.1} parent=79 // pred_fallthru
          _
        // Predicated region
        $region97: #{_lambda_.1} parent=79 // pred_check
          %p627 = pneg %p144
        $region98: #{_lambda_.1} parent=79 // pred_check_branch
          %629 = sbr.rel (%p627) target = $region100
        $region99: #{_lambda_.1} parent=79 // pred_region
          %630 = dma.done [#allocation9], 1024
        $region100: #{_lambda_.1} parent=79 // pred_fallthru
          _
        // Predicated region
        $region101: #{_lambda_.1} parent=79 // pred_check
          %p631 = pneg %p165
        $region102: #{_lambda_.1} parent=79 // pred_check_branch
          %633 = sbr.rel (%p631) target = $region104
        $region103: #{_lambda_.1} parent=79 // pred_region
          %634 = dma.done [#allocation12], 640
        $region104: #{_lambda_.1} parent=79 // pred_fallthru
          _
        // Predicated region
        $region105: #{_lambda_.1} parent=79 // pred_check
          %p635 = pneg %p186
        $region106: #{_lambda_.1} parent=79 // pred_check_branch
          %637 = sbr.rel (%p635) target = $region108
        $region107: #{_lambda_.1} parent=79 // pred_region
          %638 = dma.done [#allocation12], 384
        $region108: #{_lambda_.1} parent=79 // pred_fallthru
          _
        // Predicated region
        $region109: #{_lambda_.1} parent=79 // pred_check
          %p639 = pneg %p207
        $region110: #{_lambda_.1} parent=79 // pred_check_branch
          %641 = sbr.rel (%p639) target = $region112
        $region111: #{_lambda_.1} parent=79 // pred_region
          %642 = dma.done [#allocation15], 2176
        $region112: #{_lambda_.1} parent=79 // pred_fallthru
          _
        // Predicated region
        $region113: #{_lambda_.1} parent=79 // pred_check
          %p643 = pneg %p228
        $region114: #{_lambda_.1} parent=79 // pred_check_branch
          %645 = sbr.rel (%p643) target = $region116
        $region115: #{_lambda_.1} parent=79 // pred_region
          %646 = dma.done [#allocation15], 2176
        $region116: #{_lambda_.1} parent=79 // pred_fallthru
          _
        // Predicated region
        $region117: #{_lambda_.1} parent=79 // pred_check
          %p647 = pneg %p249
        $region118: #{_lambda_.1} parent=79 // pred_check_branch
          %649 = sbr.rel (%p647) target = $region120
        $region119: #{_lambda_.1} parent=79 // pred_region
          %650 = dma.done [#allocation18], 640
        $region120: #{_lambda_.1} parent=79 // pred_fallthru
          _
        // Predicated region
        $region121: #{_lambda_.1} parent=79 // pred_check
          %p651 = pneg %p270
        $region122: #{_lambda_.1} parent=79 // pred_check_branch
          %653 = sbr.rel (%p651) target = $region124
        $region123: #{_lambda_.1} parent=79 // pred_region
          %654 = dma.done [#allocation18], 384
        $region124: #{_lambda_.1} parent=79 // pred_fallthru
          _
        // Predicated region
        $region125: #{_lambda_.1} parent=79 // pred_check
          %p655 = pneg %p291
        $region126: #{_lambda_.1} parent=79 // pred_check_branch
          %657 = sbr.rel (%p655) target = $region128
        $region127: #{_lambda_.1} parent=79 // pred_region
          %658 = dma.done [#allocation21], 384
        $region128: #{_lambda_.1} parent=79 // pred_fallthru
          _
        // Predicated region
        $region129: #{_lambda_.1} parent=79 // pred_check
          %p659 = pneg %p312
        $region130: #{_lambda_.1} parent=79 // pred_check_branch
          %661 = sbr.rel (%p659) target = $region132
        $region131: #{_lambda_.1} parent=79 // pred_region
          %662 = dma.done [#allocation21], 640
        $region132: #{_lambda_.1} parent=79 // pred_fallthru
          _
        // Predicated region
        $region133: #{_lambda_.1} parent=79 // pred_check
          %p663 = pneg %p333
        $region134: #{_lambda_.1} parent=79 // pred_check_branch
          %665 = sbr.rel (%p663) target = $region136
        $region135: #{_lambda_.1} parent=79 // pred_region
          %666 = dma.done [#allocation24], 384
        $region136: #{_lambda_.1} parent=79 // pred_fallthru
          _
        // Predicated region
        $region137: #{_lambda_.1} parent=79 // pred_check
          %p667 = pneg %p354
        $region138: #{_lambda_.1} parent=79 // pred_check_branch
          %669 = sbr.rel (%p667) target = $region140
        $region139: #{_lambda_.1} parent=79 // pred_region
          %670 = dma.done [#allocation24], 384
        $region140: #{_lambda_.1} parent=79 // pred_fallthru
          _
        %s671 = sand.u32 %s47, 1
        %s672 = scalar_lea.sflag [#allocation3], %s671
        %s673 = sand.u32 %s47, 1
        %s674 = smul.addr %s673, 8
        %s675 = scalar_lea.vmem [#allocation2], %s674
        %p676 = pneg %p60
        %p677 = pneg %p57
        %p678 = pneg %p81
        %p679 = pneg %p78
        %p680 = pneg %p102
        %p681 = pneg %p99
        %p682 = pneg %p123
        %p683 = pneg %p120
        %p684 = pneg %p144
        %p685 = pneg %p141
        %p686 = pneg %p165
        %p687 = pneg %p162
        %p688 = pneg %p186
        %p689 = pneg %p183
        %p690 = pneg %p207
        %p691 = pneg %p204
        %p692 = pneg %p228
        %p693 = pneg %p225
        %p694 = pneg %p249
        %p695 = pneg %p246
        %p696 = pneg %p270
        %p697 = pneg %p267
        %p698 = pneg %p291
        %p699 = pneg %p288
        %p700 = pneg %p312
        %p701 = pneg %p309
        %p702 = pneg %p333
        %p703 = pneg %p330
        %p704 = pneg %p354
        %p705 = pneg %p351
        %p706 = pneg %p380
        %p707 = pneg %p377
        %s708 = sand.u32 %s367, 1
        %s709 = scalar_lea.sflag [#allocation4], %s708
        %s710 = sand.u32 %s367, 1
        %s711 = smul.addr %s710, 8
        %s712 = scalar_lea.vmem [#allocation26], %s711
        %v713 = vld [vmem:[%s610] sm:$0xff]
        %v714 = vld [vmem:[#allocation10] sm:$0xff]
        %v715 = vld [vmem:[#allocation10 + $0x8] sm:$0xff]
        %v716 = vld [vmem:[#allocation10 + $0x10] sm:$0xff]
        %v717 = vld [vmem:[#allocation10 + $0x18] sm:$0xff]
        %v718 = vld [vmem:[#allocation10 + $0x20] sm:$0xff]
        %v719 = vld [vmem:[#allocation10 + $0x28] sm:$0xff]
        %v720 = vld [vmem:[#allocation10 + $0x30] sm:$0xff]
        %v721 = vld [vmem:[#allocation10 + $0x38] sm:$0xff]
        %vm722 = vcmask 523264
        %v724 = vsel %vm722, %v713, 0
        %726 = vmatprep.subr.mxu0 0.0
        %727 = vmatpush1.msra.mxu0 0.0
        %728 = vmatprep.subr.mxu0 0.0
        %729 = vmatpush1.msra.mxu0 0.0
        %730 = vmatprep.subr.mxu0 0.0
        %731 = vmatpush1.msra.mxu0 0.0
        %732 = vmatprep.subr.mxu0 0.0
        %733 = vmatpush1.msra.mxu0 0.0
        %734 = vmatprep.subr.mxu0 0.0
        %735 = vmatpush1.msra.mxu0 0.0
        %736 = vmatprep.subr.mxu0 0.0
        %737 = vmatpush1.msra.mxu0 0.0
        %738 = vmatprep.subr.mxu0 0.0
        %739 = vmatpush1.msra.mxu0 0.0
        %740 = vmatprep.subr.mxu0 0.0
        %741 = vmatpush1.msra.mxu0 0.0
        %742 = vmatprep.subr.mxu0 0.0
        %743 = vmatpush1.msra.mxu0 %v721
        %744 = vmatprep.subr.mxu0 0.0
        %745 = vmatpush1.msra.mxu0 %v720
        %746 = vmatprep.subr.mxu0 0.0
        %747 = vmatpush1.msra.mxu0 %v719
        %748 = vmatprep.subr.mxu0 0.0
        %749 = vmatpush1.msra.mxu0 %v718
        %750 = vmatprep.subr.mxu0 0.0
        %751 = vmatpush1.msra.mxu0 %v717
        %752 = vmatprep.subr.mxu0 0.0
        %753 = vmatpush1.msra.mxu0 %v716
        %754 = vmatprep.subr.mxu0 0.0
        %755 = vmatpush1.msra.mxu0 %v715
        %756 = vmatprep.subr.mxu0 0.0
        %757 = vmatpush1.msra.mxu0 %v714
        %758 = vmatprep.subr.mxu0 0.0
        %759 = vmatpush2.msra.mxu0 0.0
        %760 = vmatprep.subr.mxu0 0.0
        %761 = vmatpush2.msra.mxu0 0.0
        %762 = vmatprep.subr.mxu0 0.0
        %763 = vmatpush2.msra.mxu0 0.0
        %764 = vmatprep.subr.mxu0 0.0
        %765 = vmatpush2.msra.mxu0 0.0
        %766 = vmatprep.subr.mxu0 0.0
        %767 = vmatpush2.msra.mxu0 0.0
        %768 = vmatprep.subr.mxu0 0.0
        %769 = vmatpush2.msra.mxu0 0.0
        %770 = vmatprep.subr.mxu0 0.0
        %771 = vmatpush2.msra.mxu0 0.0
        %772 = vmatprep.subr.mxu0 0.0
        %773 = vmatpush2.msra.mxu0 0.0
        %774 = vmatprep.subr.mxu0 0.0
        %775 = vmatpush2.msra.mxu0 0.0
        %776 = vmatprep.subr.mxu0 0.0
        %777 = vmatpush2.msra.mxu0 0.0
        %778 = vmatprep.subr.mxu0 0.0
        %779 = vmatpush2.msra.mxu0 0.0
        %780 = vmatprep.subr.mxu0 0.0
        %781 = vmatpush2.msra.mxu0 0.0
        %782 = vmatprep.subr.mxu0 0.0
        %783 = vmatpush2.msra.mxu0 0.0
        %784 = vmatprep.subr.mxu0 0.0
        %785 = vmatpush2.msra.mxu0 0.0
        %786 = vmatprep.subr.mxu0 0.0
        %787 = vmatpush2.msra.mxu0 0.0
        %788 = vmatprep.subr.mxu0 0.0
        %789 = vmatpush2.msra.mxu0 0.0
        %790 = vmatprep.mubr.f32.mxu0 0.0
        %791 = vmatmul.mubr.f32.gmra.mxu0 %v724
        %v792 = vpop.f32.mrf.mxu0
        %v793 = vadd.f32 0.0, %v792
        %v794 = vpop.f32.mrf.mxu0
        %795 = vdwg.mxu0
        %v796 = vld [vmem:[#allocation5] sm:$0xff]
        %v797 = vld [vmem:[#allocation5 + $0x8] sm:$0xff]
        %v798 = vld [vmem:[#allocation5 + $0x10] sm:$0xff]
        %v799 = vld [vmem:[#allocation5 + $0x18] sm:$0xff]
        %v800 = vld [vmem:[#allocation5 + $0x20] sm:$0xff]
        %v801 = vld [vmem:[#allocation5 + $0x28] sm:$0xff]
        %v802 = vld [vmem:[#allocation5 + $0x30] sm:$0xff]
        %v803 = vld [vmem:[#allocation5 + $0x38] sm:$0xff]
        %804 = vmatprep.subr.mxu0 0.0
        %805 = vmatpush1.msra.mxu0 0.0
        %806 = vmatprep.subr.mxu0 0.0
        %807 = vmatpush1.msra.mxu0 0.0
        %808 = vmatprep.subr.mxu0 0.0
        %809 = vmatpush1.msra.mxu0 0.0
        %810 = vmatprep.subr.mxu0 0.0
        %811 = vmatpush1.msra.mxu0 0.0
        %812 = vmatprep.subr.mxu0 0.0
        %813 = vmatpush1.msra.mxu0 0.0
        %814 = vmatprep.subr.mxu0 0.0
        %815 = vmatpush1.msra.mxu0 0.0
        %816 = vmatprep.subr.mxu0 0.0
        %817 = vmatpush1.msra.mxu0 0.0
        %818 = vmatprep.subr.mxu0 0.0
        %819 = vmatpush1.msra.mxu0 0.0
        %820 = vmatprep.subr.mxu0 0.0
        %821 = vmatpush1.msra.mxu0 %v803
        %822 = vmatprep.subr.mxu0 0.0
        %823 = vmatpush1.msra.mxu0 %v802
        %824 = vmatprep.subr.mxu0 0.0
        %825 = vmatpush1.msra.mxu0 %v801
        %826 = vmatprep.subr.mxu0 0.0
        %827 = vmatpush1.msra.mxu0 %v800
        %828 = vmatprep.subr.mxu0 0.0
        %829 = vmatpush1.msra.mxu0 %v799
        %830 = vmatprep.subr.mxu0 0.0
        %831 = vmatpush1.msra.mxu0 %v798
        %832 = vmatprep.subr.mxu0 0.0
        %833 = vmatpush1.msra.mxu0 %v797
        %834 = vmatprep.subr.mxu0 0.0
        %835 = vmatpush1.msra.mxu0 %v796
        %836 = vmatprep.subr.mxu0 0.0
        %837 = vmatpush2.msra.mxu0 0.0
        %838 = vmatprep.subr.mxu0 0.0
        %839 = vmatpush2.msra.mxu0 0.0
        %840 = vmatprep.subr.mxu0 0.0
        %841 = vmatpush2.msra.mxu0 0.0
        %842 = vmatprep.subr.mxu0 0.0
        %843 = vmatpush2.msra.mxu0 0.0
        %844 = vmatprep.subr.mxu0 0.0
        %845 = vmatpush2.msra.mxu0 0.0
        %846 = vmatprep.subr.mxu0 0.0
        %847 = vmatpush2.msra.mxu0 0.0
        %848 = vmatprep.subr.mxu0 0.0
        %849 = vmatpush2.msra.mxu0 0.0
        %850 = vmatprep.subr.mxu0 0.0
        %851 = vmatpush2.msra.mxu0 0.0
        %852 = vmatprep.subr.mxu0 0.0
        %853 = vmatpush2.msra.mxu0 0.0
        %854 = vmatprep.subr.mxu0 0.0
        %855 = vmatpush2.msra.mxu0 0.0
        %856 = vmatprep.subr.mxu0 0.0
        %857 = vmatpush2.msra.mxu0 0.0
        %858 = vmatprep.subr.mxu0 0.0
        %859 = vmatpush2.msra.mxu0 0.0
        %860 = vmatprep.subr.mxu0 0.0
        %861 = vmatpush2.msra.mxu0 0.0
        %862 = vmatprep.subr.mxu0 0.0
        %863 = vmatpush2.msra.mxu0 0.0
        %864 = vmatprep.subr.mxu0 0.0
        %865 = vmatpush2.msra.mxu0 0.0
        %866 = vmatprep.subr.mxu0 0.0
        %867 = vmatpush2.msra.mxu0 0.0
        %868 = vmatprep.mubr.f32.mxu0 0.0
        %869 = vmatmul.mubr.f32.gmra.mxu0 %v724
        %v870 = vpop.f32.mrf.mxu0
        %v871 = vadd.f32 0.0, %v870
        %v872 = vpop.f32.mrf.mxu0
        %873 = vdwg.mxu0
        %v874 = vld [vmem:[#allocation11] sm:$0xff]
        %v875 = vld [vmem:[#allocation11 + $0x8] sm:$0xff]
        %v876 = vld [vmem:[#allocation11 + $0x10] sm:$0xff]
        %v877 = vld [vmem:[#allocation11 + $0x18] sm:$0xff]
        %v878 = vld [vmem:[#allocation11 + $0x20] sm:$0x1f]
        %vm879 = vcmask 302080
        %v881 = vsel %vm879, %v871, 0
        %vm883 = vcmask 1044480
        %v885 = vsel %vm883, %v878, 0
        %887 = vmatprep.subr.mxu0 0.0
        %888 = vmatpush1.msra.mxu0 0.0
        %889 = vmatprep.subr.mxu0 0.0
        %890 = vmatpush1.msra.mxu0 0.0
        %891 = vmatprep.subr.mxu0 0.0
        %892 = vmatpush1.msra.mxu0 0.0
        %893 = vmatprep.subr.mxu0 0.0
        %894 = vmatpush1.msra.mxu0 0.0
        %895 = vmatprep.subr.mxu0 0.0
        %896 = vmatpush1.msra.mxu0 0.0
        %897 = vmatprep.subr.mxu0 0.0
        %898 = vmatpush1.msra.mxu0 0.0
        %899 = vmatprep.subr.mxu0 0.0
        %900 = vmatpush1.msra.mxu0 0.0
        %901 = vmatprep.subr.mxu0 0.0
        %902 = vmatpush1.msra.mxu0 0.0
        %903 = vmatprep.subr.mxu0 0.0
        %904 = vmatpush1.msra.mxu0 0.0
        %905 = vmatprep.subr.mxu0 0.0
        %906 = vmatpush1.msra.mxu0 0.0
        %907 = vmatprep.subr.mxu0 0.0
        %908 = vmatpush1.msra.mxu0 0.0
        %909 = vmatprep.subr.mxu0 0.0
        %910 = vmatpush1.msra.mxu0 %v885
        %911 = vmatprep.subr.mxu0 0.0
        %912 = vmatpush1.msra.mxu0 %v877
        %913 = vmatprep.subr.mxu0 0.0
        %914 = vmatpush1.msra.mxu0 %v876
        %915 = vmatprep.subr.mxu0 0.0
        %916 = vmatpush1.msra.mxu0 %v875
        %917 = vmatprep.subr.mxu0 0.0
        %918 = vmatpush1.msra.mxu0 %v874
        %919 = vmatprep.subr.mxu0 0.0
        %920 = vmatpush2.msra.mxu0 0.0
        %921 = vmatprep.subr.mxu0 0.0
        %922 = vmatpush2.msra.mxu0 0.0
        %923 = vmatprep.subr.mxu0 0.0
        %924 = vmatpush2.msra.mxu0 0.0
        %925 = vmatprep.subr.mxu0 0.0
        %926 = vmatpush2.msra.mxu0 0.0
        %927 = vmatprep.subr.mxu0 0.0
        %928 = vmatpush2.msra.mxu0 0.0
        %929 = vmatprep.subr.mxu0 0.0
        %930 = vmatpush2.msra.mxu0 0.0
        %931 = vmatprep.subr.mxu0 0.0
        %932 = vmatpush2.msra.mxu0 0.0
        %933 = vmatprep.subr.mxu0 0.0
        %934 = vmatpush2.msra.mxu0 0.0
        %935 = vmatprep.subr.mxu0 0.0
        %936 = vmatpush2.msra.mxu0 0.0
        %937 = vmatprep.subr.mxu0 0.0
        %938 = vmatpush2.msra.mxu0 0.0
        %939 = vmatprep.subr.mxu0 0.0
        %940 = vmatpush2.msra.mxu0 0.0
        %941 = vmatprep.subr.mxu0 0.0
        %942 = vmatpush2.msra.mxu0 0.0
        %943 = vmatprep.subr.mxu0 0.0
        %944 = vmatpush2.msra.mxu0 0.0
        %945 = vmatprep.subr.mxu0 0.0
        %946 = vmatpush2.msra.mxu0 0.0
        %947 = vmatprep.subr.mxu0 0.0
        %948 = vmatpush2.msra.mxu0 0.0
        %949 = vmatprep.subr.mxu0 0.0
        %950 = vmatpush2.msra.mxu0 0.0
        %951 = vmatprep.mubr.f32.mxu0 0.0
        %952 = vmatmul.mubr.f32.gmra.mxu0 %v881
        %v953 = vpop.f32.mrf.mxu0
        %v954 = vadd.f32 0.0, %v953
        %v955 = vpop.f32.mrf.mxu0
        %956 = vdwg.mxu0
        %v957 = vld [vmem:[#allocation7] sm:$0xff]
        %v958 = vld [vmem:[#allocation7 + $0x8] sm:$0xff]
        %v959 = vld [vmem:[#allocation7 + $0x10] sm:$0xff]
        %v960 = vld [vmem:[#allocation7 + $0x18] sm:$0xff]
        %v961 = vld [vmem:[#allocation7 + $0x20] sm:$0x1f]
        %v963 = vsel %vm883, %v961, 0
        %965 = vmatprep.subr.mxu0 0.0
        %966 = vmatpush1.msra.mxu0 0.0
        %967 = vmatprep.subr.mxu0 0.0
        %968 = vmatpush1.msra.mxu0 0.0
        %969 = vmatprep.subr.mxu0 0.0
        %970 = vmatpush1.msra.mxu0 0.0
        %971 = vmatprep.subr.mxu0 0.0
        %972 = vmatpush1.msra.mxu0 0.0
        %973 = vmatprep.subr.mxu0 0.0
        %974 = vmatpush1.msra.mxu0 0.0
        %975 = vmatprep.subr.mxu0 0.0
        %976 = vmatpush1.msra.mxu0 0.0
        %977 = vmatprep.subr.mxu0 0.0
        %978 = vmatpush1.msra.mxu0 0.0
        %979 = vmatprep.subr.mxu0 0.0
        %980 = vmatpush1.msra.mxu0 0.0
        %981 = vmatprep.subr.mxu0 0.0
        %982 = vmatpush1.msra.mxu0 0.0
        %983 = vmatprep.subr.mxu0 0.0
        %984 = vmatpush1.msra.mxu0 0.0
        %985 = vmatprep.subr.mxu0 0.0
        %986 = vmatpush1.msra.mxu0 0.0
        %987 = vmatprep.subr.mxu0 0.0
        %988 = vmatpush1.msra.mxu0 %v963
        %989 = vmatprep.subr.mxu0 0.0
        %990 = vmatpush1.msra.mxu0 %v960
        %991 = vmatprep.subr.mxu0 0.0
        %992 = vmatpush1.msra.mxu0 %v959
        %993 = vmatprep.subr.mxu0 0.0
        %994 = vmatpush1.msra.mxu0 %v958
        %995 = vmatprep.subr.mxu0 0.0
        %996 = vmatpush1.msra.mxu0 %v957
        %997 = vmatprep.subr.mxu0 0.0
        %998 = vmatpush2.msra.mxu0 0.0
        %999 = vmatprep.subr.mxu0 0.0
        %1000 = vmatpush2.msra.mxu0 0.0
        %1001 = vmatprep.subr.mxu0 0.0
        %1002 = vmatpush2.msra.mxu0 0.0
        %1003 = vmatprep.subr.mxu0 0.0
        %1004 = vmatpush2.msra.mxu0 0.0
        %1005 = vmatprep.subr.mxu0 0.0
        %1006 = vmatpush2.msra.mxu0 0.0
        %1007 = vmatprep.subr.mxu0 0.0
        %1008 = vmatpush2.msra.mxu0 0.0
        %1009 = vmatprep.subr.mxu0 0.0
        %1010 = vmatpush2.msra.mxu0 0.0
        %1011 = vmatprep.subr.mxu0 0.0
        %1012 = vmatpush2.msra.mxu0 0.0
        %1013 = vmatprep.subr.mxu0 0.0
        %1014 = vmatpush2.msra.mxu0 0.0
        %1015 = vmatprep.subr.mxu0 0.0
        %1016 = vmatpush2.msra.mxu0 0.0
        %1017 = vmatprep.subr.mxu0 0.0
        %1018 = vmatpush2.msra.mxu0 0.0
        %1019 = vmatprep.subr.mxu0 0.0
        %1020 = vmatpush2.msra.mxu0 0.0
        %1021 = vmatprep.subr.mxu0 0.0
        %1022 = vmatpush2.msra.mxu0 0.0
        %1023 = vmatprep.subr.mxu0 0.0
        %1024 = vmatpush2.msra.mxu0 0.0
        %1025 = vmatprep.subr.mxu0 0.0
        %1026 = vmatpush2.msra.mxu0 0.0
        %1027 = vmatprep.subr.mxu0 0.0
        %1028 = vmatpush2.msra.mxu0 0.0
        %1029 = vmatprep.mubr.f32.mxu0 0.0
        %1030 = vmatmul.mubr.f32.gmra.mxu0 %v881
        %v1031 = vpop.f32.mrf.mxu0
        %v1032 = vadd.f32 0.0, %v1031
        %v1033 = vpop.f32.mrf.mxu0
        %1034 = vdwg.mxu0
        %v1035 = vld [vmem:[#allocation13] sm:$0xff]
        %v1036 = vld [vmem:[#allocation13 + $0x8] sm:$0xff]
        %v1037 = vld [vmem:[#allocation13 + $0x10] sm:$0xff]
        %vm1038 = vcmask 195584
        %v1040 = vsel %vm1038, %v1032, 0
        %1042 = vmatprep.subr.mxu0 0.0
        %1043 = vmatpush1.msra.mxu0 0.0
        %1044 = vmatprep.subr.mxu0 0.0
        %1045 = vmatpush1.msra.mxu0 0.0
        %1046 = vmatprep.subr.mxu0 0.0
        %1047 = vmatpush1.msra.mxu0 0.0
        %1048 = vmatprep.subr.mxu0 0.0
        %1049 = vmatpush1.msra.mxu0 0.0
        %1050 = vmatprep.subr.mxu0 0.0
        %1051 = vmatpush1.msra.mxu0 0.0
        %1052 = vmatprep.subr.mxu0 0.0
        %1053 = vmatpush1.msra.mxu0 0.0
        %1054 = vmatprep.subr.mxu0 0.0
        %1055 = vmatpush1.msra.mxu0 0.0
        %1056 = vmatprep.subr.mxu0 0.0
        %1057 = vmatpush1.msra.mxu0 0.0
        %1058 = vmatprep.subr.mxu0 0.0
        %1059 = vmatpush1.msra.mxu0 0.0
        %1060 = vmatprep.subr.mxu0 0.0
        %1061 = vmatpush1.msra.mxu0 0.0
        %1062 = vmatprep.subr.mxu0 0.0
        %1063 = vmatpush1.msra.mxu0 0.0
        %1064 = vmatprep.subr.mxu0 0.0
        %1065 = vmatpush1.msra.mxu0 0.0
        %1066 = vmatprep.subr.mxu0 0.0
        %1067 = vmatpush1.msra.mxu0 0.0
        %1068 = vmatprep.subr.mxu0 0.0
        %1069 = vmatpush1.msra.mxu0 %v1037
        %1070 = vmatprep.subr.mxu0 0.0
        %1071 = vmatpush1.msra.mxu0 %v1036
        %1072 = vmatprep.subr.mxu0 0.0
        %1073 = vmatpush1.msra.mxu0 %v1035
        %1074 = vmatprep.subr.mxu0 0.0
        %1075 = vmatpush2.msra.mxu0 0.0
        %1076 = vmatprep.subr.mxu0 0.0
        %1077 = vmatpush2.msra.mxu0 0.0
        %1078 = vmatprep.subr.mxu0 0.0
        %1079 = vmatpush2.msra.mxu0 0.0
        %1080 = vmatprep.subr.mxu0 0.0
        %1081 = vmatpush2.msra.mxu0 0.0
        %1082 = vmatprep.subr.mxu0 0.0
        %1083 = vmatpush2.msra.mxu0 0.0
        %1084 = vmatprep.subr.mxu0 0.0
        %1085 = vmatpush2.msra.mxu0 0.0
        %1086 = vmatprep.subr.mxu0 0.0
        %1087 = vmatpush2.msra.mxu0 0.0
        %1088 = vmatprep.subr.mxu0 0.0
        %1089 = vmatpush2.msra.mxu0 0.0
        %1090 = vmatprep.subr.mxu0 0.0
        %1091 = vmatpush2.msra.mxu0 0.0
        %1092 = vmatprep.subr.mxu0 0.0
        %1093 = vmatpush2.msra.mxu0 0.0
        %1094 = vmatprep.subr.mxu0 0.0
        %1095 = vmatpush2.msra.mxu0 0.0
        %1096 = vmatprep.subr.mxu0 0.0
        %1097 = vmatpush2.msra.mxu0 0.0
        %1098 = vmatprep.subr.mxu0 0.0
        %1099 = vmatpush2.msra.mxu0 0.0
        %1100 = vmatprep.subr.mxu0 0.0
        %1101 = vmatpush2.msra.mxu0 0.0
        %1102 = vmatprep.subr.mxu0 0.0
        %1103 = vmatpush2.msra.mxu0 0.0
        %1104 = vmatprep.subr.mxu0 0.0
        %1105 = vmatpush2.msra.mxu0 0.0
        %1106 = vmatprep.mubr.f32.mxu0 0.0
        %1107 = vmatmul.mubr.f32.gmra.mxu0 %v1040
        %v1108 = vpop.f32.mrf.mxu0
        %v1109 = vadd.f32 0.0, %v1108
        %v1110 = vpop.f32.mrf.mxu0
        %1111 = vdwg.mxu0
        %v1112 = vld [vmem:[#allocation8] sm:$0xff]
        %v1113 = vld [vmem:[#allocation8 + $0x8] sm:$0xff]
        %v1114 = vld [vmem:[#allocation8 + $0x10] sm:$0xff]
        %1115 = vmatprep.subr.mxu0 0.0
        %1116 = vmatpush1.msra.mxu0 0.0
        %1117 = vmatprep.subr.mxu0 0.0
        %1118 = vmatpush1.msra.mxu0 0.0
        %1119 = vmatprep.subr.mxu0 0.0
        %1120 = vmatpush1.msra.mxu0 0.0
        %1121 = vmatprep.subr.mxu0 0.0
        %1122 = vmatpush1.msra.mxu0 0.0
        %1123 = vmatprep.subr.mxu0 0.0
        %1124 = vmatpush1.msra.mxu0 0.0
        %1125 = vmatprep.subr.mxu0 0.0
        %1126 = vmatpush1.msra.mxu0 0.0
        %1127 = vmatprep.subr.mxu0 0.0
        %1128 = vmatpush1.msra.mxu0 0.0
        %1129 = vmatprep.subr.mxu0 0.0
        %1130 = vmatpush1.msra.mxu0 0.0
        %1131 = vmatprep.subr.mxu0 0.0
        %1132 = vmatpush1.msra.mxu0 0.0
        %1133 = vmatprep.subr.mxu0 0.0
        %1134 = vmatpush1.msra.mxu0 0.0
        %1135 = vmatprep.subr.mxu0 0.0
        %1136 = vmatpush1.msra.mxu0 0.0
        %1137 = vmatprep.subr.mxu0 0.0
        %1138 = vmatpush1.msra.mxu0 0.0
        %1139 = vmatprep.subr.mxu0 0.0
        %1140 = vmatpush1.msra.mxu0 0.0
        %1141 = vmatprep.subr.mxu0 0.0
        %1142 = vmatpush1.msra.mxu0 %v1114
        %1143 = vmatprep.subr.mxu0 0.0
        %1144 = vmatpush1.msra.mxu0 %v1113
        %1145 = vmatprep.subr.mxu0 0.0
        %1146 = vmatpush1.msra.mxu0 %v1112
        %1147 = vmatprep.subr.mxu0 0.0
        %1148 = vmatpush2.msra.mxu0 0.0
        %1149 = vmatprep.subr.mxu0 0.0
        %1150 = vmatpush2.msra.mxu0 0.0
        %1151 = vmatprep.subr.mxu0 0.0
        %1152 = vmatpush2.msra.mxu0 0.0
        %1153 = vmatprep.subr.mxu0 0.0
        %1154 = vmatpush2.msra.mxu0 0.0
        %1155 = vmatprep.subr.mxu0 0.0
        %1156 = vmatpush2.msra.mxu0 0.0
        %1157 = vmatprep.subr.mxu0 0.0
        %1158 = vmatpush2.msra.mxu0 0.0
        %1159 = vmatprep.subr.mxu0 0.0
        %1160 = vmatpush2.msra.mxu0 0.0
        %1161 = vmatprep.subr.mxu0 0.0
        %1162 = vmatpush2.msra.mxu0 0.0
        %1163 = vmatprep.subr.mxu0 0.0
        %1164 = vmatpush2.msra.mxu0 0.0
        %1165 = vmatprep.subr.mxu0 0.0
        %1166 = vmatpush2.msra.mxu0 0.0
        %1167 = vmatprep.subr.mxu0 0.0
        %1168 = vmatpush2.msra.mxu0 0.0
        %1169 = vmatprep.subr.mxu0 0.0
        %1170 = vmatpush2.msra.mxu0 0.0
        %1171 = vmatprep.subr.mxu0 0.0
        %1172 = vmatpush2.msra.mxu0 0.0
        %1173 = vmatprep.subr.mxu0 0.0
        %1174 = vmatpush2.msra.mxu0 0.0
        %1175 = vmatprep.subr.mxu0 0.0
        %1176 = vmatpush2.msra.mxu0 0.0
        %1177 = vmatprep.subr.mxu0 0.0
        %1178 = vmatpush2.msra.mxu0 0.0
        %1179 = vmatprep.mubr.f32.mxu0 0.0
        %1180 = vmatmul.mubr.f32.gmra.mxu0 %v1040
        %v1181 = vpop.f32.mrf.mxu0
        %v1182 = vadd.f32 0.0, %v1181
        %v1183 = vpop.f32.mrf.mxu0
        %1184 = vdwg.mxu0
        %v1185 = vlaneseq
        %v1186 = vand.u32 %v1185, 127
        %vm1187 = vcmp.eq.s32.totalorder %v1186, 0
        %v1188 = vsel %vm1187, %v1182, 0.0
        %v1189 = vld [vmem:[#allocation14] sm:$0xff]
        %vm1190 = vcmp.eq.s32.totalorder %v1186, 1
        %v1191 = vsel %vm1190, %v1182, 0.0
        %s1192 = scalar_lea.vmem [#allocation14], 8
        %v1193 = vld [vmem:[%s1192] sm:$0xff]
        %vm1194 = vcmask 64512
        %v1196 = vsel %vm1194, %v1193, 0
        %1198 = vmatprep.subr.mxu0 0.0
        %1199 = vmatpush1.msra.mxu0 0.0
        %1200 = vmatprep.subr.mxu0 0.0
        %1201 = vmatpush1.msra.mxu0 0.0
        %1202 = vmatprep.subr.mxu0 0.0
        %1203 = vmatpush1.msra.mxu0 0.0
        %1204 = vmatprep.subr.mxu0 0.0
        %1205 = vmatpush1.msra.mxu0 0.0
        %1206 = vmatprep.subr.mxu0 0.0
        %1207 = vmatpush1.msra.mxu0 0.0
        %1208 = vmatprep.subr.mxu0 0.0
        %1209 = vmatpush1.msra.mxu0 0.0
        %1210 = vmatprep.subr.mxu0 0.0
        %1211 = vmatpush1.msra.mxu0 0.0
        %1212 = vmatprep.subr.mxu0 0.0
        %1213 = vmatpush1.msra.mxu0 0.0
        %1214 = vmatprep.subr.mxu0 0.0
        %1215 = vmatpush1.msra.mxu0 0.0
        %1216 = vmatprep.subr.mxu0 0.0
        %1217 = vmatpush1.msra.mxu0 0.0
        %1218 = vmatprep.subr.mxu0 0.0
        %1219 = vmatpush1.msra.mxu0 0.0
        %1220 = vmatprep.subr.mxu0 0.0
        %1221 = vmatpush1.msra.mxu0 0.0
        %1222 = vmatprep.subr.mxu0 0.0
        %1223 = vmatpush1.msra.mxu0 0.0
        %1224 = vmatprep.subr.mxu0 0.0
        %1225 = vmatpush1.msra.mxu0 0.0
        %1226 = vmatprep.subr.mxu0 0.0
        %1227 = vmatpush1.msra.mxu0 0.0
        %1228 = vmatprep.subr.mxu0 0.0
        %1229 = vmatpush1.msra.mxu0 %v1191
        %1230 = vmatprep.subr.mxu0 0.0
        %1231 = vmatpush2.msra.mxu0 0.0
        %1232 = vmatprep.subr.mxu0 0.0
        %1233 = vmatpush2.msra.mxu0 0.0
        %1234 = vmatprep.subr.mxu0 0.0
        %1235 = vmatpush2.msra.mxu0 0.0
        %1236 = vmatprep.subr.mxu0 0.0
        %1237 = vmatpush2.msra.mxu0 0.0
        %1238 = vmatprep.subr.mxu0 0.0
        %1239 = vmatpush2.msra.mxu0 0.0
        %1240 = vmatprep.subr.mxu0 0.0
        %1241 = vmatpush2.msra.mxu0 0.0
        %1242 = vmatprep.subr.mxu0 0.0
        %1243 = vmatpush2.msra.mxu0 0.0
        %1244 = vmatprep.subr.mxu0 0.0
        %1245 = vmatpush2.msra.mxu0 0.0
        %1246 = vmatprep.subr.mxu0 0.0
        %1247 = vmatpush2.msra.mxu0 0.0
        %1248 = vmatprep.subr.mxu0 0.0
        %1249 = vmatpush2.msra.mxu0 0.0
        %1250 = vmatprep.subr.mxu0 0.0
        %1251 = vmatpush2.msra.mxu0 0.0
        %1252 = vmatprep.subr.mxu0 0.0
        %1253 = vmatpush2.msra.mxu0 0.0
        %1254 = vmatprep.subr.mxu0 0.0
        %1255 = vmatpush2.msra.mxu0 0.0
        %1256 = vmatprep.subr.mxu0 0.0
        %1257 = vmatpush2.msra.mxu0 0.0
        %1258 = vmatprep.subr.mxu0 0.0
        %1259 = vmatpush2.msra.mxu0 0.0
        %1260 = vmatprep.subr.mxu0 0.0
        %1261 = vmatpush2.msra.mxu0 0.0
        %1262 = vmatprep.mubr.f32.mxu0 0.0
        %1263 = vmatmul.mubr.f32.gmra.mxu0 %v1196
        %v1264 = vpop.f32.mrf.mxu0
        %v1265 = vadd.f32 0.0, %v1264
        %v1266 = vpop.f32.mrf.mxu0
        %1267 = vdwg.mxu0
        %v1269 = vsel %vm1194, %v1189, 0
        %1271 = vmatprep.subr.mxu0 0.0
        %1272 = vmatpush1.msra.mxu0 0.0
        %1273 = vmatprep.subr.mxu0 0.0
        %1274 = vmatpush1.msra.mxu0 0.0
        %1275 = vmatprep.subr.mxu0 0.0
        %1276 = vmatpush1.msra.mxu0 0.0
        %1277 = vmatprep.subr.mxu0 0.0
        %1278 = vmatpush1.msra.mxu0 0.0
        %1279 = vmatprep.subr.mxu0 0.0
        %1280 = vmatpush1.msra.mxu0 0.0
        %1281 = vmatprep.subr.mxu0 0.0
        %1282 = vmatpush1.msra.mxu0 0.0
        %1283 = vmatprep.subr.mxu0 0.0
        %1284 = vmatpush1.msra.mxu0 0.0
        %1285 = vmatprep.subr.mxu0 0.0
        %1286 = vmatpush1.msra.mxu0 0.0
        %1287 = vmatprep.subr.mxu0 0.0
        %1288 = vmatpush1.msra.mxu0 0.0
        %1289 = vmatprep.subr.mxu0 0.0
        %1290 = vmatpush1.msra.mxu0 0.0
        %1291 = vmatprep.subr.mxu0 0.0
        %1292 = vmatpush1.msra.mxu0 0.0
        %1293 = vmatprep.subr.mxu0 0.0
        %1294 = vmatpush1.msra.mxu0 0.0
        %1295 = vmatprep.subr.mxu0 0.0
        %1296 = vmatpush1.msra.mxu0 0.0
        %1297 = vmatprep.subr.mxu0 0.0
        %1298 = vmatpush1.msra.mxu0 0.0
        %1299 = vmatprep.subr.mxu0 0.0
        %1300 = vmatpush1.msra.mxu0 0.0
        %1301 = vmatprep.subr.mxu0 0.0
        %1302 = vmatpush1.msra.mxu0 %v1188
        %1303 = vmatprep.subr.mxu0 0.0
        %1304 = vmatpush2.msra.mxu0 0.0
        %1305 = vmatprep.subr.mxu0 0.0
        %1306 = vmatpush2.msra.mxu0 0.0
        %1307 = vmatprep.subr.mxu0 0.0
        %1308 = vmatpush2.msra.mxu0 0.0
        %1309 = vmatprep.subr.mxu0 0.0
        %1310 = vmatpush2.msra.mxu0 0.0
        %1311 = vmatprep.subr.mxu0 0.0
        %1312 = vmatpush2.msra.mxu0 0.0
        %1313 = vmatprep.subr.mxu0 0.0
        %1314 = vmatpush2.msra.mxu0 0.0
        %1315 = vmatprep.subr.mxu0 0.0
        %1316 = vmatpush2.msra.mxu0 0.0
        %1317 = vmatprep.subr.mxu0 0.0
        %1318 = vmatpush2.msra.mxu0 0.0
        %1319 = vmatprep.subr.mxu0 0.0
        %1320 = vmatpush2.msra.mxu0 0.0
        %1321 = vmatprep.subr.mxu0 0.0
        %1322 = vmatpush2.msra.mxu0 0.0
        %1323 = vmatprep.subr.mxu0 0.0
        %1324 = vmatpush2.msra.mxu0 0.0
        %1325 = vmatprep.subr.mxu0 0.0
        %1326 = vmatpush2.msra.mxu0 0.0
        %1327 = vmatprep.subr.mxu0 0.0
        %1328 = vmatpush2.msra.mxu0 0.0
        %1329 = vmatprep.subr.mxu0 0.0
        %1330 = vmatpush2.msra.mxu0 0.0
        %1331 = vmatprep.subr.mxu0 0.0
        %1332 = vmatpush2.msra.mxu0 0.0
        %1333 = vmatprep.subr.mxu0 0.0
        %1334 = vmatpush2.msra.mxu0 0.0
        %1335 = vmatprep.mubr.f32.mxu0 0.0
        %1336 = vmatmul.mubr.f32.gmra.mxu0 %v1269
        %v1337 = vpop.f32.mrf.mxu0
        %v1338 = vadd.f32 %v1265, %v1337
        %v1339 = vpop.f32.mrf.mxu0
        %1340 = vdwg.mxu0
        %vm1341 = vcmp.eq.s32.totalorder %v1186, 2
        %v1342 = vsel %vm1341, %v1182, 0.0
        %s1343 = scalar_lea.vmem [#allocation14], 16
        %v1344 = vld [vmem:[%s1343] sm:$0xff]
        %v1346 = vsel %vm1194, %v1344, 0
        %1348 = vmatprep.subr.mxu0 0.0
        %1349 = vmatpush1.msra.mxu0 0.0
        %1350 = vmatprep.subr.mxu0 0.0
        %1351 = vmatpush1.msra.mxu0 0.0
        %1352 = vmatprep.subr.mxu0 0.0
        %1353 = vmatpush1.msra.mxu0 0.0
        %1354 = vmatprep.subr.mxu0 0.0
        %1355 = vmatpush1.msra.mxu0 0.0
        %1356 = vmatprep.subr.mxu0 0.0
        %1357 = vmatpush1.msra.mxu0 0.0
        %1358 = vmatprep.subr.mxu0 0.0
        %1359 = vmatpush1.msra.mxu0 0.0
        %1360 = vmatprep.subr.mxu0 0.0
        %1361 = vmatpush1.msra.mxu0 0.0
        %1362 = vmatprep.subr.mxu0 0.0
        %1363 = vmatpush1.msra.mxu0 0.0
        %1364 = vmatprep.subr.mxu0 0.0
        %1365 = vmatpush1.msra.mxu0 0.0
        %1366 = vmatprep.subr.mxu0 0.0
        %1367 = vmatpush1.msra.mxu0 0.0
        %1368 = vmatprep.subr.mxu0 0.0
        %1369 = vmatpush1.msra.mxu0 0.0
        %1370 = vmatprep.subr.mxu0 0.0
        %1371 = vmatpush1.msra.mxu0 0.0
        %1372 = vmatprep.subr.mxu0 0.0
        %1373 = vmatpush1.msra.mxu0 0.0
        %1374 = vmatprep.subr.mxu0 0.0
        %1375 = vmatpush1.msra.mxu0 0.0
        %1376 = vmatprep.subr.mxu0 0.0
        %1377 = vmatpush1.msra.mxu0 0.0
        %1378 = vmatprep.subr.mxu0 0.0
        %1379 = vmatpush1.msra.mxu0 %v1342
        %1380 = vmatprep.subr.mxu0 0.0
        %1381 = vmatpush2.msra.mxu0 0.0
        %1382 = vmatprep.subr.mxu0 0.0
        %1383 = vmatpush2.msra.mxu0 0.0
        %1384 = vmatprep.subr.mxu0 0.0
        %1385 = vmatpush2.msra.mxu0 0.0
        %1386 = vmatprep.subr.mxu0 0.0
        %1387 = vmatpush2.msra.mxu0 0.0
        %1388 = vmatprep.subr.mxu0 0.0
        %1389 = vmatpush2.msra.mxu0 0.0
        %1390 = vmatprep.subr.mxu0 0.0
        %1391 = vmatpush2.msra.mxu0 0.0
        %1392 = vmatprep.subr.mxu0 0.0
        %1393 = vmatpush2.msra.mxu0 0.0
        %1394 = vmatprep.subr.mxu0 0.0
        %1395 = vmatpush2.msra.mxu0 0.0
        %1396 = vmatprep.subr.mxu0 0.0
        %1397 = vmatpush2.msra.mxu0 0.0
        %1398 = vmatprep.subr.mxu0 0.0
        %1399 = vmatpush2.msra.mxu0 0.0
        %1400 = vmatprep.subr.mxu0 0.0
        %1401 = vmatpush2.msra.mxu0 0.0
        %1402 = vmatprep.subr.mxu0 0.0
        %1403 = vmatpush2.msra.mxu0 0.0
        %1404 = vmatprep.subr.mxu0 0.0
        %1405 = vmatpush2.msra.mxu0 0.0
        %1406 = vmatprep.subr.mxu0 0.0
        %1407 = vmatpush2.msra.mxu0 0.0
        %1408 = vmatprep.subr.mxu0 0.0
        %1409 = vmatpush2.msra.mxu0 0.0
        %1410 = vmatprep.subr.mxu0 0.0
        %1411 = vmatpush2.msra.mxu0 0.0
        %1412 = vmatprep.mubr.f32.mxu0 0.0
        %1413 = vmatmul.mubr.f32.gmra.mxu0 %v1346
        %v1414 = vpop.f32.mrf.mxu0
        %v1415 = vadd.f32 0.0, %v1414
        %v1416 = vpop.f32.mrf.mxu0
        %1417 = vdwg.mxu0
        %v1418 = vadd.f32 %v1338, %v1415
        %vm1419 = vcmp.eq.s32.totalorder %v1186, 3
        %v1420 = vsel %vm1419, %v1182, 0.0
        %s1421 = scalar_lea.vmem [#allocation14], 24
        %v1422 = vld [vmem:[%s1421] sm:$0xff]
        %v1424 = vsel %vm1194, %v1422, 0
        %1426 = vmatprep.subr.mxu0 0.0
        %1427 = vmatpush1.msra.mxu0 0.0
        %1428 = vmatprep.subr.mxu0 0.0
        %1429 = vmatpush1.msra.mxu0 0.0
        %1430 = vmatprep.subr.mxu0 0.0
        %1431 = vmatpush1.msra.mxu0 0.0
        %1432 = vmatprep.subr.mxu0 0.0
        %1433 = vmatpush1.msra.mxu0 0.0
        %1434 = vmatprep.subr.mxu0 0.0
        %1435 = vmatpush1.msra.mxu0 0.0
        %1436 = vmatprep.subr.mxu0 0.0
        %1437 = vmatpush1.msra.mxu0 0.0
        %1438 = vmatprep.subr.mxu0 0.0
        %1439 = vmatpush1.msra.mxu0 0.0
        %1440 = vmatprep.subr.mxu0 0.0
        %1441 = vmatpush1.msra.mxu0 0.0
        %1442 = vmatprep.subr.mxu0 0.0
        %1443 = vmatpush1.msra.mxu0 0.0
        %1444 = vmatprep.subr.mxu0 0.0
        %1445 = vmatpush1.msra.mxu0 0.0
        %1446 = vmatprep.subr.mxu0 0.0
        %1447 = vmatpush1.msra.mxu0 0.0
        %1448 = vmatprep.subr.mxu0 0.0
        %1449 = vmatpush1.msra.mxu0 0.0
        %1450 = vmatprep.subr.mxu0 0.0
        %1451 = vmatpush1.msra.mxu0 0.0
        %1452 = vmatprep.subr.mxu0 0.0
        %1453 = vmatpush1.msra.mxu0 0.0
        %1454 = vmatprep.subr.mxu0 0.0
        %1455 = vmatpush1.msra.mxu0 0.0
        %1456 = vmatprep.subr.mxu0 0.0
        %1457 = vmatpush1.msra.mxu0 %v1420
        %1458 = vmatprep.subr.mxu0 0.0
        %1459 = vmatpush2.msra.mxu0 0.0
        %1460 = vmatprep.subr.mxu0 0.0
        %1461 = vmatpush2.msra.mxu0 0.0
        %1462 = vmatprep.subr.mxu0 0.0
        %1463 = vmatpush2.msra.mxu0 0.0
        %1464 = vmatprep.subr.mxu0 0.0
        %1465 = vmatpush2.msra.mxu0 0.0
        %1466 = vmatprep.subr.mxu0 0.0
        %1467 = vmatpush2.msra.mxu0 0.0
        %1468 = vmatprep.subr.mxu0 0.0
        %1469 = vmatpush2.msra.mxu0 0.0
        %1470 = vmatprep.subr.mxu0 0.0
        %1471 = vmatpush2.msra.mxu0 0.0
        %1472 = vmatprep.subr.mxu0 0.0
        %1473 = vmatpush2.msra.mxu0 0.0
        %1474 = vmatprep.subr.mxu0 0.0
        %1475 = vmatpush2.msra.mxu0 0.0
        %1476 = vmatprep.subr.mxu0 0.0
        %1477 = vmatpush2.msra.mxu0 0.0
        %1478 = vmatprep.subr.mxu0 0.0
        %1479 = vmatpush2.msra.mxu0 0.0
        %1480 = vmatprep.subr.mxu0 0.0
        %1481 = vmatpush2.msra.mxu0 0.0
        %1482 = vmatprep.subr.mxu0 0.0
        %1483 = vmatpush2.msra.mxu0 0.0
        %1484 = vmatprep.subr.mxu0 0.0
        %1485 = vmatpush2.msra.mxu0 0.0
        %1486 = vmatprep.subr.mxu0 0.0
        %1487 = vmatpush2.msra.mxu0 0.0
        %1488 = vmatprep.subr.mxu0 0.0
        %1489 = vmatpush2.msra.mxu0 0.0
        %1490 = vmatprep.mubr.f32.mxu0 0.0
        %1491 = vmatmul.mubr.f32.gmra.mxu0 %v1424
        %v1492 = vpop.f32.mrf.mxu0
        %v1493 = vadd.f32 0.0, %v1492
        %v1494 = vpop.f32.mrf.mxu0
        %1495 = vdwg.mxu0
        %v1496 = vadd.f32 %v1418, %v1493
        %vm1497 = vcmp.eq.s32.totalorder %v1186, 4
        %v1498 = vsel %vm1497, %v1182, 0.0
        %s1499 = scalar_lea.vmem [#allocation14], 32
        %v1500 = vld [vmem:[%s1499] sm:$0xff]
        %v1502 = vsel %vm1194, %v1500, 0
        %1504 = vmatprep.subr.mxu0 0.0
        %1505 = vmatpush1.msra.mxu0 0.0
        %1506 = vmatprep.subr.mxu0 0.0
        %1507 = vmatpush1.msra.mxu0 0.0
        %1508 = vmatprep.subr.mxu0 0.0
        %1509 = vmatpush1.msra.mxu0 0.0
        %1510 = vmatprep.subr.mxu0 0.0
        %1511 = vmatpush1.msra.mxu0 0.0
        %1512 = vmatprep.subr.mxu0 0.0
        %1513 = vmatpush1.msra.mxu0 0.0
        %1514 = vmatprep.subr.mxu0 0.0
        %1515 = vmatpush1.msra.mxu0 0.0
        %1516 = vmatprep.subr.mxu0 0.0
        %1517 = vmatpush1.msra.mxu0 0.0
        %1518 = vmatprep.subr.mxu0 0.0
        %1519 = vmatpush1.msra.mxu0 0.0
        %1520 = vmatprep.subr.mxu0 0.0
        %1521 = vmatpush1.msra.mxu0 0.0
        %1522 = vmatprep.subr.mxu0 0.0
        %1523 = vmatpush1.msra.mxu0 0.0
        %1524 = vmatprep.subr.mxu0 0.0
        %1525 = vmatpush1.msra.mxu0 0.0
        %1526 = vmatprep.subr.mxu0 0.0
        %1527 = vmatpush1.msra.mxu0 0.0
        %1528 = vmatprep.subr.mxu0 0.0
        %1529 = vmatpush1.msra.mxu0 0.0
        %1530 = vmatprep.subr.mxu0 0.0
        %1531 = vmatpush1.msra.mxu0 0.0
        %1532 = vmatprep.subr.mxu0 0.0
        %1533 = vmatpush1.msra.mxu0 0.0
        %1534 = vmatprep.subr.mxu0 0.0
        %1535 = vmatpush1.msra.mxu0 %v1498
        %1536 = vmatprep.subr.mxu0 0.0
        %1537 = vmatpush2.msra.mxu0 0.0
        %1538 = vmatprep.subr.mxu0 0.0
        %1539 = vmatpush2.msra.mxu0 0.0
        %1540 = vmatprep.subr.mxu0 0.0
        %1541 = vmatpush2.msra.mxu0 0.0
        %1542 = vmatprep.subr.mxu0 0.0
        %1543 = vmatpush2.msra.mxu0 0.0
        %1544 = vmatprep.subr.mxu0 0.0
        %1545 = vmatpush2.msra.mxu0 0.0
        %1546 = vmatprep.subr.mxu0 0.0
        %1547 = vmatpush2.msra.mxu0 0.0
        %1548 = vmatprep.subr.mxu0 0.0
        %1549 = vmatpush2.msra.mxu0 0.0
        %1550 = vmatprep.subr.mxu0 0.0
        %1551 = vmatpush2.msra.mxu0 0.0
        %1552 = vmatprep.subr.mxu0 0.0
        %1553 = vmatpush2.msra.mxu0 0.0
        %1554 = vmatprep.subr.mxu0 0.0
        %1555 = vmatpush2.msra.mxu0 0.0
        %1556 = vmatprep.subr.mxu0 0.0
        %1557 = vmatpush2.msra.mxu0 0.0
        %1558 = vmatprep.subr.mxu0 0.0
        %1559 = vmatpush2.msra.mxu0 0.0
        %1560 = vmatprep.subr.mxu0 0.0
        %1561 = vmatpush2.msra.mxu0 0.0
        %1562 = vmatprep.subr.mxu0 0.0
        %1563 = vmatpush2.msra.mxu0 0.0
        %1564 = vmatprep.subr.mxu0 0.0
        %1565 = vmatpush2.msra.mxu0 0.0
        %1566 = vmatprep.subr.mxu0 0.0
        %1567 = vmatpush2.msra.mxu0 0.0
        %1568 = vmatprep.mubr.f32.mxu0 0.0
        %1569 = vmatmul.mubr.f32.gmra.mxu0 %v1502
        %v1570 = vpop.f32.mrf.mxu0
        %v1571 = vadd.f32 0.0, %v1570
        %v1572 = vpop.f32.mrf.mxu0
        %1573 = vdwg.mxu0
        %v1574 = vadd.f32 %v1496, %v1571
        %vm1575 = vcmp.eq.s32.totalorder %v1186, 5
        %v1576 = vsel %vm1575, %v1182, 0.0
        %s1577 = scalar_lea.vmem [#allocation14], 40
        %v1578 = vld [vmem:[%s1577] sm:$0xff]
        %v1580 = vsel %vm1194, %v1578, 0
        %1582 = vmatprep.subr.mxu0 0.0
        %1583 = vmatpush1.msra.mxu0 0.0
        %1584 = vmatprep.subr.mxu0 0.0
        %1585 = vmatpush1.msra.mxu0 0.0
        %1586 = vmatprep.subr.mxu0 0.0
        %1587 = vmatpush1.msra.mxu0 0.0
        %1588 = vmatprep.subr.mxu0 0.0
        %1589 = vmatpush1.msra.mxu0 0.0
        %1590 = vmatprep.subr.mxu0 0.0
        %1591 = vmatpush1.msra.mxu0 0.0
        %1592 = vmatprep.subr.mxu0 0.0
        %1593 = vmatpush1.msra.mxu0 0.0
        %1594 = vmatprep.subr.mxu0 0.0
        %1595 = vmatpush1.msra.mxu0 0.0
        %1596 = vmatprep.subr.mxu0 0.0
        %1597 = vmatpush1.msra.mxu0 0.0
        %1598 = vmatprep.subr.mxu0 0.0
        %1599 = vmatpush1.msra.mxu0 0.0
        %1600 = vmatprep.subr.mxu0 0.0
        %1601 = vmatpush1.msra.mxu0 0.0
        %1602 = vmatprep.subr.mxu0 0.0
        %1603 = vmatpush1.msra.mxu0 0.0
        %1604 = vmatprep.subr.mxu0 0.0
        %1605 = vmatpush1.msra.mxu0 0.0
        %1606 = vmatprep.subr.mxu0 0.0
        %1607 = vmatpush1.msra.mxu0 0.0
        %1608 = vmatprep.subr.mxu0 0.0
        %1609 = vmatpush1.msra.mxu0 0.0
        %1610 = vmatprep.subr.mxu0 0.0
        %1611 = vmatpush1.msra.mxu0 0.0
        %1612 = vmatprep.subr.mxu0 0.0
        %1613 = vmatpush1.msra.mxu0 %v1576
        %1614 = vmatprep.subr.mxu0 0.0
        %1615 = vmatpush2.msra.mxu0 0.0
        %1616 = vmatprep.subr.mxu0 0.0
        %1617 = vmatpush2.msra.mxu0 0.0
        %1618 = vmatprep.subr.mxu0 0.0
        %1619 = vmatpush2.msra.mxu0 0.0
        %1620 = vmatprep.subr.mxu0 0.0
        %1621 = vmatpush2.msra.mxu0 0.0
        %1622 = vmatprep.subr.mxu0 0.0
        %1623 = vmatpush2.msra.mxu0 0.0
        %1624 = vmatprep.subr.mxu0 0.0
        %1625 = vmatpush2.msra.mxu0 0.0
        %1626 = vmatprep.subr.mxu0 0.0
        %1627 = vmatpush2.msra.mxu0 0.0
        %1628 = vmatprep.subr.mxu0 0.0
        %1629 = vmatpush2.msra.mxu0 0.0
        %1630 = vmatprep.subr.mxu0 0.0
        %1631 = vmatpush2.msra.mxu0 0.0
        %1632 = vmatprep.subr.mxu0 0.0
        %1633 = vmatpush2.msra.mxu0 0.0
        %1634 = vmatprep.subr.mxu0 0.0
        %1635 = vmatpush2.msra.mxu0 0.0
        %1636 = vmatprep.subr.mxu0 0.0
        %1637 = vmatpush2.msra.mxu0 0.0
        %1638 = vmatprep.subr.mxu0 0.0
        %1639 = vmatpush2.msra.mxu0 0.0
        %1640 = vmatprep.subr.mxu0 0.0
        %1641 = vmatpush2.msra.mxu0 0.0
        %1642 = vmatprep.subr.mxu0 0.0
        %1643 = vmatpush2.msra.mxu0 0.0
        %1644 = vmatprep.subr.mxu0 0.0
        %1645 = vmatpush2.msra.mxu0 0.0
        %1646 = vmatprep.mubr.f32.mxu0 0.0
        %1647 = vmatmul.mubr.f32.gmra.mxu0 %v1580
        %v1648 = vpop.f32.mrf.mxu0
        %v1649 = vadd.f32 0.0, %v1648
        %v1650 = vpop.f32.mrf.mxu0
        %1651 = vdwg.mxu0
        %v1652 = vadd.f32 %v1574, %v1649
        %vm1653 = vcmp.eq.s32.totalorder %v1186, 6
        %v1654 = vsel %vm1653, %v1182, 0.0
        %s1655 = scalar_lea.vmem [#allocation14], 48
        %v1656 = vld [vmem:[%s1655] sm:$0xff]
        %v1658 = vsel %vm1194, %v1656, 0
        %1660 = vmatprep.subr.mxu0 0.0
        %1661 = vmatpush1.msra.mxu0 0.0
        %1662 = vmatprep.subr.mxu0 0.0
        %1663 = vmatpush1.msra.mxu0 0.0
        %1664 = vmatprep.subr.mxu0 0.0
        %1665 = vmatpush1.msra.mxu0 0.0
        %1666 = vmatprep.subr.mxu0 0.0
        %1667 = vmatpush1.msra.mxu0 0.0
        %1668 = vmatprep.subr.mxu0 0.0
        %1669 = vmatpush1.msra.mxu0 0.0
        %1670 = vmatprep.subr.mxu0 0.0
        %1671 = vmatpush1.msra.mxu0 0.0
        %1672 = vmatprep.subr.mxu0 0.0
        %1673 = vmatpush1.msra.mxu0 0.0
        %1674 = vmatprep.subr.mxu0 0.0
        %1675 = vmatpush1.msra.mxu0 0.0
        %1676 = vmatprep.subr.mxu0 0.0
        %1677 = vmatpush1.msra.mxu0 0.0
        %1678 = vmatprep.subr.mxu0 0.0
        %1679 = vmatpush1.msra.mxu0 0.0
        %1680 = vmatprep.subr.mxu0 0.0
        %1681 = vmatpush1.msra.mxu0 0.0
        %1682 = vmatprep.subr.mxu0 0.0
        %1683 = vmatpush1.msra.mxu0 0.0
        %1684 = vmatprep.subr.mxu0 0.0
        %1685 = vmatpush1.msra.mxu0 0.0
        %1686 = vmatprep.subr.mxu0 0.0
        %1687 = vmatpush1.msra.mxu0 0.0
        %1688 = vmatprep.subr.mxu0 0.0
        %1689 = vmatpush1.msra.mxu0 0.0
        %1690 = vmatprep.subr.mxu0 0.0
        %1691 = vmatpush1.msra.mxu0 %v1654
        %1692 = vmatprep.subr.mxu0 0.0
        %1693 = vmatpush2.msra.mxu0 0.0
        %1694 = vmatprep.subr.mxu0 0.0
        %1695 = vmatpush2.msra.mxu0 0.0
        %1696 = vmatprep.subr.mxu0 0.0
        %1697 = vmatpush2.msra.mxu0 0.0
        %1698 = vmatprep.subr.mxu0 0.0
        %1699 = vmatpush2.msra.mxu0 0.0
        %1700 = vmatprep.subr.mxu0 0.0
        %1701 = vmatpush2.msra.mxu0 0.0
        %1702 = vmatprep.subr.mxu0 0.0
        %1703 = vmatpush2.msra.mxu0 0.0
        %1704 = vmatprep.subr.mxu0 0.0
        %1705 = vmatpush2.msra.mxu0 0.0
        %1706 = vmatprep.subr.mxu0 0.0
        %1707 = vmatpush2.msra.mxu0 0.0
        %1708 = vmatprep.subr.mxu0 0.0
        %1709 = vmatpush2.msra.mxu0 0.0
        %1710 = vmatprep.subr.mxu0 0.0
        %1711 = vmatpush2.msra.mxu0 0.0
        %1712 = vmatprep.subr.mxu0 0.0
        %1713 = vmatpush2.msra.mxu0 0.0
        %1714 = vmatprep.subr.mxu0 0.0
        %1715 = vmatpush2.msra.mxu0 0.0
        %1716 = vmatprep.subr.mxu0 0.0
        %1717 = vmatpush2.msra.mxu0 0.0
        %1718 = vmatprep.subr.mxu0 0.0
        %1719 = vmatpush2.msra.mxu0 0.0
        %1720 = vmatprep.subr.mxu0 0.0
        %1721 = vmatpush2.msra.mxu0 0.0
        %1722 = vmatprep.subr.mxu0 0.0
        %1723 = vmatpush2.msra.mxu0 0.0
        %1724 = vmatprep.mubr.f32.mxu0 0.0
        %1725 = vmatmul.mubr.f32.gmra.mxu0 %v1658
        %v1726 = vpop.f32.mrf.mxu0
        %v1727 = vadd.f32 0.0, %v1726
        %v1728 = vpop.f32.mrf.mxu0
        %1729 = vdwg.mxu0
        %v1730 = vadd.f32 %v1652, %v1727
        %vm1731 = vcmp.eq.s32.totalorder %v1186, 7
        %v1732 = vsel %vm1731, %v1182, 0.0
        %s1733 = scalar_lea.vmem [#allocation14], 56
        %v1734 = vld [vmem:[%s1733] sm:$0xff]
        %v1736 = vsel %vm1194, %v1734, 0
        %1738 = vmatprep.subr.mxu0 0.0
        %1739 = vmatpush1.msra.mxu0 0.0
        %1740 = vmatprep.subr.mxu0 0.0
        %1741 = vmatpush1.msra.mxu0 0.0
        %1742 = vmatprep.subr.mxu0 0.0
        %1743 = vmatpush1.msra.mxu0 0.0
        %1744 = vmatprep.subr.mxu0 0.0
        %1745 = vmatpush1.msra.mxu0 0.0
        %1746 = vmatprep.subr.mxu0 0.0
        %1747 = vmatpush1.msra.mxu0 0.0
        %1748 = vmatprep.subr.mxu0 0.0
        %1749 = vmatpush1.msra.mxu0 0.0
        %1750 = vmatprep.subr.mxu0 0.0
        %1751 = vmatpush1.msra.mxu0 0.0
        %1752 = vmatprep.subr.mxu0 0.0
        %1753 = vmatpush1.msra.mxu0 0.0
        %1754 = vmatprep.subr.mxu0 0.0
        %1755 = vmatpush1.msra.mxu0 0.0
        %1756 = vmatprep.subr.mxu0 0.0
        %1757 = vmatpush1.msra.mxu0 0.0
        %1758 = vmatprep.subr.mxu0 0.0
        %1759 = vmatpush1.msra.mxu0 0.0
        %1760 = vmatprep.subr.mxu0 0.0
        %1761 = vmatpush1.msra.mxu0 0.0
        %1762 = vmatprep.subr.mxu0 0.0
        %1763 = vmatpush1.msra.mxu0 0.0
        %1764 = vmatprep.subr.mxu0 0.0
        %1765 = vmatpush1.msra.mxu0 0.0
        %1766 = vmatprep.subr.mxu0 0.0
        %1767 = vmatpush1.msra.mxu0 0.0
        %1768 = vmatprep.subr.mxu0 0.0
        %1769 = vmatpush1.msra.mxu0 %v1732
        %1770 = vmatprep.subr.mxu0 0.0
        %1771 = vmatpush2.msra.mxu0 0.0
        %1772 = vmatprep.subr.mxu0 0.0
        %1773 = vmatpush2.msra.mxu0 0.0
        %1774 = vmatprep.subr.mxu0 0.0
        %1775 = vmatpush2.msra.mxu0 0.0
        %1776 = vmatprep.subr.mxu0 0.0
        %1777 = vmatpush2.msra.mxu0 0.0
        %1778 = vmatprep.subr.mxu0 0.0
        %1779 = vmatpush2.msra.mxu0 0.0
        %1780 = vmatprep.subr.mxu0 0.0
        %1781 = vmatpush2.msra.mxu0 0.0
        %1782 = vmatprep.subr.mxu0 0.0
        %1783 = vmatpush2.msra.mxu0 0.0
        %1784 = vmatprep.subr.mxu0 0.0
        %1785 = vmatpush2.msra.mxu0 0.0
        %1786 = vmatprep.subr.mxu0 0.0
        %1787 = vmatpush2.msra.mxu0 0.0
        %1788 = vmatprep.subr.mxu0 0.0
        %1789 = vmatpush2.msra.mxu0 0.0
        %1790 = vmatprep.subr.mxu0 0.0
        %1791 = vmatpush2.msra.mxu0 0.0
        %1792 = vmatprep.subr.mxu0 0.0
        %1793 = vmatpush2.msra.mxu0 0.0
        %1794 = vmatprep.subr.mxu0 0.0
        %1795 = vmatpush2.msra.mxu0 0.0
        %1796 = vmatprep.subr.mxu0 0.0
        %1797 = vmatpush2.msra.mxu0 0.0
        %1798 = vmatprep.subr.mxu0 0.0
        %1799 = vmatpush2.msra.mxu0 0.0
        %1800 = vmatprep.subr.mxu0 0.0
        %1801 = vmatpush2.msra.mxu0 0.0
        %1802 = vmatprep.mubr.f32.mxu0 0.0
        %1803 = vmatmul.mubr.f32.gmra.mxu0 %v1736
        %v1804 = vpop.f32.mrf.mxu0
        %v1805 = vadd.f32 0.0, %v1804
        %v1806 = vpop.f32.mrf.mxu0
        %1807 = vdwg.mxu0
        %v1808 = vadd.f32 %v1730, %v1805
        %vm1809 = vcmp.eq.s32.totalorder %v1186, 8
        %v1810 = vsel %vm1809, %v1182, 0.0
        %s1811 = scalar_lea.vmem [#allocation14], 64
        %v1812 = vld [vmem:[%s1811] sm:$0xff]
        %v1814 = vsel %vm1194, %v1812, 0
        %1816 = vmatprep.subr.mxu0 0.0
        %1817 = vmatpush1.msra.mxu0 0.0
        %1818 = vmatprep.subr.mxu0 0.0
        %1819 = vmatpush1.msra.mxu0 0.0
        %1820 = vmatprep.subr.mxu0 0.0
        %1821 = vmatpush1.msra.mxu0 0.0
        %1822 = vmatprep.subr.mxu0 0.0
        %1823 = vmatpush1.msra.mxu0 0.0
        %1824 = vmatprep.subr.mxu0 0.0
        %1825 = vmatpush1.msra.mxu0 0.0
        %1826 = vmatprep.subr.mxu0 0.0
        %1827 = vmatpush1.msra.mxu0 0.0
        %1828 = vmatprep.subr.mxu0 0.0
        %1829 = vmatpush1.msra.mxu0 0.0
        %1830 = vmatprep.subr.mxu0 0.0
        %1831 = vmatpush1.msra.mxu0 0.0
        %1832 = vmatprep.subr.mxu0 0.0
        %1833 = vmatpush1.msra.mxu0 0.0
        %1834 = vmatprep.subr.mxu0 0.0
        %1835 = vmatpush1.msra.mxu0 0.0
        %1836 = vmatprep.subr.mxu0 0.0
        %1837 = vmatpush1.msra.mxu0 0.0
        %1838 = vmatprep.subr.mxu0 0.0
        %1839 = vmatpush1.msra.mxu0 0.0
        %1840 = vmatprep.subr.mxu0 0.0
        %1841 = vmatpush1.msra.mxu0 0.0
        %1842 = vmatprep.subr.mxu0 0.0
        %1843 = vmatpush1.msra.mxu0 0.0
        %1844 = vmatprep.subr.mxu0 0.0
        %1845 = vmatpush1.msra.mxu0 0.0
        %1846 = vmatprep.subr.mxu0 0.0
        %1847 = vmatpush1.msra.mxu0 %v1810
        %1848 = vmatprep.subr.mxu0 0.0
        %1849 = vmatpush2.msra.mxu0 0.0
        %1850 = vmatprep.subr.mxu0 0.0
        %1851 = vmatpush2.msra.mxu0 0.0
        %1852 = vmatprep.subr.mxu0 0.0
        %1853 = vmatpush2.msra.mxu0 0.0
        %1854 = vmatprep.subr.mxu0 0.0
        %1855 = vmatpush2.msra.mxu0 0.0
        %1856 = vmatprep.subr.mxu0 0.0
        %1857 = vmatpush2.msra.mxu0 0.0
        %1858 = vmatprep.subr.mxu0 0.0
        %1859 = vmatpush2.msra.mxu0 0.0
        %1860 = vmatprep.subr.mxu0 0.0
        %1861 = vmatpush2.msra.mxu0 0.0
        %1862 = vmatprep.subr.mxu0 0.0
        %1863 = vmatpush2.msra.mxu0 0.0
        %1864 = vmatprep.subr.mxu0 0.0
        %1865 = vmatpush2.msra.mxu0 0.0
        %1866 = vmatprep.subr.mxu0 0.0
        %1867 = vmatpush2.msra.mxu0 0.0
        %1868 = vmatprep.subr.mxu0 0.0
        %1869 = vmatpush2.msra.mxu0 0.0
        %1870 = vmatprep.subr.mxu0 0.0
        %1871 = vmatpush2.msra.mxu0 0.0
        %1872 = vmatprep.subr.mxu0 0.0
        %1873 = vmatpush2.msra.mxu0 0.0
        %1874 = vmatprep.subr.mxu0 0.0
        %1875 = vmatpush2.msra.mxu0 0.0
        %1876 = vmatprep.subr.mxu0 0.0
        %1877 = vmatpush2.msra.mxu0 0.0
        %1878 = vmatprep.subr.mxu0 0.0
        %1879 = vmatpush2.msra.mxu0 0.0
        %1880 = vmatprep.mubr.f32.mxu0 0.0
        %1881 = vmatmul.mubr.f32.gmra.mxu0 %v1814
        %v1882 = vpop.f32.mrf.mxu0
        %v1883 = vadd.f32 0.0, %v1882
        %v1884 = vpop.f32.mrf.mxu0
        %1885 = vdwg.mxu0
        %v1886 = vadd.f32 %v1808, %v1883
        %vm1887 = vcmp.eq.s32.totalorder %v1186, 9
        %v1888 = vsel %vm1887, %v1182, 0.0
        %s1889 = scalar_lea.vmem [#allocation14], 72
        %v1890 = vld [vmem:[%s1889] sm:$0xff]
        %v1892 = vsel %vm1194, %v1890, 0
        %1894 = vmatprep.subr.mxu0 0.0
        %1895 = vmatpush1.msra.mxu0 0.0
        %1896 = vmatprep.subr.mxu0 0.0
        %1897 = vmatpush1.msra.mxu0 0.0
        %1898 = vmatprep.subr.mxu0 0.0
        %1899 = vmatpush1.msra.mxu0 0.0
        %1900 = vmatprep.subr.mxu0 0.0
        %1901 = vmatpush1.msra.mxu0 0.0
        %1902 = vmatprep.subr.mxu0 0.0
        %1903 = vmatpush1.msra.mxu0 0.0
        %1904 = vmatprep.subr.mxu0 0.0
        %1905 = vmatpush1.msra.mxu0 0.0
        %1906 = vmatprep.subr.mxu0 0.0
        %1907 = vmatpush1.msra.mxu0 0.0
        %1908 = vmatprep.subr.mxu0 0.0
        %1909 = vmatpush1.msra.mxu0 0.0
        %1910 = vmatprep.subr.mxu0 0.0
        %1911 = vmatpush1.msra.mxu0 0.0
        %1912 = vmatprep.subr.mxu0 0.0
        %1913 = vmatpush1.msra.mxu0 0.0
        %1914 = vmatprep.subr.mxu0 0.0
        %1915 = vmatpush1.msra.mxu0 0.0
        %1916 = vmatprep.subr.mxu0 0.0
        %1917 = vmatpush1.msra.mxu0 0.0
        %1918 = vmatprep.subr.mxu0 0.0
        %1919 = vmatpush1.msra.mxu0 0.0
        %1920 = vmatprep.subr.mxu0 0.0
        %1921 = vmatpush1.msra.mxu0 0.0
        %1922 = vmatprep.subr.mxu0 0.0
        %1923 = vmatpush1.msra.mxu0 0.0
        %1924 = vmatprep.subr.mxu0 0.0
        %1925 = vmatpush1.msra.mxu0 %v1888
        %1926 = vmatprep.subr.mxu0 0.0
        %1927 = vmatpush2.msra.mxu0 0.0
        %1928 = vmatprep.subr.mxu0 0.0
        %1929 = vmatpush2.msra.mxu0 0.0
        %1930 = vmatprep.subr.mxu0 0.0
        %1931 = vmatpush2.msra.mxu0 0.0
        %1932 = vmatprep.subr.mxu0 0.0
        %1933 = vmatpush2.msra.mxu0 0.0
        %1934 = vmatprep.subr.mxu0 0.0
        %1935 = vmatpush2.msra.mxu0 0.0
        %1936 = vmatprep.subr.mxu0 0.0
        %1937 = vmatpush2.msra.mxu0 0.0
        %1938 = vmatprep.subr.mxu0 0.0
        %1939 = vmatpush2.msra.mxu0 0.0
        %1940 = vmatprep.subr.mxu0 0.0
        %1941 = vmatpush2.msra.mxu0 0.0
        %1942 = vmatprep.subr.mxu0 0.0
        %1943 = vmatpush2.msra.mxu0 0.0
        %1944 = vmatprep.subr.mxu0 0.0
        %1945 = vmatpush2.msra.mxu0 0.0
        %1946 = vmatprep.subr.mxu0 0.0
        %1947 = vmatpush2.msra.mxu0 0.0
        %1948 = vmatprep.subr.mxu0 0.0
        %1949 = vmatpush2.msra.mxu0 0.0
        %1950 = vmatprep.subr.mxu0 0.0
        %1951 = vmatpush2.msra.mxu0 0.0
        %1952 = vmatprep.subr.mxu0 0.0
        %1953 = vmatpush2.msra.mxu0 0.0
        %1954 = vmatprep.subr.mxu0 0.0
        %1955 = vmatpush2.msra.mxu0 0.0
        %1956 = vmatprep.subr.mxu0 0.0
        %1957 = vmatpush2.msra.mxu0 0.0
        %1958 = vmatprep.mubr.f32.mxu0 0.0
        %1959 = vmatmul.mubr.f32.gmra.mxu0 %v1892
        %v1960 = vpop.f32.mrf.mxu0
        %v1961 = vadd.f32 0.0, %v1960
        %v1962 = vpop.f32.mrf.mxu0
        %1963 = vdwg.mxu0
        %v1964 = vadd.f32 %v1886, %v1961
        %vm1965 = vcmp.eq.s32.totalorder %v1186, 10
        %v1966 = vsel %vm1965, %v1182, 0.0
        %s1967 = scalar_lea.vmem [#allocation14], 80
        %v1968 = vld [vmem:[%s1967] sm:$0xff]
        %v1970 = vsel %vm1194, %v1968, 0
        %1972 = vmatprep.subr.mxu0 0.0
        %1973 = vmatpush1.msra.mxu0 0.0
        %1974 = vmatprep.subr.mxu0 0.0
        %1975 = vmatpush1.msra.mxu0 0.0
        %1976 = vmatprep.subr.mxu0 0.0
        %1977 = vmatpush1.msra.mxu0 0.0
        %1978 = vmatprep.subr.mxu0 0.0
        %1979 = vmatpush1.msra.mxu0 0.0
        %1980 = vmatprep.subr.mxu0 0.0
        %1981 = vmatpush1.msra.mxu0 0.0
        %1982 = vmatprep.subr.mxu0 0.0
        %1983 = vmatpush1.msra.mxu0 0.0
        %1984 = vmatprep.subr.mxu0 0.0
        %1985 = vmatpush1.msra.mxu0 0.0
        %1986 = vmatprep.subr.mxu0 0.0
        %1987 = vmatpush1.msra.mxu0 0.0
        %1988 = vmatprep.subr.mxu0 0.0
        %1989 = vmatpush1.msra.mxu0 0.0
        %1990 = vmatprep.subr.mxu0 0.0
        %1991 = vmatpush1.msra.mxu0 0.0
        %1992 = vmatprep.subr.mxu0 0.0
        %1993 = vmatpush1.msra.mxu0 0.0
        %1994 = vmatprep.subr.mxu0 0.0
        %1995 = vmatpush1.msra.mxu0 0.0
        %1996 = vmatprep.subr.mxu0 0.0
        %1997 = vmatpush1.msra.mxu0 0.0
        %1998 = vmatprep.subr.mxu0 0.0
        %1999 = vmatpush1.msra.mxu0 0.0
        %2000 = vmatprep.subr.mxu0 0.0
        %2001 = vmatpush1.msra.mxu0 0.0
        %2002 = vmatprep.subr.mxu0 0.0
        %2003 = vmatpush1.msra.mxu0 %v1966
        %2004 = vmatprep.subr.mxu0 0.0
        %2005 = vmatpush2.msra.mxu0 0.0
        %2006 = vmatprep.subr.mxu0 0.0
        %2007 = vmatpush2.msra.mxu0 0.0
        %2008 = vmatprep.subr.mxu0 0.0
        %2009 = vmatpush2.msra.mxu0 0.0
        %2010 = vmatprep.subr.mxu0 0.0
        %2011 = vmatpush2.msra.mxu0 0.0
        %2012 = vmatprep.subr.mxu0 0.0
        %2013 = vmatpush2.msra.mxu0 0.0
        %2014 = vmatprep.subr.mxu0 0.0
        %2015 = vmatpush2.msra.mxu0 0.0
        %2016 = vmatprep.subr.mxu0 0.0
        %2017 = vmatpush2.msra.mxu0 0.0
        %2018 = vmatprep.subr.mxu0 0.0
        %2019 = vmatpush2.msra.mxu0 0.0
        %2020 = vmatprep.subr.mxu0 0.0
        %2021 = vmatpush2.msra.mxu0 0.0
        %2022 = vmatprep.subr.mxu0 0.0
        %2023 = vmatpush2.msra.mxu0 0.0
        %2024 = vmatprep.subr.mxu0 0.0
        %2025 = vmatpush2.msra.mxu0 0.0
        %2026 = vmatprep.subr.mxu0 0.0
        %2027 = vmatpush2.msra.mxu0 0.0
        %2028 = vmatprep.subr.mxu0 0.0
        %2029 = vmatpush2.msra.mxu0 0.0
        %2030 = vmatprep.subr.mxu0 0.0
        %2031 = vmatpush2.msra.mxu0 0.0
        %2032 = vmatprep.subr.mxu0 0.0
        %2033 = vmatpush2.msra.mxu0 0.0
        %2034 = vmatprep.subr.mxu0 0.0
        %2035 = vmatpush2.msra.mxu0 0.0
        %2036 = vmatprep.mubr.f32.mxu0 0.0
        %2037 = vmatmul.mubr.f32.gmra.mxu0 %v1970
        %v2038 = vpop.f32.mrf.mxu0
        %v2039 = vadd.f32 0.0, %v2038
        %v2040 = vpop.f32.mrf.mxu0
        %2041 = vdwg.mxu0
        %v2042 = vadd.f32 %v1964, %v2039
        %vm2043 = vcmp.eq.s32.totalorder %v1186, 11
        %v2044 = vsel %vm2043, %v1182, 0.0
        %s2045 = scalar_lea.vmem [#allocation14], 88
        %v2046 = vld [vmem:[%s2045] sm:$0xff]
        %v2048 = vsel %vm1194, %v2046, 0
        %2050 = vmatprep.subr.mxu0 0.0
        %2051 = vmatpush1.msra.mxu0 0.0
        %2052 = vmatprep.subr.mxu0 0.0
        %2053 = vmatpush1.msra.mxu0 0.0
        %2054 = vmatprep.subr.mxu0 0.0
        %2055 = vmatpush1.msra.mxu0 0.0
        %2056 = vmatprep.subr.mxu0 0.0
        %2057 = vmatpush1.msra.mxu0 0.0
        %2058 = vmatprep.subr.mxu0 0.0
        %2059 = vmatpush1.msra.mxu0 0.0
        %2060 = vmatprep.subr.mxu0 0.0
        %2061 = vmatpush1.msra.mxu0 0.0
        %2062 = vmatprep.subr.mxu0 0.0
        %2063 = vmatpush1.msra.mxu0 0.0
        %2064 = vmatprep.subr.mxu0 0.0
        %2065 = vmatpush1.msra.mxu0 0.0
        %2066 = vmatprep.subr.mxu0 0.0
        %2067 = vmatpush1.msra.mxu0 0.0
        %2068 = vmatprep.subr.mxu0 0.0
        %2069 = vmatpush1.msra.mxu0 0.0
        %2070 = vmatprep.subr.mxu0 0.0
        %2071 = vmatpush1.msra.mxu0 0.0
        %2072 = vmatprep.subr.mxu0 0.0
        %2073 = vmatpush1.msra.mxu0 0.0
        %2074 = vmatprep.subr.mxu0 0.0
        %2075 = vmatpush1.msra.mxu0 0.0
        %2076 = vmatprep.subr.mxu0 0.0
        %2077 = vmatpush1.msra.mxu0 0.0
        %2078 = vmatprep.subr.mxu0 0.0
        %2079 = vmatpush1.msra.mxu0 0.0
        %2080 = vmatprep.subr.mxu0 0.0
        %2081 = vmatpush1.msra.mxu0 %v2044
        %2082 = vmatprep.subr.mxu0 0.0
        %2083 = vmatpush2.msra.mxu0 0.0
        %2084 = vmatprep.subr.mxu0 0.0
        %2085 = vmatpush2.msra.mxu0 0.0
        %2086 = vmatprep.subr.mxu0 0.0
        %2087 = vmatpush2.msra.mxu0 0.0
        %2088 = vmatprep.subr.mxu0 0.0
        %2089 = vmatpush2.msra.mxu0 0.0
        %2090 = vmatprep.subr.mxu0 0.0
        %2091 = vmatpush2.msra.mxu0 0.0
        %2092 = vmatprep.subr.mxu0 0.0
        %2093 = vmatpush2.msra.mxu0 0.0
        %2094 = vmatprep.subr.mxu0 0.0
        %2095 = vmatpush2.msra.mxu0 0.0
        %2096 = vmatprep.subr.mxu0 0.0
        %2097 = vmatpush2.msra.mxu0 0.0
        %2098 = vmatprep.subr.mxu0 0.0
        %2099 = vmatpush2.msra.mxu0 0.0
        %2100 = vmatprep.subr.mxu0 0.0
        %2101 = vmatpush2.msra.mxu0 0.0
        %2102 = vmatprep.subr.mxu0 0.0
        %2103 = vmatpush2.msra.mxu0 0.0
        %2104 = vmatprep.subr.mxu0 0.0
        %2105 = vmatpush2.msra.mxu0 0.0
        %2106 = vmatprep.subr.mxu0 0.0
        %2107 = vmatpush2.msra.mxu0 0.0
        %2108 = vmatprep.subr.mxu0 0.0
        %2109 = vmatpush2.msra.mxu0 0.0
        %2110 = vmatprep.subr.mxu0 0.0
        %2111 = vmatpush2.msra.mxu0 0.0
        %2112 = vmatprep.subr.mxu0 0.0
        %2113 = vmatpush2.msra.mxu0 0.0
        %2114 = vmatprep.mubr.f32.mxu0 0.0
        %2115 = vmatmul.mubr.f32.gmra.mxu0 %v2048
        %v2116 = vpop.f32.mrf.mxu0
        %v2117 = vadd.f32 0.0, %v2116
        %v2118 = vpop.f32.mrf.mxu0
        %2119 = vdwg.mxu0
        %v2120 = vadd.f32 %v2042, %v2117
        %vm2121 = vcmp.eq.s32.totalorder %v1186, 12
        %v2122 = vsel %vm2121, %v1182, 0.0
        %s2123 = scalar_lea.vmem [#allocation14], 96
        %v2124 = vld [vmem:[%s2123] sm:$0xff]
        %v2126 = vsel %vm1194, %v2124, 0
        %2128 = vmatprep.subr.mxu0 0.0
        %2129 = vmatpush1.msra.mxu0 0.0
        %2130 = vmatprep.subr.mxu0 0.0
        %2131 = vmatpush1.msra.mxu0 0.0
        %2132 = vmatprep.subr.mxu0 0.0
        %2133 = vmatpush1.msra.mxu0 0.0
        %2134 = vmatprep.subr.mxu0 0.0
        %2135 = vmatpush1.msra.mxu0 0.0
        %2136 = vmatprep.subr.mxu0 0.0
        %2137 = vmatpush1.msra.mxu0 0.0
        %2138 = vmatprep.subr.mxu0 0.0
        %2139 = vmatpush1.msra.mxu0 0.0
        %2140 = vmatprep.subr.mxu0 0.0
        %2141 = vmatpush1.msra.mxu0 0.0
        %2142 = vmatprep.subr.mxu0 0.0
        %2143 = vmatpush1.msra.mxu0 0.0
        %2144 = vmatprep.subr.mxu0 0.0
        %2145 = vmatpush1.msra.mxu0 0.0
        %2146 = vmatprep.subr.mxu0 0.0
        %2147 = vmatpush1.msra.mxu0 0.0
        %2148 = vmatprep.subr.mxu0 0.0
        %2149 = vmatpush1.msra.mxu0 0.0
        %2150 = vmatprep.subr.mxu0 0.0
        %2151 = vmatpush1.msra.mxu0 0.0
        %2152 = vmatprep.subr.mxu0 0.0
        %2153 = vmatpush1.msra.mxu0 0.0
        %2154 = vmatprep.subr.mxu0 0.0
        %2155 = vmatpush1.msra.mxu0 0.0
        %2156 = vmatprep.subr.mxu0 0.0
        %2157 = vmatpush1.msra.mxu0 0.0
        %2158 = vmatprep.subr.mxu0 0.0
        %2159 = vmatpush1.msra.mxu0 %v2122
        %2160 = vmatprep.subr.mxu0 0.0
        %2161 = vmatpush2.msra.mxu0 0.0
        %2162 = vmatprep.subr.mxu0 0.0
        %2163 = vmatpush2.msra.mxu0 0.0
        %2164 = vmatprep.subr.mxu0 0.0
        %2165 = vmatpush2.msra.mxu0 0.0
        %2166 = vmatprep.subr.mxu0 0.0
        %2167 = vmatpush2.msra.mxu0 0.0
        %2168 = vmatprep.subr.mxu0 0.0
        %2169 = vmatpush2.msra.mxu0 0.0
        %2170 = vmatprep.subr.mxu0 0.0
        %2171 = vmatpush2.msra.mxu0 0.0
        %2172 = vmatprep.subr.mxu0 0.0
        %2173 = vmatpush2.msra.mxu0 0.0
        %2174 = vmatprep.subr.mxu0 0.0
        %2175 = vmatpush2.msra.mxu0 0.0
        %2176 = vmatprep.subr.mxu0 0.0
        %2177 = vmatpush2.msra.mxu0 0.0
        %2178 = vmatprep.subr.mxu0 0.0
        %2179 = vmatpush2.msra.mxu0 0.0
        %2180 = vmatprep.subr.mxu0 0.0
        %2181 = vmatpush2.msra.mxu0 0.0
        %2182 = vmatprep.subr.mxu0 0.0
        %2183 = vmatpush2.msra.mxu0 0.0
        %2184 = vmatprep.subr.mxu0 0.0
        %2185 = vmatpush2.msra.mxu0 0.0
        %2186 = vmatprep.subr.mxu0 0.0
        %2187 = vmatpush2.msra.mxu0 0.0
        %2188 = vmatprep.subr.mxu0 0.0
        %2189 = vmatpush2.msra.mxu0 0.0
        %2190 = vmatprep.subr.mxu0 0.0
        %2191 = vmatpush2.msra.mxu0 0.0
        %2192 = vmatprep.mubr.f32.mxu0 0.0
        %2193 = vmatmul.mubr.f32.gmra.mxu0 %v2126
        %v2194 = vpop.f32.mrf.mxu0
        %v2195 = vadd.f32 0.0, %v2194
        %v2196 = vpop.f32.mrf.mxu0
        %2197 = vdwg.mxu0
        %v2198 = vadd.f32 %v2120, %v2195
        %vm2199 = vcmp.eq.s32.totalorder %v1186, 13
        %v2200 = vsel %vm2199, %v1182, 0.0
        %s2201 = scalar_lea.vmem [#allocation14], 104
        %v2202 = vld [vmem:[%s2201] sm:$0xff]
        %v2204 = vsel %vm1194, %v2202, 0
        %2206 = vmatprep.subr.mxu0 0.0
        %2207 = vmatpush1.msra.mxu0 0.0
        %2208 = vmatprep.subr.mxu0 0.0
        %2209 = vmatpush1.msra.mxu0 0.0
        %2210 = vmatprep.subr.mxu0 0.0
        %2211 = vmatpush1.msra.mxu0 0.0
        %2212 = vmatprep.subr.mxu0 0.0
        %2213 = vmatpush1.msra.mxu0 0.0
        %2214 = vmatprep.subr.mxu0 0.0
        %2215 = vmatpush1.msra.mxu0 0.0
        %2216 = vmatprep.subr.mxu0 0.0
        %2217 = vmatpush1.msra.mxu0 0.0
        %2218 = vmatprep.subr.mxu0 0.0
        %2219 = vmatpush1.msra.mxu0 0.0
        %2220 = vmatprep.subr.mxu0 0.0
        %2221 = vmatpush1.msra.mxu0 0.0
        %2222 = vmatprep.subr.mxu0 0.0
        %2223 = vmatpush1.msra.mxu0 0.0
        %2224 = vmatprep.subr.mxu0 0.0
        %2225 = vmatpush1.msra.mxu0 0.0
        %2226 = vmatprep.subr.mxu0 0.0
        %2227 = vmatpush1.msra.mxu0 0.0
        %2228 = vmatprep.subr.mxu0 0.0
        %2229 = vmatpush1.msra.mxu0 0.0
        %2230 = vmatprep.subr.mxu0 0.0
        %2231 = vmatpush1.msra.mxu0 0.0
        %2232 = vmatprep.subr.mxu0 0.0
        %2233 = vmatpush1.msra.mxu0 0.0
        %2234 = vmatprep.subr.mxu0 0.0
        %2235 = vmatpush1.msra.mxu0 0.0
        %2236 = vmatprep.subr.mxu0 0.0
        %2237 = vmatpush1.msra.mxu0 %v2200
        %2238 = vmatprep.subr.mxu0 0.0
        %2239 = vmatpush2.msra.mxu0 0.0
        %2240 = vmatprep.subr.mxu0 0.0
        %2241 = vmatpush2.msra.mxu0 0.0
        %2242 = vmatprep.subr.mxu0 0.0
        %2243 = vmatpush2.msra.mxu0 0.0
        %2244 = vmatprep.subr.mxu0 0.0
        %2245 = vmatpush2.msra.mxu0 0.0
        %2246 = vmatprep.subr.mxu0 0.0
        %2247 = vmatpush2.msra.mxu0 0.0
        %2248 = vmatprep.subr.mxu0 0.0
        %2249 = vmatpush2.msra.mxu0 0.0
        %2250 = vmatprep.subr.mxu0 0.0
        %2251 = vmatpush2.msra.mxu0 0.0
        %2252 = vmatprep.subr.mxu0 0.0
        %2253 = vmatpush2.msra.mxu0 0.0
        %2254 = vmatprep.subr.mxu0 0.0
        %2255 = vmatpush2.msra.mxu0 0.0
        %2256 = vmatprep.subr.mxu0 0.0
        %2257 = vmatpush2.msra.mxu0 0.0
        %2258 = vmatprep.subr.mxu0 0.0
        %2259 = vmatpush2.msra.mxu0 0.0
        %2260 = vmatprep.subr.mxu0 0.0
        %2261 = vmatpush2.msra.mxu0 0.0
        %2262 = vmatprep.subr.mxu0 0.0
        %2263 = vmatpush2.msra.mxu0 0.0
        %2264 = vmatprep.subr.mxu0 0.0
        %2265 = vmatpush2.msra.mxu0 0.0
        %2266 = vmatprep.subr.mxu0 0.0
        %2267 = vmatpush2.msra.mxu0 0.0
        %2268 = vmatprep.subr.mxu0 0.0
        %2269 = vmatpush2.msra.mxu0 0.0
        %2270 = vmatprep.mubr.f32.mxu0 0.0
        %2271 = vmatmul.mubr.f32.gmra.mxu0 %v2204
        %v2272 = vpop.f32.mrf.mxu0
        %v2273 = vadd.f32 0.0, %v2272
        %v2274 = vpop.f32.mrf.mxu0
        %2275 = vdwg.mxu0
        %v2276 = vadd.f32 %v2198, %v2273
        %vm2277 = vcmp.eq.s32.totalorder %v1186, 14
        %v2278 = vsel %vm2277, %v1182, 0.0
        %s2279 = scalar_lea.vmem [#allocation14], 112
        %v2280 = vld [vmem:[%s2279] sm:$0xff]
        %v2282 = vsel %vm1194, %v2280, 0
        %2284 = vmatprep.subr.mxu0 0.0
        %2285 = vmatpush1.msra.mxu0 0.0
        %2286 = vmatprep.subr.mxu0 0.0
        %2287 = vmatpush1.msra.mxu0 0.0
        %2288 = vmatprep.subr.mxu0 0.0
        %2289 = vmatpush1.msra.mxu0 0.0
        %2290 = vmatprep.subr.mxu0 0.0
        %2291 = vmatpush1.msra.mxu0 0.0
        %2292 = vmatprep.subr.mxu0 0.0
        %2293 = vmatpush1.msra.mxu0 0.0
        %2294 = vmatprep.subr.mxu0 0.0
        %2295 = vmatpush1.msra.mxu0 0.0
        %2296 = vmatprep.subr.mxu0 0.0
        %2297 = vmatpush1.msra.mxu0 0.0
        %2298 = vmatprep.subr.mxu0 0.0
        %2299 = vmatpush1.msra.mxu0 0.0
        %2300 = vmatprep.subr.mxu0 0.0
        %2301 = vmatpush1.msra.mxu0 0.0
        %2302 = vmatprep.subr.mxu0 0.0
        %2303 = vmatpush1.msra.mxu0 0.0
        %2304 = vmatprep.subr.mxu0 0.0
        %2305 = vmatpush1.msra.mxu0 0.0
        %2306 = vmatprep.subr.mxu0 0.0
        %2307 = vmatpush1.msra.mxu0 0.0
        %2308 = vmatprep.subr.mxu0 0.0
        %2309 = vmatpush1.msra.mxu0 0.0
        %2310 = vmatprep.subr.mxu0 0.0
        %2311 = vmatpush1.msra.mxu0 0.0
        %2312 = vmatprep.subr.mxu0 0.0
        %2313 = vmatpush1.msra.mxu0 0.0
        %2314 = vmatprep.subr.mxu0 0.0
        %2315 = vmatpush1.msra.mxu0 %v2278
        %2316 = vmatprep.subr.mxu0 0.0
        %2317 = vmatpush2.msra.mxu0 0.0
        %2318 = vmatprep.subr.mxu0 0.0
        %2319 = vmatpush2.msra.mxu0 0.0
        %2320 = vmatprep.subr.mxu0 0.0
        %2321 = vmatpush2.msra.mxu0 0.0
        %2322 = vmatprep.subr.mxu0 0.0
        %2323 = vmatpush2.msra.mxu0 0.0
        %2324 = vmatprep.subr.mxu0 0.0
        %2325 = vmatpush2.msra.mxu0 0.0
        %2326 = vmatprep.subr.mxu0 0.0
        %2327 = vmatpush2.msra.mxu0 0.0
        %2328 = vmatprep.subr.mxu0 0.0
        %2329 = vmatpush2.msra.mxu0 0.0
        %2330 = vmatprep.subr.mxu0 0.0
        %2331 = vmatpush2.msra.mxu0 0.0
        %2332 = vmatprep.subr.mxu0 0.0
        %2333 = vmatpush2.msra.mxu0 0.0
        %2334 = vmatprep.subr.mxu0 0.0
        %2335 = vmatpush2.msra.mxu0 0.0
        %2336 = vmatprep.subr.mxu0 0.0
        %2337 = vmatpush2.msra.mxu0 0.0
        %2338 = vmatprep.subr.mxu0 0.0
        %2339 = vmatpush2.msra.mxu0 0.0
        %2340 = vmatprep.subr.mxu0 0.0
        %2341 = vmatpush2.msra.mxu0 0.0
        %2342 = vmatprep.subr.mxu0 0.0
        %2343 = vmatpush2.msra.mxu0 0.0
        %2344 = vmatprep.subr.mxu0 0.0
        %2345 = vmatpush2.msra.mxu0 0.0
        %2346 = vmatprep.subr.mxu0 0.0
        %2347 = vmatpush2.msra.mxu0 0.0
        %2348 = vmatprep.mubr.f32.mxu0 0.0
        %2349 = vmatmul.mubr.f32.gmra.mxu0 %v2282
        %v2350 = vpop.f32.mrf.mxu0
        %v2351 = vadd.f32 0.0, %v2350
        %v2352 = vpop.f32.mrf.mxu0
        %2353 = vdwg.mxu0
        %v2354 = vadd.f32 %v2276, %v2351
        %vm2355 = vcmp.eq.s32.totalorder %v1186, 15
        %v2356 = vsel %vm2355, %v1182, 0.0
        %s2357 = scalar_lea.vmem [#allocation14], 120
        %v2358 = vld [vmem:[%s2357] sm:$0xff]
        %v2360 = vsel %vm1194, %v2358, 0
        %2362 = vmatprep.subr.mxu0 0.0
        %2363 = vmatpush1.msra.mxu0 0.0
        %2364 = vmatprep.subr.mxu0 0.0
        %2365 = vmatpush1.msra.mxu0 0.0
        %2366 = vmatprep.subr.mxu0 0.0
        %2367 = vmatpush1.msra.mxu0 0.0
        %2368 = vmatprep.subr.mxu0 0.0
        %2369 = vmatpush1.msra.mxu0 0.0
        %2370 = vmatprep.subr.mxu0 0.0
        %2371 = vmatpush1.msra.mxu0 0.0
        %2372 = vmatprep.subr.mxu0 0.0
        %2373 = vmatpush1.msra.mxu0 0.0
        %2374 = vmatprep.subr.mxu0 0.0
        %2375 = vmatpush1.msra.mxu0 0.0
        %2376 = vmatprep.subr.mxu0 0.0
        %2377 = vmatpush1.msra.mxu0 0.0
        %2378 = vmatprep.subr.mxu0 0.0
        %2379 = vmatpush1.msra.mxu0 0.0
        %2380 = vmatprep.subr.mxu0 0.0
        %2381 = vmatpush1.msra.mxu0 0.0
        %2382 = vmatprep.subr.mxu0 0.0
        %2383 = vmatpush1.msra.mxu0 0.0
        %2384 = vmatprep.subr.mxu0 0.0
        %2385 = vmatpush1.msra.mxu0 0.0
        %2386 = vmatprep.subr.mxu0 0.0
        %2387 = vmatpush1.msra.mxu0 0.0
        %2388 = vmatprep.subr.mxu0 0.0
        %2389 = vmatpush1.msra.mxu0 0.0
        %2390 = vmatprep.subr.mxu0 0.0
        %2391 = vmatpush1.msra.mxu0 0.0
        %2392 = vmatprep.subr.mxu0 0.0
        %2393 = vmatpush1.msra.mxu0 %v2356
        %2394 = vmatprep.subr.mxu0 0.0
        %2395 = vmatpush2.msra.mxu0 0.0
        %2396 = vmatprep.subr.mxu0 0.0
        %2397 = vmatpush2.msra.mxu0 0.0
        %2398 = vmatprep.subr.mxu0 0.0
        %2399 = vmatpush2.msra.mxu0 0.0
        %2400 = vmatprep.subr.mxu0 0.0
        %2401 = vmatpush2.msra.mxu0 0.0
        %2402 = vmatprep.subr.mxu0 0.0
        %2403 = vmatpush2.msra.mxu0 0.0
        %2404 = vmatprep.subr.mxu0 0.0
        %2405 = vmatpush2.msra.mxu0 0.0
        %2406 = vmatprep.subr.mxu0 0.0
        %2407 = vmatpush2.msra.mxu0 0.0
        %2408 = vmatprep.subr.mxu0 0.0
        %2409 = vmatpush2.msra.mxu0 0.0
        %2410 = vmatprep.subr.mxu0 0.0
        %2411 = vmatpush2.msra.mxu0 0.0
        %2412 = vmatprep.subr.mxu0 0.0
        %2413 = vmatpush2.msra.mxu0 0.0
        %2414 = vmatprep.subr.mxu0 0.0
        %2415 = vmatpush2.msra.mxu0 0.0
        %2416 = vmatprep.subr.mxu0 0.0
        %2417 = vmatpush2.msra.mxu0 0.0
        %2418 = vmatprep.subr.mxu0 0.0
        %2419 = vmatpush2.msra.mxu0 0.0
        %2420 = vmatprep.subr.mxu0 0.0
        %2421 = vmatpush2.msra.mxu0 0.0
        %2422 = vmatprep.subr.mxu0 0.0
        %2423 = vmatpush2.msra.mxu0 0.0
        %2424 = vmatprep.subr.mxu0 0.0
        %2425 = vmatpush2.msra.mxu0 0.0
        %2426 = vmatprep.mubr.f32.mxu0 0.0
        %2427 = vmatmul.mubr.f32.gmra.mxu0 %v2360
        %v2428 = vpop.f32.mrf.mxu0
        %v2429 = vadd.f32 0.0, %v2428
        %v2430 = vpop.f32.mrf.mxu0
        %2431 = vdwg.mxu0
        %v2432 = vadd.f32 %v2354, %v2429
        %vm2433 = vcmp.eq.s32.totalorder %v1186, 16
        %v2434 = vsel %vm2433, %v1182, 0.0
        %s2435 = scalar_lea.vmem [#allocation14], 128
        %v2436 = vld [vmem:[%s2435] sm:$0xff]
        %v2438 = vsel %vm1194, %v2436, 0
        %2440 = vmatprep.subr.mxu0 0.0
        %2441 = vmatpush1.msra.mxu0 0.0
        %2442 = vmatprep.subr.mxu0 0.0
        %2443 = vmatpush1.msra.mxu0 0.0
        %2444 = vmatprep.subr.mxu0 0.0
        %2445 = vmatpush1.msra.mxu0 0.0
        %2446 = vmatprep.subr.mxu0 0.0
        %2447 = vmatpush1.msra.mxu0 0.0
        %2448 = vmatprep.subr.mxu0 0.0
        %2449 = vmatpush1.msra.mxu0 0.0
        %2450 = vmatprep.subr.mxu0 0.0
        %2451 = vmatpush1.msra.mxu0 0.0
        %2452 = vmatprep.subr.mxu0 0.0
        %2453 = vmatpush1.msra.mxu0 0.0
        %2454 = vmatprep.subr.mxu0 0.0
        %2455 = vmatpush1.msra.mxu0 0.0
        %2456 = vmatprep.subr.mxu0 0.0
        %2457 = vmatpush1.msra.mxu0 0.0
        %2458 = vmatprep.subr.mxu0 0.0
        %2459 = vmatpush1.msra.mxu0 0.0
        %2460 = vmatprep.subr.mxu0 0.0
        %2461 = vmatpush1.msra.mxu0 0.0
        %2462 = vmatprep.subr.mxu0 0.0
        %2463 = vmatpush1.msra.mxu0 0.0
        %2464 = vmatprep.subr.mxu0 0.0
        %2465 = vmatpush1.msra.mxu0 0.0
        %2466 = vmatprep.subr.mxu0 0.0
        %2467 = vmatpush1.msra.mxu0 0.0
        %2468 = vmatprep.subr.mxu0 0.0
        %2469 = vmatpush1.msra.mxu0 0.0
        %2470 = vmatprep.subr.mxu0 0.0
        %2471 = vmatpush1.msra.mxu0 %v2434
        %2472 = vmatprep.subr.mxu0 0.0
        %2473 = vmatpush2.msra.mxu0 0.0
        %2474 = vmatprep.subr.mxu0 0.0
        %2475 = vmatpush2.msra.mxu0 0.0
        %2476 = vmatprep.subr.mxu0 0.0
        %2477 = vmatpush2.msra.mxu0 0.0
        %2478 = vmatprep.subr.mxu0 0.0
        %2479 = vmatpush2.msra.mxu0 0.0
        %2480 = vmatprep.subr.mxu0 0.0
        %2481 = vmatpush2.msra.mxu0 0.0
        %2482 = vmatprep.subr.mxu0 0.0
        %2483 = vmatpush2.msra.mxu0 0.0
        %2484 = vmatprep.subr.mxu0 0.0
        %2485 = vmatpush2.msra.mxu0 0.0
        %2486 = vmatprep.subr.mxu0 0.0
        %2487 = vmatpush2.msra.mxu0 0.0
        %2488 = vmatprep.subr.mxu0 0.0
        %2489 = vmatpush2.msra.mxu0 0.0
        %2490 = vmatprep.subr.mxu0 0.0
        %2491 = vmatpush2.msra.mxu0 0.0
        %2492 = vmatprep.subr.mxu0 0.0
        %2493 = vmatpush2.msra.mxu0 0.0
        %2494 = vmatprep.subr.mxu0 0.0
        %2495 = vmatpush2.msra.mxu0 0.0
        %2496 = vmatprep.subr.mxu0 0.0
        %2497 = vmatpush2.msra.mxu0 0.0
        %2498 = vmatprep.subr.mxu0 0.0
        %2499 = vmatpush2.msra.mxu0 0.0
        %2500 = vmatprep.subr.mxu0 0.0
        %2501 = vmatpush2.msra.mxu0 0.0
        %2502 = vmatprep.subr.mxu0 0.0
        %2503 = vmatpush2.msra.mxu0 0.0
        %2504 = vmatprep.mubr.f32.mxu0 0.0
        %2505 = vmatmul.mubr.f32.gmra.mxu0 %v2438
        %v2506 = vpop.f32.mrf.mxu0
        %v2507 = vadd.f32 0.0, %v2506
        %v2508 = vpop.f32.mrf.mxu0
        %2509 = vdwg.mxu0
        %v2510 = vadd.f32 %v2432, %v2507
        %v2511 = vsel %vm1187, %v1109, 0.0
        %v2512 = vld [vmem:[#allocation16] sm:$0xff]
        %v2513 = vsel %vm1190, %v1109, 0.0
        %s2514 = scalar_lea.vmem [#allocation16], 8
        %v2515 = vld [vmem:[%s2514] sm:$0xff]
        %v2517 = vsel %vm1194, %v2515, 0
        %2519 = vmatprep.subr.mxu0 0.0
        %2520 = vmatpush1.msra.mxu0 0.0
        %2521 = vmatprep.subr.mxu0 0.0
        %2522 = vmatpush1.msra.mxu0 0.0
        %2523 = vmatprep.subr.mxu0 0.0
        %2524 = vmatpush1.msra.mxu0 0.0
        %2525 = vmatprep.subr.mxu0 0.0
        %2526 = vmatpush1.msra.mxu0 0.0
        %2527 = vmatprep.subr.mxu0 0.0
        %2528 = vmatpush1.msra.mxu0 0.0
        %2529 = vmatprep.subr.mxu0 0.0
        %2530 = vmatpush1.msra.mxu0 0.0
        %2531 = vmatprep.subr.mxu0 0.0
        %2532 = vmatpush1.msra.mxu0 0.0
        %2533 = vmatprep.subr.mxu0 0.0
        %2534 = vmatpush1.msra.mxu0 0.0
        %2535 = vmatprep.subr.mxu0 0.0
        %2536 = vmatpush1.msra.mxu0 0.0
        %2537 = vmatprep.subr.mxu0 0.0
        %2538 = vmatpush1.msra.mxu0 0.0
        %2539 = vmatprep.subr.mxu0 0.0
        %2540 = vmatpush1.msra.mxu0 0.0
        %2541 = vmatprep.subr.mxu0 0.0
        %2542 = vmatpush1.msra.mxu0 0.0
        %2543 = vmatprep.subr.mxu0 0.0
        %2544 = vmatpush1.msra.mxu0 0.0
        %2545 = vmatprep.subr.mxu0 0.0
        %2546 = vmatpush1.msra.mxu0 0.0
        %2547 = vmatprep.subr.mxu0 0.0
        %2548 = vmatpush1.msra.mxu0 0.0
        %2549 = vmatprep.subr.mxu0 0.0
        %2550 = vmatpush1.msra.mxu0 %v2513
        %2551 = vmatprep.subr.mxu0 0.0
        %2552 = vmatpush2.msra.mxu0 0.0
        %2553 = vmatprep.subr.mxu0 0.0
        %2554 = vmatpush2.msra.mxu0 0.0
        %2555 = vmatprep.subr.mxu0 0.0
        %2556 = vmatpush2.msra.mxu0 0.0
        %2557 = vmatprep.subr.mxu0 0.0
        %2558 = vmatpush2.msra.mxu0 0.0
        %2559 = vmatprep.subr.mxu0 0.0
        %2560 = vmatpush2.msra.mxu0 0.0
        %2561 = vmatprep.subr.mxu0 0.0
        %2562 = vmatpush2.msra.mxu0 0.0
        %2563 = vmatprep.subr.mxu0 0.0
        %2564 = vmatpush2.msra.mxu0 0.0
        %2565 = vmatprep.subr.mxu0 0.0
        %2566 = vmatpush2.msra.mxu0 0.0
        %2567 = vmatprep.subr.mxu0 0.0
        %2568 = vmatpush2.msra.mxu0 0.0
        %2569 = vmatprep.subr.mxu0 0.0
        %2570 = vmatpush2.msra.mxu0 0.0
        %2571 = vmatprep.subr.mxu0 0.0
        %2572 = vmatpush2.msra.mxu0 0.0
        %2573 = vmatprep.subr.mxu0 0.0
        %2574 = vmatpush2.msra.mxu0 0.0
        %2575 = vmatprep.subr.mxu0 0.0
        %2576 = vmatpush2.msra.mxu0 0.0
        %2577 = vmatprep.subr.mxu0 0.0
        %2578 = vmatpush2.msra.mxu0 0.0
        %2579 = vmatprep.subr.mxu0 0.0
        %2580 = vmatpush2.msra.mxu0 0.0
        %2581 = vmatprep.subr.mxu0 0.0
        %2582 = vmatpush2.msra.mxu0 0.0
        %2583 = vmatprep.mubr.f32.mxu0 0.0
        %2584 = vmatmul.mubr.f32.gmra.mxu0 %v2517
        %v2585 = vpop.f32.mrf.mxu0
        %v2586 = vadd.f32 0.0, %v2585
        %v2587 = vpop.f32.mrf.mxu0
        %2588 = vdwg.mxu0
        %v2590 = vsel %vm1194, %v2512, 0
        %2592 = vmatprep.subr.mxu0 0.0
        %2593 = vmatpush1.msra.mxu0 0.0
        %2594 = vmatprep.subr.mxu0 0.0
        %2595 = vmatpush1.msra.mxu0 0.0
        %2596 = vmatprep.subr.mxu0 0.0
        %2597 = vmatpush1.msra.mxu0 0.0
        %2598 = vmatprep.subr.mxu0 0.0
        %2599 = vmatpush1.msra.mxu0 0.0
        %2600 = vmatprep.subr.mxu0 0.0
        %2601 = vmatpush1.msra.mxu0 0.0
        %2602 = vmatprep.subr.mxu0 0.0
        %2603 = vmatpush1.msra.mxu0 0.0
        %2604 = vmatprep.subr.mxu0 0.0
        %2605 = vmatpush1.msra.mxu0 0.0
        %2606 = vmatprep.subr.mxu0 0.0
        %2607 = vmatpush1.msra.mxu0 0.0
        %2608 = vmatprep.subr.mxu0 0.0
        %2609 = vmatpush1.msra.mxu0 0.0
        %2610 = vmatprep.subr.mxu0 0.0
        %2611 = vmatpush1.msra.mxu0 0.0
        %2612 = vmatprep.subr.mxu0 0.0
        %2613 = vmatpush1.msra.mxu0 0.0
        %2614 = vmatprep.subr.mxu0 0.0
        %2615 = vmatpush1.msra.mxu0 0.0
        %2616 = vmatprep.subr.mxu0 0.0
        %2617 = vmatpush1.msra.mxu0 0.0
        %2618 = vmatprep.subr.mxu0 0.0
        %2619 = vmatpush1.msra.mxu0 0.0
        %2620 = vmatprep.subr.mxu0 0.0
        %2621 = vmatpush1.msra.mxu0 0.0
        %2622 = vmatprep.subr.mxu0 0.0
        %2623 = vmatpush1.msra.mxu0 %v2511
        %2624 = vmatprep.subr.mxu0 0.0
        %2625 = vmatpush2.msra.mxu0 0.0
        %2626 = vmatprep.subr.mxu0 0.0
        %2627 = vmatpush2.msra.mxu0 0.0
        %2628 = vmatprep.subr.mxu0 0.0
        %2629 = vmatpush2.msra.mxu0 0.0
        %2630 = vmatprep.subr.mxu0 0.0
        %2631 = vmatpush2.msra.mxu0 0.0
        %2632 = vmatprep.subr.mxu0 0.0
        %2633 = vmatpush2.msra.mxu0 0.0
        %2634 = vmatprep.subr.mxu0 0.0
        %2635 = vmatpush2.msra.mxu0 0.0
        %2636 = vmatprep.subr.mxu0 0.0
        %2637 = vmatpush2.msra.mxu0 0.0
        %2638 = vmatprep.subr.mxu0 0.0
        %2639 = vmatpush2.msra.mxu0 0.0
        %2640 = vmatprep.subr.mxu0 0.0
        %2641 = vmatpush2.msra.mxu0 0.0
        %2642 = vmatprep.subr.mxu0 0.0
        %2643 = vmatpush2.msra.mxu0 0.0
        %2644 = vmatprep.subr.mxu0 0.0
        %2645 = vmatpush2.msra.mxu0 0.0
        %2646 = vmatprep.subr.mxu0 0.0
        %2647 = vmatpush2.msra.mxu0 0.0
        %2648 = vmatprep.subr.mxu0 0.0
        %2649 = vmatpush2.msra.mxu0 0.0
        %2650 = vmatprep.subr.mxu0 0.0
        %2651 = vmatpush2.msra.mxu0 0.0
        %2652 = vmatprep.subr.mxu0 0.0
        %2653 = vmatpush2.msra.mxu0 0.0
        %2654 = vmatprep.subr.mxu0 0.0
        %2655 = vmatpush2.msra.mxu0 0.0
        %2656 = vmatprep.mubr.f32.mxu0 0.0
        %2657 = vmatmul.mubr.f32.gmra.mxu0 %v2590
        %v2658 = vpop.f32.mrf.mxu0
        %v2659 = vadd.f32 %v2586, %v2658
        %v2660 = vpop.f32.mrf.mxu0
        %2661 = vdwg.mxu0
        %v2662 = vsel %vm1341, %v1109, 0.0
        %s2663 = scalar_lea.vmem [#allocation16], 16
        %v2664 = vld [vmem:[%s2663] sm:$0xff]
        %v2666 = vsel %vm1194, %v2664, 0
        %2668 = vmatprep.subr.mxu0 0.0
        %2669 = vmatpush1.msra.mxu0 0.0
        %2670 = vmatprep.subr.mxu0 0.0
        %2671 = vmatpush1.msra.mxu0 0.0
        %2672 = vmatprep.subr.mxu0 0.0
        %2673 = vmatpush1.msra.mxu0 0.0
        %2674 = vmatprep.subr.mxu0 0.0
        %2675 = vmatpush1.msra.mxu0 0.0
        %2676 = vmatprep.subr.mxu0 0.0
        %2677 = vmatpush1.msra.mxu0 0.0
        %2678 = vmatprep.subr.mxu0 0.0
        %2679 = vmatpush1.msra.mxu0 0.0
        %2680 = vmatprep.subr.mxu0 0.0
        %2681 = vmatpush1.msra.mxu0 0.0
        %2682 = vmatprep.subr.mxu0 0.0
        %2683 = vmatpush1.msra.mxu0 0.0
        %2684 = vmatprep.subr.mxu0 0.0
        %2685 = vmatpush1.msra.mxu0 0.0
        %2686 = vmatprep.subr.mxu0 0.0
        %2687 = vmatpush1.msra.mxu0 0.0
        %2688 = vmatprep.subr.mxu0 0.0
        %2689 = vmatpush1.msra.mxu0 0.0
        %2690 = vmatprep.subr.mxu0 0.0
        %2691 = vmatpush1.msra.mxu0 0.0
        %2692 = vmatprep.subr.mxu0 0.0
        %2693 = vmatpush1.msra.mxu0 0.0
        %2694 = vmatprep.subr.mxu0 0.0
        %2695 = vmatpush1.msra.mxu0 0.0
        %2696 = vmatprep.subr.mxu0 0.0
        %2697 = vmatpush1.msra.mxu0 0.0
        %2698 = vmatprep.subr.mxu0 0.0
        %2699 = vmatpush1.msra.mxu0 %v2662
        %2700 = vmatprep.subr.mxu0 0.0
        %2701 = vmatpush2.msra.mxu0 0.0
        %2702 = vmatprep.subr.mxu0 0.0
        %2703 = vmatpush2.msra.mxu0 0.0
        %2704 = vmatprep.subr.mxu0 0.0
        %2705 = vmatpush2.msra.mxu0 0.0
        %2706 = vmatprep.subr.mxu0 0.0
        %2707 = vmatpush2.msra.mxu0 0.0
        %2708 = vmatprep.subr.mxu0 0.0
        %2709 = vmatpush2.msra.mxu0 0.0
        %2710 = vmatprep.subr.mxu0 0.0
        %2711 = vmatpush2.msra.mxu0 0.0
        %2712 = vmatprep.subr.mxu0 0.0
        %2713 = vmatpush2.msra.mxu0 0.0
        %2714 = vmatprep.subr.mxu0 0.0
        %2715 = vmatpush2.msra.mxu0 0.0
        %2716 = vmatprep.subr.mxu0 0.0
        %2717 = vmatpush2.msra.mxu0 0.0
        %2718 = vmatprep.subr.mxu0 0.0
        %2719 = vmatpush2.msra.mxu0 0.0
        %2720 = vmatprep.subr.mxu0 0.0
        %2721 = vmatpush2.msra.mxu0 0.0
        %2722 = vmatprep.subr.mxu0 0.0
        %2723 = vmatpush2.msra.mxu0 0.0
        %2724 = vmatprep.subr.mxu0 0.0
        %2725 = vmatpush2.msra.mxu0 0.0
        %2726 = vmatprep.subr.mxu0 0.0
        %2727 = vmatpush2.msra.mxu0 0.0
        %2728 = vmatprep.subr.mxu0 0.0
        %2729 = vmatpush2.msra.mxu0 0.0
        %2730 = vmatprep.subr.mxu0 0.0
        %2731 = vmatpush2.msra.mxu0 0.0
        %2732 = vmatprep.mubr.f32.mxu0 0.0
        %2733 = vmatmul.mubr.f32.gmra.mxu0 %v2666
        %v2734 = vpop.f32.mrf.mxu0
        %v2735 = vadd.f32 0.0, %v2734
        %v2736 = vpop.f32.mrf.mxu0
        %2737 = vdwg.mxu0
        %v2738 = vadd.f32 %v2659, %v2735
        %v2739 = vsel %vm1419, %v1109, 0.0
        %s2740 = scalar_lea.vmem [#allocation16], 24
        %v2741 = vld [vmem:[%s2740] sm:$0xff]
        %v2743 = vsel %vm1194, %v2741, 0
        %2745 = vmatprep.subr.mxu0 0.0
        %2746 = vmatpush1.msra.mxu0 0.0
        %2747 = vmatprep.subr.mxu0 0.0
        %2748 = vmatpush1.msra.mxu0 0.0
        %2749 = vmatprep.subr.mxu0 0.0
        %2750 = vmatpush1.msra.mxu0 0.0
        %2751 = vmatprep.subr.mxu0 0.0
        %2752 = vmatpush1.msra.mxu0 0.0
        %2753 = vmatprep.subr.mxu0 0.0
        %2754 = vmatpush1.msra.mxu0 0.0
        %2755 = vmatprep.subr.mxu0 0.0
        %2756 = vmatpush1.msra.mxu0 0.0
        %2757 = vmatprep.subr.mxu0 0.0
        %2758 = vmatpush1.msra.mxu0 0.0
        %2759 = vmatprep.subr.mxu0 0.0
        %2760 = vmatpush1.msra.mxu0 0.0
        %2761 = vmatprep.subr.mxu0 0.0
        %2762 = vmatpush1.msra.mxu0 0.0
        %2763 = vmatprep.subr.mxu0 0.0
        %2764 = vmatpush1.msra.mxu0 0.0
        %2765 = vmatprep.subr.mxu0 0.0
        %2766 = vmatpush1.msra.mxu0 0.0
        %2767 = vmatprep.subr.mxu0 0.0
        %2768 = vmatpush1.msra.mxu0 0.0
        %2769 = vmatprep.subr.mxu0 0.0
        %2770 = vmatpush1.msra.mxu0 0.0
        %2771 = vmatprep.subr.mxu0 0.0
        %2772 = vmatpush1.msra.mxu0 0.0
        %2773 = vmatprep.subr.mxu0 0.0
        %2774 = vmatpush1.msra.mxu0 0.0
        %2775 = vmatprep.subr.mxu0 0.0
        %2776 = vmatpush1.msra.mxu0 %v2739
        %2777 = vmatprep.subr.mxu0 0.0
        %2778 = vmatpush2.msra.mxu0 0.0
        %2779 = vmatprep.subr.mxu0 0.0
        %2780 = vmatpush2.msra.mxu0 0.0
        %2781 = vmatprep.subr.mxu0 0.0
        %2782 = vmatpush2.msra.mxu0 0.0
        %2783 = vmatprep.subr.mxu0 0.0
        %2784 = vmatpush2.msra.mxu0 0.0
        %2785 = vmatprep.subr.mxu0 0.0
        %2786 = vmatpush2.msra.mxu0 0.0
        %2787 = vmatprep.subr.mxu0 0.0
        %2788 = vmatpush2.msra.mxu0 0.0
        %2789 = vmatprep.subr.mxu0 0.0
        %2790 = vmatpush2.msra.mxu0 0.0
        %2791 = vmatprep.subr.mxu0 0.0
        %2792 = vmatpush2.msra.mxu0 0.0
        %2793 = vmatprep.subr.mxu0 0.0
        %2794 = vmatpush2.msra.mxu0 0.0
        %2795 = vmatprep.subr.mxu0 0.0
        %2796 = vmatpush2.msra.mxu0 0.0
        %2797 = vmatprep.subr.mxu0 0.0
        %2798 = vmatpush2.msra.mxu0 0.0
        %2799 = vmatprep.subr.mxu0 0.0
        %2800 = vmatpush2.msra.mxu0 0.0
        %2801 = vmatprep.subr.mxu0 0.0
        %2802 = vmatpush2.msra.mxu0 0.0
        %2803 = vmatprep.subr.mxu0 0.0
        %2804 = vmatpush2.msra.mxu0 0.0
        %2805 = vmatprep.subr.mxu0 0.0
        %2806 = vmatpush2.msra.mxu0 0.0
        %2807 = vmatprep.subr.mxu0 0.0
        %2808 = vmatpush2.msra.mxu0 0.0
        %2809 = vmatprep.mubr.f32.mxu0 0.0
        %2810 = vmatmul.mubr.f32.gmra.mxu0 %v2743
        %v2811 = vpop.f32.mrf.mxu0
        %v2812 = vadd.f32 0.0, %v2811
        %v2813 = vpop.f32.mrf.mxu0
        %2814 = vdwg.mxu0
        %v2815 = vadd.f32 %v2738, %v2812
        %v2816 = vsel %vm1497, %v1109, 0.0
        %s2817 = scalar_lea.vmem [#allocation16], 32
        %v2818 = vld [vmem:[%s2817] sm:$0xff]
        %v2820 = vsel %vm1194, %v2818, 0
        %2822 = vmatprep.subr.mxu0 0.0
        %2823 = vmatpush1.msra.mxu0 0.0
        %2824 = vmatprep.subr.mxu0 0.0
        %2825 = vmatpush1.msra.mxu0 0.0
        %2826 = vmatprep.subr.mxu0 0.0
        %2827 = vmatpush1.msra.mxu0 0.0
        %2828 = vmatprep.subr.mxu0 0.0
        %2829 = vmatpush1.msra.mxu0 0.0
        %2830 = vmatprep.subr.mxu0 0.0
        %2831 = vmatpush1.msra.mxu0 0.0
        %2832 = vmatprep.subr.mxu0 0.0
        %2833 = vmatpush1.msra.mxu0 0.0
        %2834 = vmatprep.subr.mxu0 0.0
        %2835 = vmatpush1.msra.mxu0 0.0
        %2836 = vmatprep.subr.mxu0 0.0
        %2837 = vmatpush1.msra.mxu0 0.0
        %2838 = vmatprep.subr.mxu0 0.0
        %2839 = vmatpush1.msra.mxu0 0.0
        %2840 = vmatprep.subr.mxu0 0.0
        %2841 = vmatpush1.msra.mxu0 0.0
        %2842 = vmatprep.subr.mxu0 0.0
        %2843 = vmatpush1.msra.mxu0 0.0
        %2844 = vmatprep.subr.mxu0 0.0
        %2845 = vmatpush1.msra.mxu0 0.0
        %2846 = vmatprep.subr.mxu0 0.0
        %2847 = vmatpush1.msra.mxu0 0.0
        %2848 = vmatprep.subr.mxu0 0.0
        %2849 = vmatpush1.msra.mxu0 0.0
        %2850 = vmatprep.subr.mxu0 0.0
        %2851 = vmatpush1.msra.mxu0 0.0
        %2852 = vmatprep.subr.mxu0 0.0
        %2853 = vmatpush1.msra.mxu0 %v2816
        %2854 = vmatprep.subr.mxu0 0.0
        %2855 = vmatpush2.msra.mxu0 0.0
        %2856 = vmatprep.subr.mxu0 0.0
        %2857 = vmatpush2.msra.mxu0 0.0
        %2858 = vmatprep.subr.mxu0 0.0
        %2859 = vmatpush2.msra.mxu0 0.0
        %2860 = vmatprep.subr.mxu0 0.0
        %2861 = vmatpush2.msra.mxu0 0.0
        %2862 = vmatprep.subr.mxu0 0.0
        %2863 = vmatpush2.msra.mxu0 0.0
        %2864 = vmatprep.subr.mxu0 0.0
        %2865 = vmatpush2.msra.mxu0 0.0
        %2866 = vmatprep.subr.mxu0 0.0
        %2867 = vmatpush2.msra.mxu0 0.0
        %2868 = vmatprep.subr.mxu0 0.0
        %2869 = vmatpush2.msra.mxu0 0.0
        %2870 = vmatprep.subr.mxu0 0.0
        %2871 = vmatpush2.msra.mxu0 0.0
        %2872 = vmatprep.subr.mxu0 0.0
        %2873 = vmatpush2.msra.mxu0 0.0
        %2874 = vmatprep.subr.mxu0 0.0
        %2875 = vmatpush2.msra.mxu0 0.0
        %2876 = vmatprep.subr.mxu0 0.0
        %2877 = vmatpush2.msra.mxu0 0.0
        %2878 = vmatprep.subr.mxu0 0.0
        %2879 = vmatpush2.msra.mxu0 0.0
        %2880 = vmatprep.subr.mxu0 0.0
        %2881 = vmatpush2.msra.mxu0 0.0
        %2882 = vmatprep.subr.mxu0 0.0
        %2883 = vmatpush2.msra.mxu0 0.0
        %2884 = vmatprep.subr.mxu0 0.0
        %2885 = vmatpush2.msra.mxu0 0.0
        %2886 = vmatprep.mubr.f32.mxu0 0.0
        %2887 = vmatmul.mubr.f32.gmra.mxu0 %v2820
        %v2888 = vpop.f32.mrf.mxu0
        %v2889 = vadd.f32 0.0, %v2888
        %v2890 = vpop.f32.mrf.mxu0
        %2891 = vdwg.mxu0
        %v2892 = vadd.f32 %v2815, %v2889
        %v2893 = vsel %vm1575, %v1109, 0.0
        %s2894 = scalar_lea.vmem [#allocation16], 40
        %v2895 = vld [vmem:[%s2894] sm:$0xff]
        %v2897 = vsel %vm1194, %v2895, 0
        %2899 = vmatprep.subr.mxu0 0.0
        %2900 = vmatpush1.msra.mxu0 0.0
        %2901 = vmatprep.subr.mxu0 0.0
        %2902 = vmatpush1.msra.mxu0 0.0
        %2903 = vmatprep.subr.mxu0 0.0
        %2904 = vmatpush1.msra.mxu0 0.0
        %2905 = vmatprep.subr.mxu0 0.0
        %2906 = vmatpush1.msra.mxu0 0.0
        %2907 = vmatprep.subr.mxu0 0.0
        %2908 = vmatpush1.msra.mxu0 0.0
        %2909 = vmatprep.subr.mxu0 0.0
        %2910 = vmatpush1.msra.mxu0 0.0
        %2911 = vmatprep.subr.mxu0 0.0
        %2912 = vmatpush1.msra.mxu0 0.0
        %2913 = vmatprep.subr.mxu0 0.0
        %2914 = vmatpush1.msra.mxu0 0.0
        %2915 = vmatprep.subr.mxu0 0.0
        %2916 = vmatpush1.msra.mxu0 0.0
        %2917 = vmatprep.subr.mxu0 0.0
        %2918 = vmatpush1.msra.mxu0 0.0
        %2919 = vmatprep.subr.mxu0 0.0
        %2920 = vmatpush1.msra.mxu0 0.0
        %2921 = vmatprep.subr.mxu0 0.0
        %2922 = vmatpush1.msra.mxu0 0.0
        %2923 = vmatprep.subr.mxu0 0.0
        %2924 = vmatpush1.msra.mxu0 0.0
        %2925 = vmatprep.subr.mxu0 0.0
        %2926 = vmatpush1.msra.mxu0 0.0
        %2927 = vmatprep.subr.mxu0 0.0
        %2928 = vmatpush1.msra.mxu0 0.0
        %2929 = vmatprep.subr.mxu0 0.0
        %2930 = vmatpush1.msra.mxu0 %v2893
        %2931 = vmatprep.subr.mxu0 0.0
        %2932 = vmatpush2.msra.mxu0 0.0
        %2933 = vmatprep.subr.mxu0 0.0
        %2934 = vmatpush2.msra.mxu0 0.0
        %2935 = vmatprep.subr.mxu0 0.0
        %2936 = vmatpush2.msra.mxu0 0.0
        %2937 = vmatprep.subr.mxu0 0.0
        %2938 = vmatpush2.msra.mxu0 0.0
        %2939 = vmatprep.subr.mxu0 0.0
        %2940 = vmatpush2.msra.mxu0 0.0
        %2941 = vmatprep.subr.mxu0 0.0
        %2942 = vmatpush2.msra.mxu0 0.0
        %2943 = vmatprep.subr.mxu0 0.0
        %2944 = vmatpush2.msra.mxu0 0.0
        %2945 = vmatprep.subr.mxu0 0.0
        %2946 = vmatpush2.msra.mxu0 0.0
        %2947 = vmatprep.subr.mxu0 0.0
        %2948 = vmatpush2.msra.mxu0 0.0
        %2949 = vmatprep.subr.mxu0 0.0
        %2950 = vmatpush2.msra.mxu0 0.0
        %2951 = vmatprep.subr.mxu0 0.0
        %2952 = vmatpush2.msra.mxu0 0.0
        %2953 = vmatprep.subr.mxu0 0.0
        %2954 = vmatpush2.msra.mxu0 0.0
        %2955 = vmatprep.subr.mxu0 0.0
        %2956 = vmatpush2.msra.mxu0 0.0
        %2957 = vmatprep.subr.mxu0 0.0
        %2958 = vmatpush2.msra.mxu0 0.0
        %2959 = vmatprep.subr.mxu0 0.0
        %2960 = vmatpush2.msra.mxu0 0.0
        %2961 = vmatprep.subr.mxu0 0.0
        %2962 = vmatpush2.msra.mxu0 0.0
        %2963 = vmatprep.mubr.f32.mxu0 0.0
        %2964 = vmatmul.mubr.f32.gmra.mxu0 %v2897
        %v2965 = vpop.f32.mrf.mxu0
        %v2966 = vadd.f32 0.0, %v2965
        %v2967 = vpop.f32.mrf.mxu0
        %2968 = vdwg.mxu0
        %v2969 = vadd.f32 %v2892, %v2966
        %v2970 = vsel %vm1653, %v1109, 0.0
        %s2971 = scalar_lea.vmem [#allocation16], 48
        %v2972 = vld [vmem:[%s2971] sm:$0xff]
        %v2974 = vsel %vm1194, %v2972, 0
        %2976 = vmatprep.subr.mxu0 0.0
        %2977 = vmatpush1.msra.mxu0 0.0
        %2978 = vmatprep.subr.mxu0 0.0
        %2979 = vmatpush1.msra.mxu0 0.0
        %2980 = vmatprep.subr.mxu0 0.0
        %2981 = vmatpush1.msra.mxu0 0.0
        %2982 = vmatprep.subr.mxu0 0.0
        %2983 = vmatpush1.msra.mxu0 0.0
        %2984 = vmatprep.subr.mxu0 0.0
        %2985 = vmatpush1.msra.mxu0 0.0
        %2986 = vmatprep.subr.mxu0 0.0
        %2987 = vmatpush1.msra.mxu0 0.0
        %2988 = vmatprep.subr.mxu0 0.0
        %2989 = vmatpush1.msra.mxu0 0.0
        %2990 = vmatprep.subr.mxu0 0.0
        %2991 = vmatpush1.msra.mxu0 0.0
        %2992 = vmatprep.subr.mxu0 0.0
        %2993 = vmatpush1.msra.mxu0 0.0
        %2994 = vmatprep.subr.mxu0 0.0
        %2995 = vmatpush1.msra.mxu0 0.0
        %2996 = vmatprep.subr.mxu0 0.0
        %2997 = vmatpush1.msra.mxu0 0.0
        %2998 = vmatprep.subr.mxu0 0.0
        %2999 = vmatpush1.msra.mxu0 0.0
        %3000 = vmatprep.subr.mxu0 0.0
        %3001 = vmatpush1.msra.mxu0 0.0
        %3002 = vmatprep.subr.mxu0 0.0
        %3003 = vmatpush1.msra.mxu0 0.0
        %3004 = vmatprep.subr.mxu0 0.0
        %3005 = vmatpush1.msra.mxu0 0.0
        %3006 = vmatprep.subr.mxu0 0.0
        %3007 = vmatpush1.msra.mxu0 %v2970
        %3008 = vmatprep.subr.mxu0 0.0
        %3009 = vmatpush2.msra.mxu0 0.0
        %3010 = vmatprep.subr.mxu0 0.0
        %3011 = vmatpush2.msra.mxu0 0.0
        %3012 = vmatprep.subr.mxu0 0.0
        %3013 = vmatpush2.msra.mxu0 0.0
        %3014 = vmatprep.subr.mxu0 0.0
        %3015 = vmatpush2.msra.mxu0 0.0
        %3016 = vmatprep.subr.mxu0 0.0
        %3017 = vmatpush2.msra.mxu0 0.0
        %3018 = vmatprep.subr.mxu0 0.0
        %3019 = vmatpush2.msra.mxu0 0.0
        %3020 = vmatprep.subr.mxu0 0.0
        %3021 = vmatpush2.msra.mxu0 0.0
        %3022 = vmatprep.subr.mxu0 0.0
        %3023 = vmatpush2.msra.mxu0 0.0
        %3024 = vmatprep.subr.mxu0 0.0
        %3025 = vmatpush2.msra.mxu0 0.0
        %3026 = vmatprep.subr.mxu0 0.0
        %3027 = vmatpush2.msra.mxu0 0.0
        %3028 = vmatprep.subr.mxu0 0.0
        %3029 = vmatpush2.msra.mxu0 0.0
        %3030 = vmatprep.subr.mxu0 0.0
        %3031 = vmatpush2.msra.mxu0 0.0
        %3032 = vmatprep.subr.mxu0 0.0
        %3033 = vmatpush2.msra.mxu0 0.0
        %3034 = vmatprep.subr.mxu0 0.0
        %3035 = vmatpush2.msra.mxu0 0.0
        %3036 = vmatprep.subr.mxu0 0.0
        %3037 = vmatpush2.msra.mxu0 0.0
        %3038 = vmatprep.subr.mxu0 0.0
        %3039 = vmatpush2.msra.mxu0 0.0
        %3040 = vmatprep.mubr.f32.mxu0 0.0
        %3041 = vmatmul.mubr.f32.gmra.mxu0 %v2974
        %v3042 = vpop.f32.mrf.mxu0
        %v3043 = vadd.f32 0.0, %v3042
        %v3044 = vpop.f32.mrf.mxu0
        %3045 = vdwg.mxu0
        %v3046 = vadd.f32 %v2969, %v3043
        %v3047 = vsel %vm1731, %v1109, 0.0
        %s3048 = scalar_lea.vmem [#allocation16], 56
        %v3049 = vld [vmem:[%s3048] sm:$0xff]
        %v3051 = vsel %vm1194, %v3049, 0
        %3053 = vmatprep.subr.mxu0 0.0
        %3054 = vmatpush1.msra.mxu0 0.0
        %3055 = vmatprep.subr.mxu0 0.0
        %3056 = vmatpush1.msra.mxu0 0.0
        %3057 = vmatprep.subr.mxu0 0.0
        %3058 = vmatpush1.msra.mxu0 0.0
        %3059 = vmatprep.subr.mxu0 0.0
        %3060 = vmatpush1.msra.mxu0 0.0
        %3061 = vmatprep.subr.mxu0 0.0
        %3062 = vmatpush1.msra.mxu0 0.0
        %3063 = vmatprep.subr.mxu0 0.0
        %3064 = vmatpush1.msra.mxu0 0.0
        %3065 = vmatprep.subr.mxu0 0.0
        %3066 = vmatpush1.msra.mxu0 0.0
        %3067 = vmatprep.subr.mxu0 0.0
        %3068 = vmatpush1.msra.mxu0 0.0
        %3069 = vmatprep.subr.mxu0 0.0
        %3070 = vmatpush1.msra.mxu0 0.0
        %3071 = vmatprep.subr.mxu0 0.0
        %3072 = vmatpush1.msra.mxu0 0.0
        %3073 = vmatprep.subr.mxu0 0.0
        %3074 = vmatpush1.msra.mxu0 0.0
        %3075 = vmatprep.subr.mxu0 0.0
        %3076 = vmatpush1.msra.mxu0 0.0
        %3077 = vmatprep.subr.mxu0 0.0
        %3078 = vmatpush1.msra.mxu0 0.0
        %3079 = vmatprep.subr.mxu0 0.0
        %3080 = vmatpush1.msra.mxu0 0.0
        %3081 = vmatprep.subr.mxu0 0.0
        %3082 = vmatpush1.msra.mxu0 0.0
        %3083 = vmatprep.subr.mxu0 0.0
        %3084 = vmatpush1.msra.mxu0 %v3047
        %3085 = vmatprep.subr.mxu0 0.0
        %3086 = vmatpush2.msra.mxu0 0.0
        %3087 = vmatprep.subr.mxu0 0.0
        %3088 = vmatpush2.msra.mxu0 0.0
        %3089 = vmatprep.subr.mxu0 0.0
        %3090 = vmatpush2.msra.mxu0 0.0
        %3091 = vmatprep.subr.mxu0 0.0
        %3092 = vmatpush2.msra.mxu0 0.0
        %3093 = vmatprep.subr.mxu0 0.0
        %3094 = vmatpush2.msra.mxu0 0.0
        %3095 = vmatprep.subr.mxu0 0.0
        %3096 = vmatpush2.msra.mxu0 0.0
        %3097 = vmatprep.subr.mxu0 0.0
        %3098 = vmatpush2.msra.mxu0 0.0
        %3099 = vmatprep.subr.mxu0 0.0
        %3100 = vmatpush2.msra.mxu0 0.0
        %3101 = vmatprep.subr.mxu0 0.0
        %3102 = vmatpush2.msra.mxu0 0.0
        %3103 = vmatprep.subr.mxu0 0.0
        %3104 = vmatpush2.msra.mxu0 0.0
        %3105 = vmatprep.subr.mxu0 0.0
        %3106 = vmatpush2.msra.mxu0 0.0
        %3107 = vmatprep.subr.mxu0 0.0
        %3108 = vmatpush2.msra.mxu0 0.0
        %3109 = vmatprep.subr.mxu0 0.0
        %3110 = vmatpush2.msra.mxu0 0.0
        %3111 = vmatprep.subr.mxu0 0.0
        %3112 = vmatpush2.msra.mxu0 0.0
        %3113 = vmatprep.subr.mxu0 0.0
        %3114 = vmatpush2.msra.mxu0 0.0
        %3115 = vmatprep.subr.mxu0 0.0
        %3116 = vmatpush2.msra.mxu0 0.0
        %3117 = vmatprep.mubr.f32.mxu0 0.0
        %3118 = vmatmul.mubr.f32.gmra.mxu0 %v3051
        %v3119 = vpop.f32.mrf.mxu0
        %v3120 = vadd.f32 0.0, %v3119
        %v3121 = vpop.f32.mrf.mxu0
        %3122 = vdwg.mxu0
        %v3123 = vadd.f32 %v3046, %v3120
        %v3124 = vsel %vm1809, %v1109, 0.0
        %s3125 = scalar_lea.vmem [#allocation16], 64
        %v3126 = vld [vmem:[%s3125] sm:$0xff]
        %v3128 = vsel %vm1194, %v3126, 0
        %3130 = vmatprep.subr.mxu0 0.0
        %3131 = vmatpush1.msra.mxu0 0.0
        %3132 = vmatprep.subr.mxu0 0.0
        %3133 = vmatpush1.msra.mxu0 0.0
        %3134 = vmatprep.subr.mxu0 0.0
        %3135 = vmatpush1.msra.mxu0 0.0
        %3136 = vmatprep.subr.mxu0 0.0
        %3137 = vmatpush1.msra.mxu0 0.0
        %3138 = vmatprep.subr.mxu0 0.0
        %3139 = vmatpush1.msra.mxu0 0.0
        %3140 = vmatprep.subr.mxu0 0.0
        %3141 = vmatpush1.msra.mxu0 0.0
        %3142 = vmatprep.subr.mxu0 0.0
        %3143 = vmatpush1.msra.mxu0 0.0
        %3144 = vmatprep.subr.mxu0 0.0
        %3145 = vmatpush1.msra.mxu0 0.0
        %3146 = vmatprep.subr.mxu0 0.0
        %3147 = vmatpush1.msra.mxu0 0.0
        %3148 = vmatprep.subr.mxu0 0.0
        %3149 = vmatpush1.msra.mxu0 0.0
        %3150 = vmatprep.subr.mxu0 0.0
        %3151 = vmatpush1.msra.mxu0 0.0
        %3152 = vmatprep.subr.mxu0 0.0
        %3153 = vmatpush1.msra.mxu0 0.0
        %3154 = vmatprep.subr.mxu0 0.0
        %3155 = vmatpush1.msra.mxu0 0.0
        %3156 = vmatprep.subr.mxu0 0.0
        %3157 = vmatpush1.msra.mxu0 0.0
        %3158 = vmatprep.subr.mxu0 0.0
        %3159 = vmatpush1.msra.mxu0 0.0
        %3160 = vmatprep.subr.mxu0 0.0
        %3161 = vmatpush1.msra.mxu0 %v3124
        %3162 = vmatprep.subr.mxu0 0.0
        %3163 = vmatpush2.msra.mxu0 0.0
        %3164 = vmatprep.subr.mxu0 0.0
        %3165 = vmatpush2.msra.mxu0 0.0
        %3166 = vmatprep.subr.mxu0 0.0
        %3167 = vmatpush2.msra.mxu0 0.0
        %3168 = vmatprep.subr.mxu0 0.0
        %3169 = vmatpush2.msra.mxu0 0.0
        %3170 = vmatprep.subr.mxu0 0.0
        %3171 = vmatpush2.msra.mxu0 0.0
        %3172 = vmatprep.subr.mxu0 0.0
        %3173 = vmatpush2.msra.mxu0 0.0
        %3174 = vmatprep.subr.mxu0 0.0
        %3175 = vmatpush2.msra.mxu0 0.0
        %3176 = vmatprep.subr.mxu0 0.0
        %3177 = vmatpush2.msra.mxu0 0.0
        %3178 = vmatprep.subr.mxu0 0.0
        %3179 = vmatpush2.msra.mxu0 0.0
        %3180 = vmatprep.subr.mxu0 0.0
        %3181 = vmatpush2.msra.mxu0 0.0
        %3182 = vmatprep.subr.mxu0 0.0
        %3183 = vmatpush2.msra.mxu0 0.0
        %3184 = vmatprep.subr.mxu0 0.0
        %3185 = vmatpush2.msra.mxu0 0.0
        %3186 = vmatprep.subr.mxu0 0.0
        %3187 = vmatpush2.msra.mxu0 0.0
        %3188 = vmatprep.subr.mxu0 0.0
        %3189 = vmatpush2.msra.mxu0 0.0
        %3190 = vmatprep.subr.mxu0 0.0
        %3191 = vmatpush2.msra.mxu0 0.0
        %3192 = vmatprep.subr.mxu0 0.0
        %3193 = vmatpush2.msra.mxu0 0.0
        %3194 = vmatprep.mubr.f32.mxu0 0.0
        %3195 = vmatmul.mubr.f32.gmra.mxu0 %v3128
        %v3196 = vpop.f32.mrf.mxu0
        %v3197 = vadd.f32 0.0, %v3196
        %v3198 = vpop.f32.mrf.mxu0
        %3199 = vdwg.mxu0
        %v3200 = vadd.f32 %v3123, %v3197
        %v3201 = vsel %vm1887, %v1109, 0.0
        %s3202 = scalar_lea.vmem [#allocation16], 72
        %v3203 = vld [vmem:[%s3202] sm:$0xff]
        %v3205 = vsel %vm1194, %v3203, 0
        %3207 = vmatprep.subr.mxu0 0.0
        %3208 = vmatpush1.msra.mxu0 0.0
        %3209 = vmatprep.subr.mxu0 0.0
        %3210 = vmatpush1.msra.mxu0 0.0
        %3211 = vmatprep.subr.mxu0 0.0
        %3212 = vmatpush1.msra.mxu0 0.0
        %3213 = vmatprep.subr.mxu0 0.0
        %3214 = vmatpush1.msra.mxu0 0.0
        %3215 = vmatprep.subr.mxu0 0.0
        %3216 = vmatpush1.msra.mxu0 0.0
        %3217 = vmatprep.subr.mxu0 0.0
        %3218 = vmatpush1.msra.mxu0 0.0
        %3219 = vmatprep.subr.mxu0 0.0
        %3220 = vmatpush1.msra.mxu0 0.0
        %3221 = vmatprep.subr.mxu0 0.0
        %3222 = vmatpush1.msra.mxu0 0.0
        %3223 = vmatprep.subr.mxu0 0.0
        %3224 = vmatpush1.msra.mxu0 0.0
        %3225 = vmatprep.subr.mxu0 0.0
        %3226 = vmatpush1.msra.mxu0 0.0
        %3227 = vmatprep.subr.mxu0 0.0
        %3228 = vmatpush1.msra.mxu0 0.0
        %3229 = vmatprep.subr.mxu0 0.0
        %3230 = vmatpush1.msra.mxu0 0.0
        %3231 = vmatprep.subr.mxu0 0.0
        %3232 = vmatpush1.msra.mxu0 0.0
        %3233 = vmatprep.subr.mxu0 0.0
        %3234 = vmatpush1.msra.mxu0 0.0
        %3235 = vmatprep.subr.mxu0 0.0
        %3236 = vmatpush1.msra.mxu0 0.0
        %3237 = vmatprep.subr.mxu0 0.0
        %3238 = vmatpush1.msra.mxu0 %v3201
        %3239 = vmatprep.subr.mxu0 0.0
        %3240 = vmatpush2.msra.mxu0 0.0
        %3241 = vmatprep.subr.mxu0 0.0
        %3242 = vmatpush2.msra.mxu0 0.0
        %3243 = vmatprep.subr.mxu0 0.0
        %3244 = vmatpush2.msra.mxu0 0.0
        %3245 = vmatprep.subr.mxu0 0.0
        %3246 = vmatpush2.msra.mxu0 0.0
        %3247 = vmatprep.subr.mxu0 0.0
        %3248 = vmatpush2.msra.mxu0 0.0
        %3249 = vmatprep.subr.mxu0 0.0
        %3250 = vmatpush2.msra.mxu0 0.0
        %3251 = vmatprep.subr.mxu0 0.0
        %3252 = vmatpush2.msra.mxu0 0.0
        %3253 = vmatprep.subr.mxu0 0.0
        %3254 = vmatpush2.msra.mxu0 0.0
        %3255 = vmatprep.subr.mxu0 0.0
        %3256 = vmatpush2.msra.mxu0 0.0
        %3257 = vmatprep.subr.mxu0 0.0
        %3258 = vmatpush2.msra.mxu0 0.0
        %3259 = vmatprep.subr.mxu0 0.0
        %3260 = vmatpush2.msra.mxu0 0.0
        %3261 = vmatprep.subr.mxu0 0.0
        %3262 = vmatpush2.msra.mxu0 0.0
        %3263 = vmatprep.subr.mxu0 0.0
        %3264 = vmatpush2.msra.mxu0 0.0
        %3265 = vmatprep.subr.mxu0 0.0
        %3266 = vmatpush2.msra.mxu0 0.0
        %3267 = vmatprep.subr.mxu0 0.0
        %3268 = vmatpush2.msra.mxu0 0.0
        %3269 = vmatprep.subr.mxu0 0.0
        %3270 = vmatpush2.msra.mxu0 0.0
        %3271 = vmatprep.mubr.f32.mxu0 0.0
        %3272 = vmatmul.mubr.f32.gmra.mxu0 %v3205
        %v3273 = vpop.f32.mrf.mxu0
        %v3274 = vadd.f32 0.0, %v3273
        %v3275 = vpop.f32.mrf.mxu0
        %3276 = vdwg.mxu0
        %v3277 = vadd.f32 %v3200, %v3274
        %v3278 = vsel %vm1965, %v1109, 0.0
        %s3279 = scalar_lea.vmem [#allocation16], 80
        %v3280 = vld [vmem:[%s3279] sm:$0xff]
        %v3282 = vsel %vm1194, %v3280, 0
        %3284 = vmatprep.subr.mxu0 0.0
        %3285 = vmatpush1.msra.mxu0 0.0
        %3286 = vmatprep.subr.mxu0 0.0
        %3287 = vmatpush1.msra.mxu0 0.0
        %3288 = vmatprep.subr.mxu0 0.0
        %3289 = vmatpush1.msra.mxu0 0.0
        %3290 = vmatprep.subr.mxu0 0.0
        %3291 = vmatpush1.msra.mxu0 0.0
        %3292 = vmatprep.subr.mxu0 0.0
        %3293 = vmatpush1.msra.mxu0 0.0
        %3294 = vmatprep.subr.mxu0 0.0
        %3295 = vmatpush1.msra.mxu0 0.0
        %3296 = vmatprep.subr.mxu0 0.0
        %3297 = vmatpush1.msra.mxu0 0.0
        %3298 = vmatprep.subr.mxu0 0.0
        %3299 = vmatpush1.msra.mxu0 0.0
        %3300 = vmatprep.subr.mxu0 0.0
        %3301 = vmatpush1.msra.mxu0 0.0
        %3302 = vmatprep.subr.mxu0 0.0
        %3303 = vmatpush1.msra.mxu0 0.0
        %3304 = vmatprep.subr.mxu0 0.0
        %3305 = vmatpush1.msra.mxu0 0.0
        %3306 = vmatprep.subr.mxu0 0.0
        %3307 = vmatpush1.msra.mxu0 0.0
        %3308 = vmatprep.subr.mxu0 0.0
        %3309 = vmatpush1.msra.mxu0 0.0
        %3310 = vmatprep.subr.mxu0 0.0
        %3311 = vmatpush1.msra.mxu0 0.0
        %3312 = vmatprep.subr.mxu0 0.0
        %3313 = vmatpush1.msra.mxu0 0.0
        %3314 = vmatprep.subr.mxu0 0.0
        %3315 = vmatpush1.msra.mxu0 %v3278
        %3316 = vmatprep.subr.mxu0 0.0
        %3317 = vmatpush2.msra.mxu0 0.0
        %3318 = vmatprep.subr.mxu0 0.0
        %3319 = vmatpush2.msra.mxu0 0.0
        %3320 = vmatprep.subr.mxu0 0.0
        %3321 = vmatpush2.msra.mxu0 0.0
        %3322 = vmatprep.subr.mxu0 0.0
        %3323 = vmatpush2.msra.mxu0 0.0
        %3324 = vmatprep.subr.mxu0 0.0
        %3325 = vmatpush2.msra.mxu0 0.0
        %3326 = vmatprep.subr.mxu0 0.0
        %3327 = vmatpush2.msra.mxu0 0.0
        %3328 = vmatprep.subr.mxu0 0.0
        %3329 = vmatpush2.msra.mxu0 0.0
        %3330 = vmatprep.subr.mxu0 0.0
        %3331 = vmatpush2.msra.mxu0 0.0
        %3332 = vmatprep.subr.mxu0 0.0
        %3333 = vmatpush2.msra.mxu0 0.0
        %3334 = vmatprep.subr.mxu0 0.0
        %3335 = vmatpush2.msra.mxu0 0.0
        %3336 = vmatprep.subr.mxu0 0.0
        %3337 = vmatpush2.msra.mxu0 0.0
        %3338 = vmatprep.subr.mxu0 0.0
        %3339 = vmatpush2.msra.mxu0 0.0
        %3340 = vmatprep.subr.mxu0 0.0
        %3341 = vmatpush2.msra.mxu0 0.0
        %3342 = vmatprep.subr.mxu0 0.0
        %3343 = vmatpush2.msra.mxu0 0.0
        %3344 = vmatprep.subr.mxu0 0.0
        %3345 = vmatpush2.msra.mxu0 0.0
        %3346 = vmatprep.subr.mxu0 0.0
        %3347 = vmatpush2.msra.mxu0 0.0
        %3348 = vmatprep.mubr.f32.mxu0 0.0
        %3349 = vmatmul.mubr.f32.gmra.mxu0 %v3282
        %v3350 = vpop.f32.mrf.mxu0
        %v3351 = vadd.f32 0.0, %v3350
        %v3352 = vpop.f32.mrf.mxu0
        %3353 = vdwg.mxu0
        %v3354 = vadd.f32 %v3277, %v3351
        %v3355 = vsel %vm2043, %v1109, 0.0
        %s3356 = scalar_lea.vmem [#allocation16], 88
        %v3357 = vld [vmem:[%s3356] sm:$0xff]
        %v3359 = vsel %vm1194, %v3357, 0
        %3361 = vmatprep.subr.mxu0 0.0
        %3362 = vmatpush1.msra.mxu0 0.0
        %3363 = vmatprep.subr.mxu0 0.0
        %3364 = vmatpush1.msra.mxu0 0.0
        %3365 = vmatprep.subr.mxu0 0.0
        %3366 = vmatpush1.msra.mxu0 0.0
        %3367 = vmatprep.subr.mxu0 0.0
        %3368 = vmatpush1.msra.mxu0 0.0
        %3369 = vmatprep.subr.mxu0 0.0
        %3370 = vmatpush1.msra.mxu0 0.0
        %3371 = vmatprep.subr.mxu0 0.0
        %3372 = vmatpush1.msra.mxu0 0.0
        %3373 = vmatprep.subr.mxu0 0.0
        %3374 = vmatpush1.msra.mxu0 0.0
        %3375 = vmatprep.subr.mxu0 0.0
        %3376 = vmatpush1.msra.mxu0 0.0
        %3377 = vmatprep.subr.mxu0 0.0
        %3378 = vmatpush1.msra.mxu0 0.0
        %3379 = vmatprep.subr.mxu0 0.0
        %3380 = vmatpush1.msra.mxu0 0.0
        %3381 = vmatprep.subr.mxu0 0.0
        %3382 = vmatpush1.msra.mxu0 0.0
        %3383 = vmatprep.subr.mxu0 0.0
        %3384 = vmatpush1.msra.mxu0 0.0
        %3385 = vmatprep.subr.mxu0 0.0
        %3386 = vmatpush1.msra.mxu0 0.0
        %3387 = vmatprep.subr.mxu0 0.0
        %3388 = vmatpush1.msra.mxu0 0.0
        %3389 = vmatprep.subr.mxu0 0.0
        %3390 = vmatpush1.msra.mxu0 0.0
        %3391 = vmatprep.subr.mxu0 0.0
        %3392 = vmatpush1.msra.mxu0 %v3355
        %3393 = vmatprep.subr.mxu0 0.0
        %3394 = vmatpush2.msra.mxu0 0.0
        %3395 = vmatprep.subr.mxu0 0.0
        %3396 = vmatpush2.msra.mxu0 0.0
        %3397 = vmatprep.subr.mxu0 0.0
        %3398 = vmatpush2.msra.mxu0 0.0
        %3399 = vmatprep.subr.mxu0 0.0
        %3400 = vmatpush2.msra.mxu0 0.0
        %3401 = vmatprep.subr.mxu0 0.0
        %3402 = vmatpush2.msra.mxu0 0.0
        %3403 = vmatprep.subr.mxu0 0.0
        %3404 = vmatpush2.msra.mxu0 0.0
        %3405 = vmatprep.subr.mxu0 0.0
        %3406 = vmatpush2.msra.mxu0 0.0
        %3407 = vmatprep.subr.mxu0 0.0
        %3408 = vmatpush2.msra.mxu0 0.0
        %3409 = vmatprep.subr.mxu0 0.0
        %3410 = vmatpush2.msra.mxu0 0.0
        %3411 = vmatprep.subr.mxu0 0.0
        %3412 = vmatpush2.msra.mxu0 0.0
        %3413 = vmatprep.subr.mxu0 0.0
        %3414 = vmatpush2.msra.mxu0 0.0
        %3415 = vmatprep.subr.mxu0 0.0
        %3416 = vmatpush2.msra.mxu0 0.0
        %3417 = vmatprep.subr.mxu0 0.0
        %3418 = vmatpush2.msra.mxu0 0.0
        %3419 = vmatprep.subr.mxu0 0.0
        %3420 = vmatpush2.msra.mxu0 0.0
        %3421 = vmatprep.subr.mxu0 0.0
        %3422 = vmatpush2.msra.mxu0 0.0
        %3423 = vmatprep.subr.mxu0 0.0
        %3424 = vmatpush2.msra.mxu0 0.0
        %3425 = vmatprep.mubr.f32.mxu0 0.0
        %3426 = vmatmul.mubr.f32.gmra.mxu0 %v3359
        %v3427 = vpop.f32.mrf.mxu0
        %v3428 = vadd.f32 0.0, %v3427
        %v3429 = vpop.f32.mrf.mxu0
        %3430 = vdwg.mxu0
        %v3431 = vadd.f32 %v3354, %v3428
        %v3432 = vsel %vm2121, %v1109, 0.0
        %s3433 = scalar_lea.vmem [#allocation16], 96
        %v3434 = vld [vmem:[%s3433] sm:$0xff]
        %v3436 = vsel %vm1194, %v3434, 0
        %3438 = vmatprep.subr.mxu0 0.0
        %3439 = vmatpush1.msra.mxu0 0.0
        %3440 = vmatprep.subr.mxu0 0.0
        %3441 = vmatpush1.msra.mxu0 0.0
        %3442 = vmatprep.subr.mxu0 0.0
        %3443 = vmatpush1.msra.mxu0 0.0
        %3444 = vmatprep.subr.mxu0 0.0
        %3445 = vmatpush1.msra.mxu0 0.0
        %3446 = vmatprep.subr.mxu0 0.0
        %3447 = vmatpush1.msra.mxu0 0.0
        %3448 = vmatprep.subr.mxu0 0.0
        %3449 = vmatpush1.msra.mxu0 0.0
        %3450 = vmatprep.subr.mxu0 0.0
        %3451 = vmatpush1.msra.mxu0 0.0
        %3452 = vmatprep.subr.mxu0 0.0
        %3453 = vmatpush1.msra.mxu0 0.0
        %3454 = vmatprep.subr.mxu0 0.0
        %3455 = vmatpush1.msra.mxu0 0.0
        %3456 = vmatprep.subr.mxu0 0.0
        %3457 = vmatpush1.msra.mxu0 0.0
        %3458 = vmatprep.subr.mxu0 0.0
        %3459 = vmatpush1.msra.mxu0 0.0
        %3460 = vmatprep.subr.mxu0 0.0
        %3461 = vmatpush1.msra.mxu0 0.0
        %3462 = vmatprep.subr.mxu0 0.0
        %3463 = vmatpush1.msra.mxu0 0.0
        %3464 = vmatprep.subr.mxu0 0.0
        %3465 = vmatpush1.msra.mxu0 0.0
        %3466 = vmatprep.subr.mxu0 0.0
        %3467 = vmatpush1.msra.mxu0 0.0
        %3468 = vmatprep.subr.mxu0 0.0
        %3469 = vmatpush1.msra.mxu0 %v3432
        %3470 = vmatprep.subr.mxu0 0.0
        %3471 = vmatpush2.msra.mxu0 0.0
        %3472 = vmatprep.subr.mxu0 0.0
        %3473 = vmatpush2.msra.mxu0 0.0
        %3474 = vmatprep.subr.mxu0 0.0
        %3475 = vmatpush2.msra.mxu0 0.0
        %3476 = vmatprep.subr.mxu0 0.0
        %3477 = vmatpush2.msra.mxu0 0.0
        %3478 = vmatprep.subr.mxu0 0.0
        %3479 = vmatpush2.msra.mxu0 0.0
        %3480 = vmatprep.subr.mxu0 0.0
        %3481 = vmatpush2.msra.mxu0 0.0
        %3482 = vmatprep.subr.mxu0 0.0
        %3483 = vmatpush2.msra.mxu0 0.0
        %3484 = vmatprep.subr.mxu0 0.0
        %3485 = vmatpush2.msra.mxu0 0.0
        %3486 = vmatprep.subr.mxu0 0.0
        %3487 = vmatpush2.msra.mxu0 0.0
        %3488 = vmatprep.subr.mxu0 0.0
        %3489 = vmatpush2.msra.mxu0 0.0
        %3490 = vmatprep.subr.mxu0 0.0
        %3491 = vmatpush2.msra.mxu0 0.0
        %3492 = vmatprep.subr.mxu0 0.0
        %3493 = vmatpush2.msra.mxu0 0.0
        %3494 = vmatprep.subr.mxu0 0.0
        %3495 = vmatpush2.msra.mxu0 0.0
        %3496 = vmatprep.subr.mxu0 0.0
        %3497 = vmatpush2.msra.mxu0 0.0
        %3498 = vmatprep.subr.mxu0 0.0
        %3499 = vmatpush2.msra.mxu0 0.0
        %3500 = vmatprep.subr.mxu0 0.0
        %3501 = vmatpush2.msra.mxu0 0.0
        %3502 = vmatprep.mubr.f32.mxu0 0.0
        %3503 = vmatmul.mubr.f32.gmra.mxu0 %v3436
        %v3504 = vpop.f32.mrf.mxu0
        %v3505 = vadd.f32 0.0, %v3504
        %v3506 = vpop.f32.mrf.mxu0
        %3507 = vdwg.mxu0
        %v3508 = vadd.f32 %v3431, %v3505
        %v3509 = vsel %vm2199, %v1109, 0.0
        %s3510 = scalar_lea.vmem [#allocation16], 104
        %v3511 = vld [vmem:[%s3510] sm:$0xff]
        %v3513 = vsel %vm1194, %v3511, 0
        %3515 = vmatprep.subr.mxu0 0.0
        %3516 = vmatpush1.msra.mxu0 0.0
        %3517 = vmatprep.subr.mxu0 0.0
        %3518 = vmatpush1.msra.mxu0 0.0
        %3519 = vmatprep.subr.mxu0 0.0
        %3520 = vmatpush1.msra.mxu0 0.0
        %3521 = vmatprep.subr.mxu0 0.0
        %3522 = vmatpush1.msra.mxu0 0.0
        %3523 = vmatprep.subr.mxu0 0.0
        %3524 = vmatpush1.msra.mxu0 0.0
        %3525 = vmatprep.subr.mxu0 0.0
        %3526 = vmatpush1.msra.mxu0 0.0
        %3527 = vmatprep.subr.mxu0 0.0
        %3528 = vmatpush1.msra.mxu0 0.0
        %3529 = vmatprep.subr.mxu0 0.0
        %3530 = vmatpush1.msra.mxu0 0.0
        %3531 = vmatprep.subr.mxu0 0.0
        %3532 = vmatpush1.msra.mxu0 0.0
        %3533 = vmatprep.subr.mxu0 0.0
        %3534 = vmatpush1.msra.mxu0 0.0
        %3535 = vmatprep.subr.mxu0 0.0
        %3536 = vmatpush1.msra.mxu0 0.0
        %3537 = vmatprep.subr.mxu0 0.0
        %3538 = vmatpush1.msra.mxu0 0.0
        %3539 = vmatprep.subr.mxu0 0.0
        %3540 = vmatpush1.msra.mxu0 0.0
        %3541 = vmatprep.subr.mxu0 0.0
        %3542 = vmatpush1.msra.mxu0 0.0
        %3543 = vmatprep.subr.mxu0 0.0
        %3544 = vmatpush1.msra.mxu0 0.0
        %3545 = vmatprep.subr.mxu0 0.0
        %3546 = vmatpush1.msra.mxu0 %v3509
        %3547 = vmatprep.subr.mxu0 0.0
        %3548 = vmatpush2.msra.mxu0 0.0
        %3549 = vmatprep.subr.mxu0 0.0
        %3550 = vmatpush2.msra.mxu0 0.0
        %3551 = vmatprep.subr.mxu0 0.0
        %3552 = vmatpush2.msra.mxu0 0.0
        %3553 = vmatprep.subr.mxu0 0.0
        %3554 = vmatpush2.msra.mxu0 0.0
        %3555 = vmatprep.subr.mxu0 0.0
        %3556 = vmatpush2.msra.mxu0 0.0
        %3557 = vmatprep.subr.mxu0 0.0
        %3558 = vmatpush2.msra.mxu0 0.0
        %3559 = vmatprep.subr.mxu0 0.0
        %3560 = vmatpush2.msra.mxu0 0.0
        %3561 = vmatprep.subr.mxu0 0.0
        %3562 = vmatpush2.msra.mxu0 0.0
        %3563 = vmatprep.subr.mxu0 0.0
        %3564 = vmatpush2.msra.mxu0 0.0
        %3565 = vmatprep.subr.mxu0 0.0
        %3566 = vmatpush2.msra.mxu0 0.0
        %3567 = vmatprep.subr.mxu0 0.0
        %3568 = vmatpush2.msra.mxu0 0.0
        %3569 = vmatprep.subr.mxu0 0.0
        %3570 = vmatpush2.msra.mxu0 0.0
        %3571 = vmatprep.subr.mxu0 0.0
        %3572 = vmatpush2.msra.mxu0 0.0
        %3573 = vmatprep.subr.mxu0 0.0
        %3574 = vmatpush2.msra.mxu0 0.0
        %3575 = vmatprep.subr.mxu0 0.0
        %3576 = vmatpush2.msra.mxu0 0.0
        %3577 = vmatprep.subr.mxu0 0.0
        %3578 = vmatpush2.msra.mxu0 0.0
        %3579 = vmatprep.mubr.f32.mxu0 0.0
        %3580 = vmatmul.mubr.f32.gmra.mxu0 %v3513
        %v3581 = vpop.f32.mrf.mxu0
        %v3582 = vadd.f32 0.0, %v3581
        %v3583 = vpop.f32.mrf.mxu0
        %3584 = vdwg.mxu0
        %v3585 = vadd.f32 %v3508, %v3582
        %v3586 = vsel %vm2277, %v1109, 0.0
        %s3587 = scalar_lea.vmem [#allocation16], 112
        %v3588 = vld [vmem:[%s3587] sm:$0xff]
        %v3590 = vsel %vm1194, %v3588, 0
        %3592 = vmatprep.subr.mxu0 0.0
        %3593 = vmatpush1.msra.mxu0 0.0
        %3594 = vmatprep.subr.mxu0 0.0
        %3595 = vmatpush1.msra.mxu0 0.0
        %3596 = vmatprep.subr.mxu0 0.0
        %3597 = vmatpush1.msra.mxu0 0.0
        %3598 = vmatprep.subr.mxu0 0.0
        %3599 = vmatpush1.msra.mxu0 0.0
        %3600 = vmatprep.subr.mxu0 0.0
        %3601 = vmatpush1.msra.mxu0 0.0
        %3602 = vmatprep.subr.mxu0 0.0
        %3603 = vmatpush1.msra.mxu0 0.0
        %3604 = vmatprep.subr.mxu0 0.0
        %3605 = vmatpush1.msra.mxu0 0.0
        %3606 = vmatprep.subr.mxu0 0.0
        %3607 = vmatpush1.msra.mxu0 0.0
        %3608 = vmatprep.subr.mxu0 0.0
        %3609 = vmatpush1.msra.mxu0 0.0
        %3610 = vmatprep.subr.mxu0 0.0
        %3611 = vmatpush1.msra.mxu0 0.0
        %3612 = vmatprep.subr.mxu0 0.0
        %3613 = vmatpush1.msra.mxu0 0.0
        %3614 = vmatprep.subr.mxu0 0.0
        %3615 = vmatpush1.msra.mxu0 0.0
        %3616 = vmatprep.subr.mxu0 0.0
        %3617 = vmatpush1.msra.mxu0 0.0
        %3618 = vmatprep.subr.mxu0 0.0
        %3619 = vmatpush1.msra.mxu0 0.0
        %3620 = vmatprep.subr.mxu0 0.0
        %3621 = vmatpush1.msra.mxu0 0.0
        %3622 = vmatprep.subr.mxu0 0.0
        %3623 = vmatpush1.msra.mxu0 %v3586
        %3624 = vmatprep.subr.mxu0 0.0
        %3625 = vmatpush2.msra.mxu0 0.0
        %3626 = vmatprep.subr.mxu0 0.0
        %3627 = vmatpush2.msra.mxu0 0.0
        %3628 = vmatprep.subr.mxu0 0.0
        %3629 = vmatpush2.msra.mxu0 0.0
        %3630 = vmatprep.subr.mxu0 0.0
        %3631 = vmatpush2.msra.mxu0 0.0
        %3632 = vmatprep.subr.mxu0 0.0
        %3633 = vmatpush2.msra.mxu0 0.0
        %3634 = vmatprep.subr.mxu0 0.0
        %3635 = vmatpush2.msra.mxu0 0.0
        %3636 = vmatprep.subr.mxu0 0.0
        %3637 = vmatpush2.msra.mxu0 0.0
        %3638 = vmatprep.subr.mxu0 0.0
        %3639 = vmatpush2.msra.mxu0 0.0
        %3640 = vmatprep.subr.mxu0 0.0
        %3641 = vmatpush2.msra.mxu0 0.0
        %3642 = vmatprep.subr.mxu0 0.0
        %3643 = vmatpush2.msra.mxu0 0.0
        %3644 = vmatprep.subr.mxu0 0.0
        %3645 = vmatpush2.msra.mxu0 0.0
        %3646 = vmatprep.subr.mxu0 0.0
        %3647 = vmatpush2.msra.mxu0 0.0
        %3648 = vmatprep.subr.mxu0 0.0
        %3649 = vmatpush2.msra.mxu0 0.0
        %3650 = vmatprep.subr.mxu0 0.0
        %3651 = vmatpush2.msra.mxu0 0.0
        %3652 = vmatprep.subr.mxu0 0.0
        %3653 = vmatpush2.msra.mxu0 0.0
        %3654 = vmatprep.subr.mxu0 0.0
        %3655 = vmatpush2.msra.mxu0 0.0
        %3656 = vmatprep.mubr.f32.mxu0 0.0
        %3657 = vmatmul.mubr.f32.gmra.mxu0 %v3590
        %v3658 = vpop.f32.mrf.mxu0
        %v3659 = vadd.f32 0.0, %v3658
        %v3660 = vpop.f32.mrf.mxu0
        %3661 = vdwg.mxu0
        %v3662 = vadd.f32 %v3585, %v3659
        %v3663 = vsel %vm2355, %v1109, 0.0
        %s3664 = scalar_lea.vmem [#allocation16], 120
        %v3665 = vld [vmem:[%s3664] sm:$0xff]
        %v3667 = vsel %vm1194, %v3665, 0
        %3669 = vmatprep.subr.mxu0 0.0
        %3670 = vmatpush1.msra.mxu0 0.0
        %3671 = vmatprep.subr.mxu0 0.0
        %3672 = vmatpush1.msra.mxu0 0.0
        %3673 = vmatprep.subr.mxu0 0.0
        %3674 = vmatpush1.msra.mxu0 0.0
        %3675 = vmatprep.subr.mxu0 0.0
        %3676 = vmatpush1.msra.mxu0 0.0
        %3677 = vmatprep.subr.mxu0 0.0
        %3678 = vmatpush1.msra.mxu0 0.0
        %3679 = vmatprep.subr.mxu0 0.0
        %3680 = vmatpush1.msra.mxu0 0.0
        %3681 = vmatprep.subr.mxu0 0.0
        %3682 = vmatpush1.msra.mxu0 0.0
        %3683 = vmatprep.subr.mxu0 0.0
        %3684 = vmatpush1.msra.mxu0 0.0
        %3685 = vmatprep.subr.mxu0 0.0
        %3686 = vmatpush1.msra.mxu0 0.0
        %3687 = vmatprep.subr.mxu0 0.0
        %3688 = vmatpush1.msra.mxu0 0.0
        %3689 = vmatprep.subr.mxu0 0.0
        %3690 = vmatpush1.msra.mxu0 0.0
        %3691 = vmatprep.subr.mxu0 0.0
        %3692 = vmatpush1.msra.mxu0 0.0
        %3693 = vmatprep.subr.mxu0 0.0
        %3694 = vmatpush1.msra.mxu0 0.0
        %3695 = vmatprep.subr.mxu0 0.0
        %3696 = vmatpush1.msra.mxu0 0.0
        %3697 = vmatprep.subr.mxu0 0.0
        %3698 = vmatpush1.msra.mxu0 0.0
        %3699 = vmatprep.subr.mxu0 0.0
        %3700 = vmatpush1.msra.mxu0 %v3663
        %3701 = vmatprep.subr.mxu0 0.0
        %3702 = vmatpush2.msra.mxu0 0.0
        %3703 = vmatprep.subr.mxu0 0.0
        %3704 = vmatpush2.msra.mxu0 0.0
        %3705 = vmatprep.subr.mxu0 0.0
        %3706 = vmatpush2.msra.mxu0 0.0
        %3707 = vmatprep.subr.mxu0 0.0
        %3708 = vmatpush2.msra.mxu0 0.0
        %3709 = vmatprep.subr.mxu0 0.0
        %3710 = vmatpush2.msra.mxu0 0.0
        %3711 = vmatprep.subr.mxu0 0.0
        %3712 = vmatpush2.msra.mxu0 0.0
        %3713 = vmatprep.subr.mxu0 0.0
        %3714 = vmatpush2.msra.mxu0 0.0
        %3715 = vmatprep.subr.mxu0 0.0
        %3716 = vmatpush2.msra.mxu0 0.0
        %3717 = vmatprep.subr.mxu0 0.0
        %3718 = vmatpush2.msra.mxu0 0.0
        %3719 = vmatprep.subr.mxu0 0.0
        %3720 = vmatpush2.msra.mxu0 0.0
        %3721 = vmatprep.subr.mxu0 0.0
        %3722 = vmatpush2.msra.mxu0 0.0
        %3723 = vmatprep.subr.mxu0 0.0
        %3724 = vmatpush2.msra.mxu0 0.0
        %3725 = vmatprep.subr.mxu0 0.0
        %3726 = vmatpush2.msra.mxu0 0.0
        %3727 = vmatprep.subr.mxu0 0.0
        %3728 = vmatpush2.msra.mxu0 0.0
        %3729 = vmatprep.subr.mxu0 0.0
        %3730 = vmatpush2.msra.mxu0 0.0
        %3731 = vmatprep.subr.mxu0 0.0
        %3732 = vmatpush2.msra.mxu0 0.0
        %3733 = vmatprep.mubr.f32.mxu0 0.0
        %3734 = vmatmul.mubr.f32.gmra.mxu0 %v3667
        %v3735 = vpop.f32.mrf.mxu0
        %v3736 = vadd.f32 0.0, %v3735
        %v3737 = vpop.f32.mrf.mxu0
        %3738 = vdwg.mxu0
        %v3739 = vadd.f32 %v3662, %v3736
        %v3740 = vsel %vm2433, %v1109, 0.0
        %s3741 = scalar_lea.vmem [#allocation16], 128
        %v3742 = vld [vmem:[%s3741] sm:$0xff]
        %v3744 = vsel %vm1194, %v3742, 0
        %3746 = vmatprep.subr.mxu0 0.0
        %3747 = vmatpush1.msra.mxu0 0.0
        %3748 = vmatprep.subr.mxu0 0.0
        %3749 = vmatpush1.msra.mxu0 0.0
        %3750 = vmatprep.subr.mxu0 0.0
        %3751 = vmatpush1.msra.mxu0 0.0
        %3752 = vmatprep.subr.mxu0 0.0
        %3753 = vmatpush1.msra.mxu0 0.0
        %3754 = vmatprep.subr.mxu0 0.0
        %3755 = vmatpush1.msra.mxu0 0.0
        %3756 = vmatprep.subr.mxu0 0.0
        %3757 = vmatpush1.msra.mxu0 0.0
        %3758 = vmatprep.subr.mxu0 0.0
        %3759 = vmatpush1.msra.mxu0 0.0
        %3760 = vmatprep.subr.mxu0 0.0
        %3761 = vmatpush1.msra.mxu0 0.0
        %3762 = vmatprep.subr.mxu0 0.0
        %3763 = vmatpush1.msra.mxu0 0.0
        %3764 = vmatprep.subr.mxu0 0.0
        %3765 = vmatpush1.msra.mxu0 0.0
        %3766 = vmatprep.subr.mxu0 0.0
        %3767 = vmatpush1.msra.mxu0 0.0
        %3768 = vmatprep.subr.mxu0 0.0
        %3769 = vmatpush1.msra.mxu0 0.0
        %3770 = vmatprep.subr.mxu0 0.0
        %3771 = vmatpush1.msra.mxu0 0.0
        %3772 = vmatprep.subr.mxu0 0.0
        %3773 = vmatpush1.msra.mxu0 0.0
        %3774 = vmatprep.subr.mxu0 0.0
        %3775 = vmatpush1.msra.mxu0 0.0
        %3776 = vmatprep.subr.mxu0 0.0
        %3777 = vmatpush1.msra.mxu0 %v3740
        %3778 = vmatprep.subr.mxu0 0.0
        %3779 = vmatpush2.msra.mxu0 0.0
        %3780 = vmatprep.subr.mxu0 0.0
        %3781 = vmatpush2.msra.mxu0 0.0
        %3782 = vmatprep.subr.mxu0 0.0
        %3783 = vmatpush2.msra.mxu0 0.0
        %3784 = vmatprep.subr.mxu0 0.0
        %3785 = vmatpush2.msra.mxu0 0.0
        %3786 = vmatprep.subr.mxu0 0.0
        %3787 = vmatpush2.msra.mxu0 0.0
        %3788 = vmatprep.subr.mxu0 0.0
        %3789 = vmatpush2.msra.mxu0 0.0
        %3790 = vmatprep.subr.mxu0 0.0
        %3791 = vmatpush2.msra.mxu0 0.0
        %3792 = vmatprep.subr.mxu0 0.0
        %3793 = vmatpush2.msra.mxu0 0.0
        %3794 = vmatprep.subr.mxu0 0.0
        %3795 = vmatpush2.msra.mxu0 0.0
        %3796 = vmatprep.subr.mxu0 0.0
        %3797 = vmatpush2.msra.mxu0 0.0
        %3798 = vmatprep.subr.mxu0 0.0
        %3799 = vmatpush2.msra.mxu0 0.0
        %3800 = vmatprep.subr.mxu0 0.0
        %3801 = vmatpush2.msra.mxu0 0.0
        %3802 = vmatprep.subr.mxu0 0.0
        %3803 = vmatpush2.msra.mxu0 0.0
        %3804 = vmatprep.subr.mxu0 0.0
        %3805 = vmatpush2.msra.mxu0 0.0
        %3806 = vmatprep.subr.mxu0 0.0
        %3807 = vmatpush2.msra.mxu0 0.0
        %3808 = vmatprep.subr.mxu0 0.0
        %3809 = vmatpush2.msra.mxu0 0.0
        %3810 = vmatprep.mubr.f32.mxu0 0.0
        %3811 = vmatmul.mubr.f32.gmra.mxu0 %v3744
        %v3812 = vpop.f32.mrf.mxu0
        %v3813 = vadd.f32 0.0, %v3812
        %v3814 = vpop.f32.mrf.mxu0
        %3815 = vdwg.mxu0
        %v3816 = vadd.f32 %v3739, %v3813
        %v3817 = vld [vmem:[#allocation20] sm:$0xff]
        %v3818 = vld [vmem:[#allocation20 + $0x8] sm:$0xff]
        %v3819 = vld [vmem:[#allocation20 + $0x10] sm:$0x1]
        %v3820 = vld [vmem:[#allocation25] sm:$0xff]
        %v3821 = vld [vmem:[#allocation25 + $0x8] sm:$0xff]
        %v3822 = vld [vmem:[#allocation25 + $0x10] sm:$0x1]
        %vm3823 = vcmask 138240
        %v3825 = vsel %vm3823, %v3816, 0
        %vm3827 = vcmask 1040384
        %v3829 = vsel %vm3827, %v3822, 0
        %3831 = vmatprep.subr.mxu0 0.0
        %3832 = vmatpush1.msra.mxu0 0.0
        %3833 = vmatprep.subr.mxu0 0.0
        %3834 = vmatpush1.msra.mxu0 0.0
        %3835 = vmatprep.subr.mxu0 0.0
        %3836 = vmatpush1.msra.mxu0 0.0
        %3837 = vmatprep.subr.mxu0 0.0
        %3838 = vmatpush1.msra.mxu0 0.0
        %3839 = vmatprep.subr.mxu0 0.0
        %3840 = vmatpush1.msra.mxu0 0.0
        %3841 = vmatprep.subr.mxu0 0.0
        %3842 = vmatpush1.msra.mxu0 0.0
        %3843 = vmatprep.subr.mxu0 0.0
        %3844 = vmatpush1.msra.mxu0 0.0
        %3845 = vmatprep.subr.mxu0 0.0
        %3846 = vmatpush1.msra.mxu0 0.0
        %3847 = vmatprep.subr.mxu0 0.0
        %3848 = vmatpush1.msra.mxu0 0.0
        %3849 = vmatprep.subr.mxu0 0.0
        %3850 = vmatpush1.msra.mxu0 0.0
        %3851 = vmatprep.subr.mxu0 0.0
        %3852 = vmatpush1.msra.mxu0 0.0
        %3853 = vmatprep.subr.mxu0 0.0
        %3854 = vmatpush1.msra.mxu0 0.0
        %3855 = vmatprep.subr.mxu0 0.0
        %3856 = vmatpush1.msra.mxu0 0.0
        %3857 = vmatprep.subr.mxu0 0.0
        %3858 = vmatpush1.msra.mxu0 %v3829
        %3859 = vmatprep.subr.mxu0 0.0
        %3860 = vmatpush1.msra.mxu0 %v3821
        %3861 = vmatprep.subr.mxu0 0.0
        %3862 = vmatpush1.msra.mxu0 %v3820
        %3863 = vmatprep.subr.mxu0 0.0
        %3864 = vmatpush2.msra.mxu0 0.0
        %3865 = vmatprep.subr.mxu0 0.0
        %3866 = vmatpush2.msra.mxu0 0.0
        %3867 = vmatprep.subr.mxu0 0.0
        %3868 = vmatpush2.msra.mxu0 0.0
        %3869 = vmatprep.subr.mxu0 0.0
        %3870 = vmatpush2.msra.mxu0 0.0
        %3871 = vmatprep.subr.mxu0 0.0
        %3872 = vmatpush2.msra.mxu0 0.0
        %3873 = vmatprep.subr.mxu0 0.0
        %3874 = vmatpush2.msra.mxu0 0.0
        %3875 = vmatprep.subr.mxu0 0.0
        %3876 = vmatpush2.msra.mxu0 0.0
        %3877 = vmatprep.subr.mxu0 0.0
        %3878 = vmatpush2.msra.mxu0 0.0
        %3879 = vmatprep.subr.mxu0 0.0
        %3880 = vmatpush2.msra.mxu0 0.0
        %3881 = vmatprep.subr.mxu0 0.0
        %3882 = vmatpush2.msra.mxu0 0.0
        %3883 = vmatprep.subr.mxu0 0.0
        %3884 = vmatpush2.msra.mxu0 0.0
        %3885 = vmatprep.subr.mxu0 0.0
        %3886 = vmatpush2.msra.mxu0 0.0
        %3887 = vmatprep.subr.mxu0 0.0
        %3888 = vmatpush2.msra.mxu0 0.0
        %3889 = vmatprep.subr.mxu0 0.0
        %3890 = vmatpush2.msra.mxu0 0.0
        %3891 = vmatprep.subr.mxu0 0.0
        %3892 = vmatpush2.msra.mxu0 0.0
        %3893 = vmatprep.subr.mxu0 0.0
        %3894 = vmatpush2.msra.mxu0 0.0
        %3895 = vmatprep.mubr.f32.mxu0 0.0
        %3896 = vmatmul.mubr.f32.gmra.mxu0 %v3825
        %v3897 = vpop.f32.mrf.mxu0
        %v3898 = vadd.f32 0.0, %v3897
        %v3899 = vpop.f32.mrf.mxu0
        %3900 = vdwg.mxu0
        %v3902 = vsel %vm3823, %v2510, 0
        %v3905 = vsel %vm3827, %v3819, 0
        %3907 = vmatprep.subr.mxu0 0.0
        %3908 = vmatpush1.msra.mxu0 0.0
        %3909 = vmatprep.subr.mxu0 0.0
        %3910 = vmatpush1.msra.mxu0 0.0
        %3911 = vmatprep.subr.mxu0 0.0
        %3912 = vmatpush1.msra.mxu0 0.0
        %3913 = vmatprep.subr.mxu0 0.0
        %3914 = vmatpush1.msra.mxu0 0.0
        %3915 = vmatprep.subr.mxu0 0.0
        %3916 = vmatpush1.msra.mxu0 0.0
        %3917 = vmatprep.subr.mxu0 0.0
        %3918 = vmatpush1.msra.mxu0 0.0
        %3919 = vmatprep.subr.mxu0 0.0
        %3920 = vmatpush1.msra.mxu0 0.0
        %3921 = vmatprep.subr.mxu0 0.0
        %3922 = vmatpush1.msra.mxu0 0.0
        %3923 = vmatprep.subr.mxu0 0.0
        %3924 = vmatpush1.msra.mxu0 0.0
        %3925 = vmatprep.subr.mxu0 0.0
        %3926 = vmatpush1.msra.mxu0 0.0
        %3927 = vmatprep.subr.mxu0 0.0
        %3928 = vmatpush1.msra.mxu0 0.0
        %3929 = vmatprep.subr.mxu0 0.0
        %3930 = vmatpush1.msra.mxu0 0.0
        %3931 = vmatprep.subr.mxu0 0.0
        %3932 = vmatpush1.msra.mxu0 0.0
        %3933 = vmatprep.subr.mxu0 0.0
        %3934 = vmatpush1.msra.mxu0 %v3905
        %3935 = vmatprep.subr.mxu0 0.0
        %3936 = vmatpush1.msra.mxu0 %v3818
        %3937 = vmatprep.subr.mxu0 0.0
        %3938 = vmatpush1.msra.mxu0 %v3817
        %3939 = vmatprep.subr.mxu0 0.0
        %3940 = vmatpush2.msra.mxu0 0.0
        %3941 = vmatprep.subr.mxu0 0.0
        %3942 = vmatpush2.msra.mxu0 0.0
        %3943 = vmatprep.subr.mxu0 0.0
        %3944 = vmatpush2.msra.mxu0 0.0
        %3945 = vmatprep.subr.mxu0 0.0
        %3946 = vmatpush2.msra.mxu0 0.0
        %3947 = vmatprep.subr.mxu0 0.0
        %3948 = vmatpush2.msra.mxu0 0.0
        %3949 = vmatprep.subr.mxu0 0.0
        %3950 = vmatpush2.msra.mxu0 0.0
        %3951 = vmatprep.subr.mxu0 0.0
        %3952 = vmatpush2.msra.mxu0 0.0
        %3953 = vmatprep.subr.mxu0 0.0
        %3954 = vmatpush2.msra.mxu0 0.0
        %3955 = vmatprep.subr.mxu0 0.0
        %3956 = vmatpush2.msra.mxu0 0.0
        %3957 = vmatprep.subr.mxu0 0.0
        %3958 = vmatpush2.msra.mxu0 0.0
        %3959 = vmatprep.subr.mxu0 0.0
        %3960 = vmatpush2.msra.mxu0 0.0
        %3961 = vmatprep.subr.mxu0 0.0
        %3962 = vmatpush2.msra.mxu0 0.0
        %3963 = vmatprep.subr.mxu0 0.0
        %3964 = vmatpush2.msra.mxu0 0.0
        %3965 = vmatprep.subr.mxu0 0.0
        %3966 = vmatpush2.msra.mxu0 0.0
        %3967 = vmatprep.subr.mxu0 0.0
        %3968 = vmatpush2.msra.mxu0 0.0
        %3969 = vmatprep.subr.mxu0 0.0
        %3970 = vmatpush2.msra.mxu0 0.0
        %3971 = vmatprep.mubr.f32.mxu0 0.0
        %3972 = vmatmul.mubr.f32.gmra.mxu0 %v3902
        %v3973 = vpop.f32.mrf.mxu0
        %v3974 = vadd.f32 %v3898, %v3973
        %v3975 = vpop.f32.mrf.mxu0
        %3976 = vdwg.mxu0
        %v3977 = vld [vmem:[#allocation19] sm:$0xff]
        %v3978 = vld [vmem:[#allocation19 + $0x8] sm:$0xff]
        %v3979 = vld [vmem:[#allocation19 + $0x10] sm:$0xff]
        %v3980 = vld [vmem:[#allocation23] sm:$0xff]
        %v3981 = vld [vmem:[#allocation23 + $0x8] sm:$0xff]
        %v3982 = vld [vmem:[#allocation23 + $0x10] sm:$0xff]
        %v3984 = vsel %vm1038, %v954, 0
        %3986 = vmatprep.subr.mxu0 0.0
        %3987 = vmatpush1.msra.mxu0 0.0
        %3988 = vmatprep.subr.mxu0 0.0
        %3989 = vmatpush1.msra.mxu0 0.0
        %3990 = vmatprep.subr.mxu0 0.0
        %3991 = vmatpush1.msra.mxu0 0.0
        %3992 = vmatprep.subr.mxu0 0.0
        %3993 = vmatpush1.msra.mxu0 0.0
        %3994 = vmatprep.subr.mxu0 0.0
        %3995 = vmatpush1.msra.mxu0 0.0
        %3996 = vmatprep.subr.mxu0 0.0
        %3997 = vmatpush1.msra.mxu0 0.0
        %3998 = vmatprep.subr.mxu0 0.0
        %3999 = vmatpush1.msra.mxu0 0.0
        %4000 = vmatprep.subr.mxu0 0.0
        %4001 = vmatpush1.msra.mxu0 0.0
        %4002 = vmatprep.subr.mxu0 0.0
        %4003 = vmatpush1.msra.mxu0 0.0
        %4004 = vmatprep.subr.mxu0 0.0
        %4005 = vmatpush1.msra.mxu0 0.0
        %4006 = vmatprep.subr.mxu0 0.0
        %4007 = vmatpush1.msra.mxu0 0.0
        %4008 = vmatprep.subr.mxu0 0.0
        %4009 = vmatpush1.msra.mxu0 0.0
        %4010 = vmatprep.subr.mxu0 0.0
        %4011 = vmatpush1.msra.mxu0 0.0
        %4012 = vmatprep.subr.mxu0 0.0
        %4013 = vmatpush1.msra.mxu0 %v3982
        %4014 = vmatprep.subr.mxu0 0.0
        %4015 = vmatpush1.msra.mxu0 %v3981
        %4016 = vmatprep.subr.mxu0 0.0
        %4017 = vmatpush1.msra.mxu0 %v3980
        %4018 = vmatprep.subr.mxu0 0.0
        %4019 = vmatpush2.msra.mxu0 0.0
        %4020 = vmatprep.subr.mxu0 0.0
        %4021 = vmatpush2.msra.mxu0 0.0
        %4022 = vmatprep.subr.mxu0 0.0
        %4023 = vmatpush2.msra.mxu0 0.0
        %4024 = vmatprep.subr.mxu0 0.0
        %4025 = vmatpush2.msra.mxu0 0.0
        %4026 = vmatprep.subr.mxu0 0.0
        %4027 = vmatpush2.msra.mxu0 0.0
        %4028 = vmatprep.subr.mxu0 0.0
        %4029 = vmatpush2.msra.mxu0 0.0
        %4030 = vmatprep.subr.mxu0 0.0
        %4031 = vmatpush2.msra.mxu0 0.0
        %4032 = vmatprep.subr.mxu0 0.0
        %4033 = vmatpush2.msra.mxu0 0.0
        %4034 = vmatprep.subr.mxu0 0.0
        %4035 = vmatpush2.msra.mxu0 0.0
        %4036 = vmatprep.subr.mxu0 0.0
        %4037 = vmatpush2.msra.mxu0 0.0
        %4038 = vmatprep.subr.mxu0 0.0
        %4039 = vmatpush2.msra.mxu0 0.0
        %4040 = vmatprep.subr.mxu0 0.0
        %4041 = vmatpush2.msra.mxu0 0.0
        %4042 = vmatprep.subr.mxu0 0.0
        %4043 = vmatpush2.msra.mxu0 0.0
        %4044 = vmatprep.subr.mxu0 0.0
        %4045 = vmatpush2.msra.mxu0 0.0
        %4046 = vmatprep.subr.mxu0 0.0
        %4047 = vmatpush2.msra.mxu0 0.0
        %4048 = vmatprep.subr.mxu0 0.0
        %4049 = vmatpush2.msra.mxu0 0.0
        %4050 = vmatprep.mubr.f32.mxu0 0.0
        %4051 = vmatmul.mubr.f32.gmra.mxu0 %v3984
        %v4052 = vpop.f32.mrf.mxu0
        %v4053 = vadd.f32 0.0, %v4052
        %v4054 = vpop.f32.mrf.mxu0
        %4055 = vdwg.mxu0
        %v4057 = vsel %vm1038, %v3974, 0
        %4059 = vmatprep.subr.mxu0 0.0
        %4060 = vmatpush1.msra.mxu0 0.0
        %4061 = vmatprep.subr.mxu0 0.0
        %4062 = vmatpush1.msra.mxu0 0.0
        %4063 = vmatprep.subr.mxu0 0.0
        %4064 = vmatpush1.msra.mxu0 0.0
        %4065 = vmatprep.subr.mxu0 0.0
        %4066 = vmatpush1.msra.mxu0 0.0
        %4067 = vmatprep.subr.mxu0 0.0
        %4068 = vmatpush1.msra.mxu0 0.0
        %4069 = vmatprep.subr.mxu0 0.0
        %4070 = vmatpush1.msra.mxu0 0.0
        %4071 = vmatprep.subr.mxu0 0.0
        %4072 = vmatpush1.msra.mxu0 0.0
        %4073 = vmatprep.subr.mxu0 0.0
        %4074 = vmatpush1.msra.mxu0 0.0
        %4075 = vmatprep.subr.mxu0 0.0
        %4076 = vmatpush1.msra.mxu0 0.0
        %4077 = vmatprep.subr.mxu0 0.0
        %4078 = vmatpush1.msra.mxu0 0.0
        %4079 = vmatprep.subr.mxu0 0.0
        %4080 = vmatpush1.msra.mxu0 0.0
        %4081 = vmatprep.subr.mxu0 0.0
        %4082 = vmatpush1.msra.mxu0 0.0
        %4083 = vmatprep.subr.mxu0 0.0
        %4084 = vmatpush1.msra.mxu0 0.0
        %4085 = vmatprep.subr.mxu0 0.0
        %4086 = vmatpush1.msra.mxu0 %v3979
        %4087 = vmatprep.subr.mxu0 0.0
        %4088 = vmatpush1.msra.mxu0 %v3978
        %4089 = vmatprep.subr.mxu0 0.0
        %4090 = vmatpush1.msra.mxu0 %v3977
        %4091 = vmatprep.subr.mxu0 0.0
        %4092 = vmatpush2.msra.mxu0 0.0
        %4093 = vmatprep.subr.mxu0 0.0
        %4094 = vmatpush2.msra.mxu0 0.0
        %4095 = vmatprep.subr.mxu0 0.0
        %4096 = vmatpush2.msra.mxu0 0.0
        %4097 = vmatprep.subr.mxu0 0.0
        %4098 = vmatpush2.msra.mxu0 0.0
        %4099 = vmatprep.subr.mxu0 0.0
        %4100 = vmatpush2.msra.mxu0 0.0
        %4101 = vmatprep.subr.mxu0 0.0
        %4102 = vmatpush2.msra.mxu0 0.0
        %4103 = vmatprep.subr.mxu0 0.0
        %4104 = vmatpush2.msra.mxu0 0.0
        %4105 = vmatprep.subr.mxu0 0.0
        %4106 = vmatpush2.msra.mxu0 0.0
        %4107 = vmatprep.subr.mxu0 0.0
        %4108 = vmatpush2.msra.mxu0 0.0
        %4109 = vmatprep.subr.mxu0 0.0
        %4110 = vmatpush2.msra.mxu0 0.0
        %4111 = vmatprep.subr.mxu0 0.0
        %4112 = vmatpush2.msra.mxu0 0.0
        %4113 = vmatprep.subr.mxu0 0.0
        %4114 = vmatpush2.msra.mxu0 0.0
        %4115 = vmatprep.subr.mxu0 0.0
        %4116 = vmatpush2.msra.mxu0 0.0
        %4117 = vmatprep.subr.mxu0 0.0
        %4118 = vmatpush2.msra.mxu0 0.0
        %4119 = vmatprep.subr.mxu0 0.0
        %4120 = vmatpush2.msra.mxu0 0.0
        %4121 = vmatprep.subr.mxu0 0.0
        %4122 = vmatpush2.msra.mxu0 0.0
        %4123 = vmatprep.mubr.f32.mxu0 0.0
        %4124 = vmatmul.mubr.f32.gmra.mxu0 %v4057
        %v4125 = vpop.f32.mrf.mxu0
        %v4126 = vadd.f32 %v4053, %v4125
        %v4127 = vpop.f32.mrf.mxu0
        %4128 = vdwg.mxu0
        %v4129 = vld [vmem:[#allocation17] sm:$0xff]
        %v4130 = vld [vmem:[#allocation17 + $0x8] sm:$0xff]
        %v4131 = vld [vmem:[#allocation17 + $0x10] sm:$0xff]
        %v4132 = vld [vmem:[#allocation17 + $0x18] sm:$0xff]
        %v4133 = vld [vmem:[#allocation17 + $0x20] sm:$0x3f]
        %v4134 = vld [vmem:[#allocation22] sm:$0xff]
        %v4135 = vld [vmem:[#allocation22 + $0x8] sm:$0xff]
        %v4136 = vld [vmem:[#allocation22 + $0x10] sm:$0xff]
        %v4137 = vld [vmem:[#allocation22 + $0x18] sm:$0xff]
        %v4138 = vld [vmem:[#allocation22 + $0x20] sm:$0x1f]
        %v4140 = vsel %vm879, %v793, 0
        %v4143 = vsel %vm883, %v4138, 0
        %4145 = vmatprep.subr.mxu0 0.0
        %4146 = vmatpush1.msra.mxu0 0.0
        %4147 = vmatprep.subr.mxu0 0.0
        %4148 = vmatpush1.msra.mxu0 0.0
        %4149 = vmatprep.subr.mxu0 0.0
        %4150 = vmatpush1.msra.mxu0 0.0
        %4151 = vmatprep.subr.mxu0 0.0
        %4152 = vmatpush1.msra.mxu0 0.0
        %4153 = vmatprep.subr.mxu0 0.0
        %4154 = vmatpush1.msra.mxu0 0.0
        %4155 = vmatprep.subr.mxu0 0.0
        %4156 = vmatpush1.msra.mxu0 0.0
        %4157 = vmatprep.subr.mxu0 0.0
        %4158 = vmatpush1.msra.mxu0 0.0
        %4159 = vmatprep.subr.mxu0 0.0
        %4160 = vmatpush1.msra.mxu0 0.0
        %4161 = vmatprep.subr.mxu0 0.0
        %4162 = vmatpush1.msra.mxu0 0.0
        %4163 = vmatprep.subr.mxu0 0.0
        %4164 = vmatpush1.msra.mxu0 0.0
        %4165 = vmatprep.subr.mxu0 0.0
        %4166 = vmatpush1.msra.mxu0 0.0
        %4167 = vmatprep.subr.mxu0 0.0
        %4168 = vmatpush1.msra.mxu0 %v4143
        %4169 = vmatprep.subr.mxu0 0.0
        %4170 = vmatpush1.msra.mxu0 %v4137
        %4171 = vmatprep.subr.mxu0 0.0
        %4172 = vmatpush1.msra.mxu0 %v4136
        %4173 = vmatprep.subr.mxu0 0.0
        %4174 = vmatpush1.msra.mxu0 %v4135
        %4175 = vmatprep.subr.mxu0 0.0
        %4176 = vmatpush1.msra.mxu0 %v4134
        %4177 = vmatprep.subr.mxu0 0.0
        %4178 = vmatpush2.msra.mxu0 0.0
        %4179 = vmatprep.subr.mxu0 0.0
        %4180 = vmatpush2.msra.mxu0 0.0
        %4181 = vmatprep.subr.mxu0 0.0
        %4182 = vmatpush2.msra.mxu0 0.0
        %4183 = vmatprep.subr.mxu0 0.0
        %4184 = vmatpush2.msra.mxu0 0.0
        %4185 = vmatprep.subr.mxu0 0.0
        %4186 = vmatpush2.msra.mxu0 0.0
        %4187 = vmatprep.subr.mxu0 0.0
        %4188 = vmatpush2.msra.mxu0 0.0
        %4189 = vmatprep.subr.mxu0 0.0
        %4190 = vmatpush2.msra.mxu0 0.0
        %4191 = vmatprep.subr.mxu0 0.0
        %4192 = vmatpush2.msra.mxu0 0.0
        %4193 = vmatprep.subr.mxu0 0.0
        %4194 = vmatpush2.msra.mxu0 0.0
        %4195 = vmatprep.subr.mxu0 0.0
        %4196 = vmatpush2.msra.mxu0 0.0
        %4197 = vmatprep.subr.mxu0 0.0
        %4198 = vmatpush2.msra.mxu0 0.0
        %4199 = vmatprep.subr.mxu0 0.0
        %4200 = vmatpush2.msra.mxu0 0.0
        %4201 = vmatprep.subr.mxu0 0.0
        %4202 = vmatpush2.msra.mxu0 0.0
        %4203 = vmatprep.subr.mxu0 0.0
        %4204 = vmatpush2.msra.mxu0 0.0
        %4205 = vmatprep.subr.mxu0 0.0
        %4206 = vmatpush2.msra.mxu0 0.0
        %4207 = vmatprep.subr.mxu0 0.0
        %4208 = vmatpush2.msra.mxu0 0.0
        %4209 = vmatprep.mubr.f32.mxu0 0.0
        %4210 = vmatmul.mubr.f32.gmra.mxu0 %v4140
        %v4211 = vpop.f32.mrf.mxu0
        %v4212 = vadd.f32 0.0, %v4211
        %v4213 = vpop.f32.mrf.mxu0
        %4214 = vdwg.mxu0
        %vm4215 = vcmask 310272
        %v4217 = vsel %vm4215, %v4126, 0
        %vm4219 = vcmask 1045504
        %v4221 = vsel %vm4219, %v4133, 0
        %4223 = vmatprep.subr.mxu0 0.0
        %4224 = vmatpush1.msra.mxu0 0.0
        %4225 = vmatprep.subr.mxu0 0.0
        %4226 = vmatpush1.msra.mxu0 0.0
        %4227 = vmatprep.subr.mxu0 0.0
        %4228 = vmatpush1.msra.mxu0 0.0
        %4229 = vmatprep.subr.mxu0 0.0
        %4230 = vmatpush1.msra.mxu0 0.0
        %4231 = vmatprep.subr.mxu0 0.0
        %4232 = vmatpush1.msra.mxu0 0.0
        %4233 = vmatprep.subr.mxu0 0.0
        %4234 = vmatpush1.msra.mxu0 0.0
        %4235 = vmatprep.subr.mxu0 0.0
        %4236 = vmatpush1.msra.mxu0 0.0
        %4237 = vmatprep.subr.mxu0 0.0
        %4238 = vmatpush1.msra.mxu0 0.0
        %4239 = vmatprep.subr.mxu0 0.0
        %4240 = vmatpush1.msra.mxu0 0.0
        %4241 = vmatprep.subr.mxu0 0.0
        %4242 = vmatpush1.msra.mxu0 0.0
        %4243 = vmatprep.subr.mxu0 0.0
        %4244 = vmatpush1.msra.mxu0 0.0
        %4245 = vmatprep.subr.mxu0 0.0
        %4246 = vmatpush1.msra.mxu0 %v4221
        %4247 = vmatprep.subr.mxu0 0.0
        %4248 = vmatpush1.msra.mxu0 %v4132
        %4249 = vmatprep.subr.mxu0 0.0
        %4250 = vmatpush1.msra.mxu0 %v4131
        %4251 = vmatprep.subr.mxu0 0.0
        %4252 = vmatpush1.msra.mxu0 %v4130
        %4253 = vmatprep.subr.mxu0 0.0
        %4254 = vmatpush1.msra.mxu0 %v4129
        %4255 = vmatprep.subr.mxu0 0.0
        %4256 = vmatpush2.msra.mxu0 0.0
        %4257 = vmatprep.subr.mxu0 0.0
        %4258 = vmatpush2.msra.mxu0 0.0
        %4259 = vmatprep.subr.mxu0 0.0
        %4260 = vmatpush2.msra.mxu0 0.0
        %4261 = vmatprep.subr.mxu0 0.0
        %4262 = vmatpush2.msra.mxu0 0.0
        %4263 = vmatprep.subr.mxu0 0.0
        %4264 = vmatpush2.msra.mxu0 0.0
        %4265 = vmatprep.subr.mxu0 0.0
        %4266 = vmatpush2.msra.mxu0 0.0
        %4267 = vmatprep.subr.mxu0 0.0
        %4268 = vmatpush2.msra.mxu0 0.0
        %4269 = vmatprep.subr.mxu0 0.0
        %4270 = vmatpush2.msra.mxu0 0.0
        %4271 = vmatprep.subr.mxu0 0.0
        %4272 = vmatpush2.msra.mxu0 0.0
        %4273 = vmatprep.subr.mxu0 0.0
        %4274 = vmatpush2.msra.mxu0 0.0
        %4275 = vmatprep.subr.mxu0 0.0
        %4276 = vmatpush2.msra.mxu0 0.0
        %4277 = vmatprep.subr.mxu0 0.0
        %4278 = vmatpush2.msra.mxu0 0.0
        %4279 = vmatprep.subr.mxu0 0.0
        %4280 = vmatpush2.msra.mxu0 0.0
        %4281 = vmatprep.subr.mxu0 0.0
        %4282 = vmatpush2.msra.mxu0 0.0
        %4283 = vmatprep.subr.mxu0 0.0
        %4284 = vmatpush2.msra.mxu0 0.0
        %4285 = vmatprep.subr.mxu0 0.0
        %4286 = vmatpush2.msra.mxu0 0.0
        %4287 = vmatprep.mubr.f32.mxu0 0.0
        %4288 = vmatmul.mubr.f32.gmra.mxu0 %v4217
        %v4289 = vpop.f32.mrf.mxu0
        %v4290 = vadd.f32 %v4212, %v4289
        %v4291 = vpop.f32.mrf.mxu0
        %4292 = vdwg.mxu0
        %4293 = vst.msk [vmem:[%s712] sm:$0xff] %vm722, %v4290
        %s4294 = sand.u32 %s367, 1
        %s4295 = scalar_lea.sflag [#allocation4], %s4294
        %s4296 = sand.u32 %s367, 1
        %s4297 = smul.addr %s4296, 8
        %s4298 = scalar_lea.vmem [#allocation26], %s4297
        // Predicated region
        $region141: #{_lambda_.1} parent=79 // pred_check
          %p4299 = pneg %p377
        $region142: #{_lambda_.1} parent=79 // pred_check_branch
          %4301 = sbr.rel (%p4299) target = $region144
        $region143: #{_lambda_.1} parent=79 // pred_region
          %s4303 = ssub.s32 128, 128
          %4304 = vsyncadd %s4295, %s4303
          %s4305 = smul.addr %s39, 128
          %s4306 = scalar_lea.hbm %s15, %s4305
          %s4308 = sshll.u32 %s4298, 4
          %s4309 = int_to_ptr.vmem [resolvable:$true] %s4308
          %4311 = dma.vmem_to_hbm [thread:$0]  %s4309, 128, %s4306, %s4295
        $region144: #{_lambda_.1} parent=79 // pred_fallthru
          _
      $region80: #{_lambda_.1} parent=5 // pred_fallthru
        _
      %p4312 = scmp.le.s32.totalorder 2, %s34
      // Predicated region
      $region145: #{_lambda_.1} parent=5 // pred_check
        %p4313 = pneg %p4312
      $region146: #{_lambda_.1} parent=5 // pred_check_branch
        %4315 = sbr.rel (%p4313) target = $region148
      $region147: #{_lambda_.1} parent=5 // pred_region
        %s4316 = ssub.s32 %s34, 2
        // Predicated region
        $region149: #{_lambda_.1} parent=147 // pred_check
          %p4317 = pneg %p383
        $region150: #{_lambda_.1} parent=147 // pred_check_branch
          %4319 = sbr.rel (%p4317) target = $region152
        $region151: #{_lambda_.1} parent=147 // pred_region
          %s4320 = sand.u32 %s368, 1
          %s4321 = scalar_lea.sflag [#allocation4], %s4320
          %s4322 = sand.u32 %s368, 1
          %s4323 = smul.addr %s4322, 8
          %s4324 = scalar_lea.vmem [#allocation26], %s4323
          %4325 = dma.done %s4321, 128
        $region152: #{_lambda_.1} parent=147 // pred_fallthru
          _
      $region148: #{_lambda_.1} parent=5 // pred_fallthru
        _
    $region6: #{_lambda_.1} parent=1 // loop_footer
      %s38 = sadd.s32 1, %s34
    $region7: #{_lambda_.1} parent=1 // loop_footer_branch
      %33 = sbr.rel target = $region3
    $region8: #{_lambda_.1} parent=1 // loop_exit
      _
    %4326 = vsyncpa [#allocation3], 1
    %s4327 = scalar_lea.sflag [#allocation3], 1
    %4328 = vsyncpa %s4327, 1
    %4329 = vsyncpa [#allocation6], 1
    %4330 = vsyncpa [#allocation9], 1
    %4331 = vsyncpa [#allocation12], 1
    %4332 = vsyncpa [#allocation15], 1
    %4333 = vsyncpa [#allocation18], 1
    %4334 = vsyncpa [#allocation21], 1
    %4335 = vsyncpa [#allocation24], 1
    %4336 = vsyncpa [#allocation4], 1
    %s4337 = scalar_lea.sflag [#allocation4], 1
    %4338 = vsyncpa %s4337, 1

</llo_original>
